<compile_context>
chip_gen: v7x
topology: tpu7x:2x2x1
jax: 0.10.0
libtpu: 0.0.40
codegen_flags: <defaults>
</compile_context>

<pallas_src>
import functools

import jax
import jax.numpy as jnp
from jax.experimental import pallas as pl
from jax.experimental.pallas import tpu as pltpu

LEAKY_SLOPE = 0.1
BN_EPS = 1e-5


def _round_up(a, b):
    return -(-a // b) * b


# ----------------------------- Pallas kernels -------------------------------

def conv_bias_lrelu_kernel(x_ref, w_ref, b_ref, o_ref, *, slope):
    # Single grid step: x (Mp, K), w (K, C), b (1, C), o (Mp, C).
    h = jnp.dot(x_ref[...], w_ref[...], preferred_element_type=jnp.float32)
    h = h + b_ref[...]
    o_ref[...] = jnp.maximum(h, slope * h)


def matmul_bn_lrelu_kernel(x_ref, w_ref, g_ref, b_ref, o_ref, *,
                           inv_m, eps, slope):
    # Fused conv-as-matmul + training-mode BatchNorm + LeakyReLU.
    # One resident M tile (out BlockSpec returns block (0, 0) for every k), so
    # o_ref doubles as the f32 K-accumulator; the epilogue at k == nk-1 derives
    # batch statistics from the completed tile and rewrites it in place.
    k = pl.program_id(0)
    nk = pl.num_programs(0)

    @pl.when(k == 0)
    def _():
        o_ref[...] = jnp.zeros_like(o_ref)

    # Weight streamed as bf16 (halves HBM bytes of the dominant conv3 stream);
    # upcast on-chip and accumulate in f32.  The kernel is HBM-bound, so the
    # extra MXU passes of an f32 matmul are free.
    o_ref[...] += jnp.dot(x_ref[...], w_ref[...].astype(jnp.float32),
                          preferred_element_type=jnp.float32)

    @pl.when(k == nk - 1)
    def _():
        h = o_ref[...]
        # Padded rows of x are zero => their h rows are zero and contribute
        # nothing to the sums; stats divide by the true M via inv_m.
        mean = jnp.sum(h, axis=0, keepdims=True) * inv_m
        var = jnp.maximum(
            jnp.sum(h * h, axis=0, keepdims=True) * inv_m - mean * mean, 0.0)
        inv_std = jax.lax.rsqrt(var + eps)
        scale = g_ref[...] * inv_std
        shift = b_ref[...] - mean * scale
        y = h * scale + shift
        o_ref[...] = jnp.maximum(y, slope * y)


# ----------------------------- pallas_call wrappers --------------------------

def conv_bias_lrelu(patches, w2d, bias):
    """LeakyReLU(patches @ w2d + bias) in a single grid step."""
    M, K = patches.shape
    C = w2d.shape[1]
    Mp = _round_up(M, 8)
    xp = jnp.pad(patches, ((0, Mp - M), (0, 0)))

    out = pl.pallas_call(
        functools.partial(conv_bias_lrelu_kernel, slope=LEAKY_SLOPE),
        out_shape=jax.ShapeDtypeStruct((Mp, C), jnp.float32),
        grid_spec=pltpu.PrefetchScalarGridSpec(
            num_scalar_prefetch=0,
            grid=(1,),
            in_specs=[
                pl.BlockSpec((Mp, K), lambda i: (0, 0)),
                pl.BlockSpec((K, C), lambda i: (0, 0)),
                pl.BlockSpec((1, C), lambda i: (0, 0)),
            ],
            out_specs=pl.BlockSpec((Mp, C), lambda i: (0, 0)),
        ),
        compiler_params=pltpu.CompilerParams(
            dimension_semantics=("arbitrary",)),
        cost_estimate=pl.CostEstimate(
            flops=2 * Mp * K * C, transcendentals=0,
            bytes_accessed=4 * (Mp * K + K * C + Mp * C)),
    )(xp, w2d, bias)
    return out[:M]


def conv_bn_lrelu(patches, w2d_bf16, gamma, beta, *, tk):
    """LeakyReLU(BatchNorm_train(patches @ w2d)), fused in one pallas_call.

    Specialized for the case where the whole M (output pixels) fits in one
    resident VMEM tile — true for conv2/conv3 at GAN-inference batch sizes.
    For training-sized batches a streamed two-pass variant (per-tile partial
    stats) would be used instead.
    """
    M, K = patches.shape
    C = w2d_bf16.shape[1]
    Mp = _round_up(M, 8)
    assert Mp <= 2048, "fused BN path assumes a single resident M tile"
    Kp = _round_up(K, tk)
    # Zero padding: padded K columns/rows add 0 to the matmul; padded rows give
    # h == 0 and contribute nothing to the batch statistics (divided by true M).
    xp = jnp.pad(patches, ((0, Mp - M), (0, Kp - K)))
    wp = jnp.pad(w2d_bf16, ((0, Kp - K), (0, 0)))
    nk = Kp // tk

    out = pl.pallas_call(
        functools.partial(matmul_bn_lrelu_kernel, inv_m=1.0 / float(M),
                          eps=BN_EPS, slope=LEAKY_SLOPE),
        out_shape=jax.ShapeDtypeStruct((Mp, C), jnp.float32),
        grid_spec=pltpu.PrefetchScalarGridSpec(
            num_scalar_prefetch=0,
            grid=(nk,),
            in_specs=[
                pl.BlockSpec((Mp, tk), lambda k: (0, k)),
                pl.BlockSpec((tk, C), lambda k: (k, 0)),
                pl.BlockSpec((1, C), lambda k: (0, 0)),
                pl.BlockSpec((1, C), lambda k: (0, 0)),
            ],
            out_specs=pl.BlockSpec((Mp, C), lambda k: (0, 0)),
        ),
        compiler_params=pltpu.CompilerParams(
            dimension_semantics=("arbitrary",),
            vmem_limit_bytes=32 * 1024 * 1024),
        cost_estimate=pl.CostEstimate(
            flops=2 * Mp * Kp * C, transcendentals=C,
            bytes_accessed=4 * Mp * Kp + 2 * Kp * C + 4 * Mp * C),
    )(xp, wp, gamma, beta)
    return out[:M]


# ------------------------------- im2col plumbing -----------------------------

def im2col_nhwc(x_nhwc, ksize, stride, padding):
    """NHWC -> (N*Ho*Wo, C*k*k).  Column index flattens (cin, ki, kj) in C
    order, matching a PyTorch OIHW weight reshaped as w.reshape(Cout, -1).T."""
    N, H, W, C = x_nhwc.shape
    xp = jnp.pad(x_nhwc, ((0, 0), (padding, padding), (padding, padding), (0, 0)))
    Hp, Wp = H + 2 * padding, W + 2 * padding
    Ho = (Hp - ksize) // stride + 1
    Wo = (Wp - ksize) // stride + 1
    slices = []
    for i in range(ksize):
        for j in range(ksize):
            slices.append(
                xp[:, i:i + (Ho - 1) * stride + 1:stride,
                      j:j + (Wo - 1) * stride + 1:stride, :])   # (N, Ho, Wo, C)
    pat = jnp.stack(slices, axis=0)                 # (k*k, N, Ho, Wo, C)
    pat = jnp.transpose(pat, (1, 2, 3, 4, 0))       # (N, Ho, Wo, C, k*k)
    return pat.reshape(N * Ho * Wo, C * ksize * ksize), Ho, Wo


# ------------------------------- forward pass --------------------------------

def discriminator_forward(x_nchw, params):
    N = x_nchw.shape[0]
    x = jnp.transpose(x_nchw, (0, 2, 3, 1))         # NHWC activation flow

    # conv1: Conv2d(C_img, 64, 4, 2, 1) + bias -> LeakyReLU(0.1)
    p1, H1, W1 = im2col_nhwc(x, 4, 2, 1)
    y1 = conv_bias_lrelu(p1, params["w1"], params["b1"])
    x1 = y1.reshape(N, H1, W1, 64)

    # conv2: Conv2d(64, 128, 4, 2, 1, bias=False) -> BN -> LeakyReLU(0.1)
    # K = 1024 fits in one K step; whole M resident => fully fused kernel.
    p2, H2, W2 = im2col_nhwc(x1, 4, 2, 1)
    y2 = conv_bn_lrelu(p2, params["w2"], params["g2"], params["be2"], tk=1024)
    x2 = y2.reshape(N, H2, W2, 128)

    # conv3: Conv2d(128, 1024, 7, bias=False) -> BN -> LeakyReLU(0.1)
    # K = 128*49 = 6272 tiled with tk = 896 (bf16 weight block ~1.8 MiB).
    p3, H3, W3 = im2col_nhwc(x2, 7, 1, 0)
    y3 = conv_bn_lrelu(p3, params["w3"], params["g3"], params["be3"], tk=896)
    out = y3.reshape(N, H3, W3, 1024)
    return jnp.transpose(out, (0, 3, 1, 2))          # NCHW, (N, 1024, 1, 1)


# ------------------------------- parameters ----------------------------------

def init_params(key, channels_img):
    k1, k2, k3, k4 = jax.random.split(key, 4)

    def conv_w(k, cin, cout, ksz, dtype):
        fan_in = cin * ksz * ksz
        bound = float(fan_in) ** -0.5
        # stored pre-flattened as (cin*k*k, cout) == PyTorch w.reshape(cout,-1).T
        w = jax.random.uniform(k, (fan_in, cout), jnp.float32, -bound, bound)
        return w.astype(dtype)

    b1_bound = float(channels_img * 16) ** -0.5
    return {
        "w1": conv_w(k1, channels_img, 64, 4, jnp.float32),   # bias layer: f32
        "b1": jax.random.uniform(k2, (1, 64), jnp.float32, -b1_bound, b1_bound),
        "w2": conv_w(k3, 64, 128, 4, jnp.bfloat16),            # streamed bf16
        "g2": jnp.ones((1, 128), jnp.float32),                 # BN affine defaults
        "be2": jnp.zeros((1, 128), jnp.float32),
        "w3": conv_w(k4, 128, 1024, 7, jnp.bfloat16),          # streamed bf16
        "g3": jnp.ones((1, 1024), jnp.float32),
        "be3": jnp.zeros((1, 1024), jnp.float32),
    }


# ------------------------------- reference -----------------------------------

def reference_forward(x, params):
    """Pure-JAX/XLA reference of the same Discriminator forward, using the
    identical (bf16-stored) conv2/conv3 weights upcast to f32."""
    def conv(y, w2d, cin, cout, ksz, stride, pad, bias=None):
        w = jnp.transpose(w2d.astype(jnp.float32), (1, 0)).reshape(
            cout, cin, ksz, ksz)                                  # OIHW
        out = jax.lax.conv_general_dilated(
            y, w, (stride, stride), [(pad, pad), (pad, pad)],
            dimension_numbers=("NCHW", "OIHW", "NCHW"),
            precision=jax.lax.Precision.HIGHEST)
        if bias is not None:
            out = out + bias.reshape(1, cout, 1, 1)
        return out

    def bn(y, gamma, beta):
        mean = jnp.mean(y, axis=(0, 2, 3), keepdims=True)
        var = jnp.mean((y - mean) ** 2, axis=(0, 2, 3), keepdims=True)
        yn = (y - mean) * jax.lax.rsqrt(var + BN_EPS)
        return yn * gamma.reshape(1, -1, 1, 1) + beta.reshape(1, -1, 1, 1)

    def lrelu(y):
        return jnp.maximum(y, LEAKY_SLOPE * y)

    cin = x.shape[1]
    y = lrelu(conv(x, params["w1"], cin, 64, 4, 2, 1, params["b1"]))
    y = lrelu(bn(conv(y, params["w2"], 64, 128, 4, 2, 1),
                 params["g2"], params["be2"]))
    y = lrelu(bn(conv(y, params["w3"], 128, 1024, 7, 1, 0),
                 params["g3"], params["be3"]))
    return y


if __name__ == "__main__":
    key = jax.random.PRNGKey(0)
    k_x, k_p = jax.random.split(key)

    channels_img = 1            # MNIST-style InfoGAN discriminator input
    N, H, W = 2, 28, 28         # 28x28 so conv3's 7x7 kernel reduces to 1x1
    x = jax.random.normal(k_x, (N, channels_img, H, W), jnp.float32)
    params = init_params(k_p, channels_img)

    out = jax.jit(discriminator_forward)(x, params)
    out = jax.block_until_ready(out)

    assert out.shape == (N, 1024, 1, 1), out.shape
    assert bool(jnp.all(jnp.isfinite(out)))

    # Numerical check against the pure-JAX reference of the same module
    # (same quantized weights; kernel error is f32 accumulation order only).
    ref = jax.block_until_ready(jax.jit(reference_forward)(x, params))
    err = float(jnp.max(jnp.abs(out - ref)))
    assert err < 1e-2, f"max abs error vs reference: {err}"

    print("KERNEL_OK")
</pallas_src>

<mosaic_0001>
module attributes {stable_mosaic.version = 11 : i64} {
  func.func @conv_bias_lrelu_kernel(%arg0: i32, %arg1: memref<392x16xf32, #tpu.memory_space<vmem>>, %arg2: memref<16x64xf32, #tpu.memory_space<vmem>>, %arg3: memref<1x64xf32, #tpu.memory_space<vmem>>, %arg4: memref<392x64xf32, #tpu.memory_space<vmem>>) attributes {dimension_semantics = [#tpu.dimension_semantics<arbitrary>], iteration_bounds = array<i64: 1>, scalar_prefetch = 0 : i64, scratch_operands = 0 : i64, tpu.core_type = #tpu.core_type<tc>, window_params = [{pipeline_mode = #tpu.pipeline_mode<synchronous>, transform_indices = @transform_0, window_bounds = array<i64: 392, 16>}, {pipeline_mode = #tpu.pipeline_mode<synchronous>, transform_indices = @transform_1, window_bounds = array<i64: 16, 64>}, {pipeline_mode = #tpu.pipeline_mode<synchronous>, transform_indices = @transform_2, window_bounds = array<i64: 1, 64>}, {pipeline_mode = #tpu.pipeline_mode<synchronous>, transform_indices = @transform_3, window_bounds = array<i64: 392, 64>}]} {
    %c0 = arith.constant 0 : index
    %c0_0 = arith.constant 0 : index
    %0 = vector.load %arg1[%c0, %c0_0] : memref<392x16xf32, #tpu.memory_space<vmem>>, vector<392x16xf32>
    %c0_1 = arith.constant 0 : index
    %c0_2 = arith.constant 0 : index
    %1 = vector.load %arg2[%c0_1, %c0_2] : memref<16x64xf32, #tpu.memory_space<vmem>>, vector<16x64xf32>
    %cst = arith.constant dense<0.000000e+00> : vector<392x64xf32>
    %2 = tpu.matmul %0, %1, %cst {dimension_numbers = #tpu.dot_dimension_numbers<[1], [0], [0], [1], [0, 0, 1, 1], [], []>} : vector<392x16xf32>, vector<16x64xf32>, vector<392x64xf32> -> vector<392x64xf32>
    %c0_3 = arith.constant 0 : index
    %c0_4 = arith.constant 0 : index
    %3 = vector.load %arg3[%c0_3, %c0_4] : memref<1x64xf32, #tpu.memory_space<vmem>>, vector<1x64xf32>
    %4 = vector.broadcast %3 : vector<1x64xf32> to vector<392x64xf32>
    %5 = arith.addf %2, %4 : vector<392x64xf32>
    %cst_5 = arith.constant 1.000000e-01 : f32
    %6 = vector.broadcast %cst_5 : f32 to vector<392x64xf32>
    %7 = arith.mulf %6, %5 : vector<392x64xf32>
    %8 = arith.maximumf %5, %7 : vector<392x64xf32>
    %c0_6 = arith.constant 0 : index
    %c0_7 = arith.constant 0 : index
    %9 = vector.load %arg4[%c0_6, %c0_7] : memref<392x64xf32, #tpu.memory_space<vmem>>, vector<392x64xf32>
    tpu.vector_store %arg4[%c0_6, %c0_7], %8 {strides = array<i32>} : memref<392x64xf32, #tpu.memory_space<vmem>>, vector<392x64xf32>,
    return
  }
  func.func @transform_0(%arg0: i32) -> (i32, i32) {
    %c0_i32 = arith.constant 0 : i32
    %c0_i32_0 = arith.constant 0 : i32
    %c0_i32_1 = arith.constant 0 : i32
    return %c0_i32, %c0_i32_0 : i32, i32
  }
  func.func @transform_1(%arg0: i32) -> (i32, i32) {
    %c0_i32 = arith.constant 0 : i32
    %c0_i32_0 = arith.constant 0 : i32
    %c0_i32_1 = arith.constant 0 : i32
    return %c0_i32, %c0_i32_0 : i32, i32
  }
  func.func @transform_2(%arg0: i32) -> (i32, i32) {
    %c0_i32 = arith.constant 0 : i32
    %c0_i32_0 = arith.constant 0 : i32
    %c0_i32_1 = arith.constant 0 : i32
    return %c0_i32, %c0_i32_0 : i32, i32
  }
  func.func @transform_3(%arg0: i32) -> (i32, i32) {
    %c0_i32 = arith.constant 0 : i32
    %c0_i32_0 = arith.constant 0 : i32
    %c0_i32_1 = arith.constant 0 : i32
    return %c0_i32, %c0_i32_0 : i32, i32
  }
}

module attributes {stable_mosaic.version = 11 : i64} {
  func.func @matmul_bn_lrelu_kernel(%arg0: i32, %arg1: memref<104x1024xf32, #tpu.memory_space<vmem>>, %arg2: memref<1024x128xbf16, #tpu.memory_space<vmem>>, %arg3: memref<1x128xf32, #tpu.memory_space<vmem>>, %arg4: memref<1x128xf32, #tpu.memory_space<vmem>>, %arg5: memref<104x128xf32, #tpu.memory_space<vmem>>) attributes {dimension_semantics = [#tpu.dimension_semantics<arbitrary>], iteration_bounds = array<i64: 1>, scalar_prefetch = 0 : i64, scratch_operands = 0 : i64, tpu.core_type = #tpu.core_type<tc>, window_params = [{transform_indices = @transform_0, window_bounds = array<i64: 104, 1024>}, {transform_indices = @transform_1, window_bounds = array<i64: 1024, 128>}, {pipeline_mode = #tpu.pipeline_mode<synchronous>, transform_indices = @transform_2, window_bounds = array<i64: 1, 128>}, {pipeline_mode = #tpu.pipeline_mode<synchronous>, transform_indices = @transform_3, window_bounds = array<i64: 1, 128>}, {pipeline_mode = #tpu.pipeline_mode<synchronous>, transform_indices = @transform_4, window_bounds = array<i64: 104, 128>}]} {
    %c0_i32 = arith.constant 0 : i32
    %0 = arith.cmpi eq, %arg0, %c0_i32 : i32
    %1 = arith.extui %0 : i1 to i32
    %c0_i32_0 = arith.constant 0 : i32
    %2 = arith.cmpi ne, %1, %c0_i32_0 : i32
    scf.if %2 {
      %cst_10 = arith.constant 0.000000e+00 : f32
      %13 = vector.broadcast %cst_10 : f32 to vector<104x128xf32>
      %c0_11 = arith.constant 0 : index
      %c0_12 = arith.constant 0 : index
      %14 = vector.load %arg5[%c0_11, %c0_12] : memref<104x128xf32, #tpu.memory_space<vmem>>, vector<104x128xf32>
      tpu.vector_store %arg5[%c0_11, %c0_12], %13 {strides = array<i32>} : memref<104x128xf32, #tpu.memory_space<vmem>>, vector<104x128xf32>,
    } else {
    }
    %c0 = arith.constant 0 : index
    %c0_1 = arith.constant 0 : index
    %3 = vector.load %arg5[%c0, %c0_1] : memref<104x128xf32, #tpu.memory_space<vmem>>, vector<104x128xf32>
    %c0_2 = arith.constant 0 : index
    %c0_3 = arith.constant 0 : index
    %4 = vector.load %arg1[%c0_2, %c0_3] : memref<104x1024xf32, #tpu.memory_space<vmem>>, vector<104x1024xf32>
    %c0_4 = arith.constant 0 : index
    %c0_5 = arith.constant 0 : index
    %5 = vector.load %arg2[%c0_4, %c0_5] : memref<1024x128xbf16, #tpu.memory_space<vmem>>, vector<1024x128xbf16>
    %6 = arith.extf %5 : vector<1024x128xbf16> to vector<1024x128xf32>
    %cst = arith.constant dense<0.000000e+00> : vector<104x128xf32>
    %7 = tpu.matmul %4, %6, %cst {dimension_numbers = #tpu.dot_dimension_numbers<[1], [0], [0], [1], [0, 0, 1, 1], [], []>} : vector<104x1024xf32>, vector<1024x128xf32>, vector<104x128xf32> -> vector<104x128xf32>
    %8 = arith.addf %3, %7 : vector<104x128xf32>
    %c0_6 = arith.constant 0 : index
    %c0_7 = arith.constant 0 : index
    %9 = vector.load %arg5[%c0_6, %c0_7] : memref<104x128xf32, #tpu.memory_space<vmem>>, vector<104x128xf32>
    tpu.vector_store %arg5[%c0_6, %c0_7], %8 {strides = array<i32>} : memref<104x128xf32, #tpu.memory_space<vmem>>, vector<104x128xf32>,
    %c0_i32_8 = arith.constant 0 : i32
    %10 = arith.cmpi eq, %arg0, %c0_i32_8 : i32
    %11 = arith.extui %10 : i1 to i32
    %c0_i32_9 = arith.constant 0 : i32
    %12 = arith.cmpi ne, %11, %c0_i32_9 : i32
    scf.if %12 {
      %c0_10 = arith.constant 0 : index
      %c0_11 = arith.constant 0 : index
      %13 = vector.load %arg5[%c0_10, %c0_11] : memref<104x128xf32, #tpu.memory_space<vmem>>, vector<104x128xf32>
      %cst_12 = arith.constant dense<0.000000e+00> : vector<128xf32>
      %14 = vector.multi_reduction <add>, %13, %cst_12 [0] : vector<104x128xf32> to vector<128xf32>
      %15 = vector.shape_cast %14 : vector<128xf32> to vector<1x128xf32>
      %cst_13 = arith.constant 0.0102040814 : f32
      %16 = vector.broadcast %cst_13 : f32 to vector<1x128xf32>
      %17 = arith.mulf %15, %16 : vector<1x128xf32>
      %18 = arith.mulf %13, %13 : vector<104x128xf32>
      %cst_14 = arith.constant dense<0.000000e+00> : vector<128xf32>
      %19 = vector.multi_reduction <add>, %18, %cst_14 [0] : vector<104x128xf32> to vector<128xf32>
      %20 = vector.shape_cast %19 : vector<128xf32> to vector<1x128xf32>
      %cst_15 = arith.constant 0.0102040814 : f32
      %21 = vector.broadcast %cst_15 : f32 to vector<1x128xf32>
      %22 = arith.mulf %20, %21 : vector<1x128xf32>
      %23 = arith.mulf %17, %17 : vector<1x128xf32>
      %24 = arith.subf %22, %23 : vector<1x128xf32>
      %cst_16 = arith.constant 0.000000e+00 : f32
      %25 = vector.broadcast %cst_16 : f32 to vector<1x128xf32>
      %26 = arith.maximumf %24, %25 : vector<1x128xf32>
      %cst_17 = arith.constant 9.99999974E-6 : f32
      %27 = vector.broadcast %cst_17 : f32 to vector<1x128xf32>
      %28 = arith.addf %26, %27 : vector<1x128xf32>
      %29 = math.rsqrt %28 : vector<1x128xf32>
      %c0_18 = arith.constant 0 : index
      %c0_19 = arith.constant 0 : index
      %30 = vector.load %arg3[%c0_18, %c0_19] : memref<1x128xf32, #tpu.memory_space<vmem>>, vector<1x128xf32>
      %31 = arith.mulf %30, %29 : vector<1x128xf32>
      %c0_20 = arith.constant 0 : index
      %c0_21 = arith.constant 0 : index
      %32 = vector.load %arg4[%c0_20, %c0_21] : memref<1x128xf32, #tpu.memory_space<vmem>>, vector<1x128xf32>
      %33 = arith.mulf %17, %31 : vector<1x128xf32>
      %34 = arith.subf %32, %33 : vector<1x128xf32>
      %35 = vector.broadcast %31 : vector<1x128xf32> to vector<104x128xf32>
      %36 = arith.mulf %13, %35 : vector<104x128xf32>
      %37 = vector.broadcast %34 : vector<1x128xf32> to vector<104x128xf32>
      %38 = arith.addf %36, %37 : vector<104x128xf32>
      %cst_22 = arith.constant 1.000000e-01 : f32
      %39 = vector.broadcast %cst_22 : f32 to vector<104x128xf32>
      %40 = arith.mulf %39, %38 : vector<104x128xf32>
      %41 = arith.maximumf %38, %40 : vector<104x128xf32>
      %c0_23 = arith.constant 0 : index
      %c0_24 = arith.constant 0 : index
      %42 = vector.load %arg5[%c0_23, %c0_24] : memref<104x128xf32, #tpu.memory_space<vmem>>, vector<104x128xf32>
      tpu.vector_store %arg5[%c0_23, %c0_24], %41 {strides = array<i32>} : memref<104x128xf32, #tpu.memory_space<vmem>>, vector<104x128xf32>,
    } else {
    }
    return
  }
  func.func @transform_0(%arg0: i32) -> (i32, i32) {
    %c0_i32 = arith.constant 0 : i32
    %c0_i32_0 = arith.constant 0 : i32
    return %c0_i32, %arg0 : i32, i32
  }
  func.func @transform_1(%arg0: i32) -> (i32, i32) {
    %c0_i32 = arith.constant 0 : i32
    %c0_i32_0 = arith.constant 0 : i32
    return %arg0, %c0_i32 : i32, i32
  }
  func.func @transform_2(%arg0: i32) -> (i32, i32) {
    %c0_i32 = arith.constant 0 : i32
    %c0_i32_0 = arith.constant 0 : i32
    %c0_i32_1 = arith.constant 0 : i32
    return %c0_i32, %c0_i32_0 : i32, i32
  }
  func.func @transform_3(%arg0: i32) -> (i32, i32) {
    %c0_i32 = arith.constant 0 : i32
    %c0_i32_0 = arith.constant 0 : i32
    %c0_i32_1 = arith.constant 0 : i32
    return %c0_i32, %c0_i32_0 : i32, i32
  }
  func.func @transform_4(%arg0: i32) -> (i32, i32) {
    %c0_i32 = arith.constant 0 : i32
    %c0_i32_0 = arith.constant 0 : i32
    %c0_i32_1 = arith.constant 0 : i32
    return %c0_i32, %c0_i32_0 : i32, i32
  }
}

module attributes {stable_mosaic.version = 11 : i64} {
  func.func @matmul_bn_lrelu_kernel(%arg0: i32, %arg1: memref<8x896xf32, #tpu.memory_space<vmem>>, %arg2: memref<896x1024xbf16, #tpu.memory_space<vmem>>, %arg3: memref<1x1024xf32, #tpu.memory_space<vmem>>, %arg4: memref<1x1024xf32, #tpu.memory_space<vmem>>, %arg5: memref<8x1024xf32, #tpu.memory_space<vmem>>) attributes {dimension_semantics = [#tpu.dimension_semantics<arbitrary>], iteration_bounds = array<i64: 7>, scalar_prefetch = 0 : i64, scratch_operands = 0 : i64, tpu.core_type = #tpu.core_type<tc>, window_params = [{transform_indices = @transform_0, window_bounds = array<i64: 8, 896>}, {transform_indices = @transform_1, window_bounds = array<i64: 896, 1024>}, {pipeline_mode = #tpu.pipeline_mode<synchronous>, transform_indices = @transform_2, window_bounds = array<i64: 1, 1024>}, {pipeline_mode = #tpu.pipeline_mode<synchronous>, transform_indices = @transform_3, window_bounds = array<i64: 1, 1024>}, {pipeline_mode = #tpu.pipeline_mode<synchronous>, transform_indices = @transform_4, window_bounds = array<i64: 8, 1024>}]} {
    %c0_i32 = arith.constant 0 : i32
    %0 = arith.cmpi eq, %arg0, %c0_i32 : i32
    %1 = arith.extui %0 : i1 to i32
    %c0_i32_0 = arith.constant 0 : i32
    %2 = arith.cmpi ne, %1, %c0_i32_0 : i32
    scf.if %2 {
      %cst_9 = arith.constant 0.000000e+00 : f32
      %13 = vector.broadcast %cst_9 : f32 to vector<8x1024xf32>
      %c0_10 = arith.constant 0 : index
      %c0_11 = arith.constant 0 : index
      %14 = vector.load %arg5[%c0_10, %c0_11] : memref<8x1024xf32, #tpu.memory_space<vmem>>, vector<8x1024xf32>
      tpu.vector_store %arg5[%c0_10, %c0_11], %13 {strides = array<i32>} : memref<8x1024xf32, #tpu.memory_space<vmem>>, vector<8x1024xf32>,
    } else {
    }
    %c0 = arith.constant 0 : index
    %c0_1 = arith.constant 0 : index
    %3 = vector.load %arg5[%c0, %c0_1] : memref<8x1024xf32, #tpu.memory_space<vmem>>, vector<8x1024xf32>
    %c0_2 = arith.constant 0 : index
    %c0_3 = arith.constant 0 : index
    %4 = vector.load %arg1[%c0_2, %c0_3] : memref<8x896xf32, #tpu.memory_space<vmem>>, vector<8x896xf32>
    %c0_4 = arith.constant 0 : index
    %c0_5 = arith.constant 0 : index
    %5 = vector.load %arg2[%c0_4, %c0_5] : memref<896x1024xbf16, #tpu.memory_space<vmem>>, vector<896x1024xbf16>
    %6 = arith.extf %5 : vector<896x1024xbf16> to vector<896x1024xf32>
    %cst = arith.constant dense<0.000000e+00> : vector<8x1024xf32>
    %7 = tpu.matmul %4, %6, %cst {dimension_numbers = #tpu.dot_dimension_numbers<[1], [0], [0], [1], [0, 0, 1, 1], [], []>} : vector<8x896xf32>, vector<896x1024xf32>, vector<8x1024xf32> -> vector<8x1024xf32>
    %8 = arith.addf %3, %7 : vector<8x1024xf32>
    %c0_6 = arith.constant 0 : index
    %c0_7 = arith.constant 0 : index
    %9 = vector.load %arg5[%c0_6, %c0_7] : memref<8x1024xf32, #tpu.memory_space<vmem>>, vector<8x1024xf32>
    tpu.vector_store %arg5[%c0_6, %c0_7], %8 {strides = array<i32>} : memref<8x1024xf32, #tpu.memory_space<vmem>>, vector<8x1024xf32>,
    %c6_i32 = arith.constant 6 : i32
    %10 = arith.cmpi eq, %arg0, %c6_i32 : i32
    %11 = arith.extui %10 : i1 to i32
    %c0_i32_8 = arith.constant 0 : i32
    %12 = arith.cmpi ne, %11, %c0_i32_8 : i32
    scf.if %12 {
      %c0_9 = arith.constant 0 : index
      %c0_10 = arith.constant 0 : index
      %13 = vector.load %arg5[%c0_9, %c0_10] : memref<8x1024xf32, #tpu.memory_space<vmem>>, vector<8x1024xf32>
      %cst_11 = arith.constant dense<0.000000e+00> : vector<1024xf32>
      %14 = vector.multi_reduction <add>, %13, %cst_11 [0] : vector<8x1024xf32> to vector<1024xf32>
      %15 = vector.shape_cast %14 : vector<1024xf32> to vector<1x1024xf32>
      %cst_12 = arith.constant 5.000000e-01 : f32
      %16 = vector.broadcast %cst_12 : f32 to vector<1x1024xf32>
      %17 = arith.mulf %15, %16 : vector<1x1024xf32>
      %18 = arith.mulf %13, %13 : vector<8x1024xf32>
      %cst_13 = arith.constant dense<0.000000e+00> : vector<1024xf32>
      %19 = vector.multi_reduction <add>, %18, %cst_13 [0] : vector<8x1024xf32> to vector<1024xf32>
      %20 = vector.shape_cast %19 : vector<1024xf32> to vector<1x1024xf32>
      %cst_14 = arith.constant 5.000000e-01 : f32
      %21 = vector.broadcast %cst_14 : f32 to vector<1x1024xf32>
      %22 = arith.mulf %20, %21 : vector<1x1024xf32>
      %23 = arith.mulf %17, %17 : vector<1x1024xf32>
      %24 = arith.subf %22, %23 : vector<1x1024xf32>
      %cst_15 = arith.constant 0.000000e+00 : f32
      %25 = vector.broadcast %cst_15 : f32 to vector<1x1024xf32>
      %26 = arith.maximumf %24, %25 : vector<1x1024xf32>
      %cst_16 = arith.constant 9.99999974E-6 : f32
      %27 = vector.broadcast %cst_16 : f32 to vector<1x1024xf32>
      %28 = arith.addf %26, %27 : vector<1x1024xf32>
      %29 = math.rsqrt %28 : vector<1x1024xf32>
      %c0_17 = arith.constant 0 : index
      %c0_18 = arith.constant 0 : index
      %30 = vector.load %arg3[%c0_17, %c0_18] : memref<1x1024xf32, #tpu.memory_space<vmem>>, vector<1x1024xf32>
      %31 = arith.mulf %30, %29 : vector<1x1024xf32>
      %c0_19 = arith.constant 0 : index
      %c0_20 = arith.constant 0 : index
      %32 = vector.load %arg4[%c0_19, %c0_20] : memref<1x1024xf32, #tpu.memory_space<vmem>>, vector<1x1024xf32>
      %33 = arith.mulf %17, %31 : vector<1x1024xf32>
      %34 = arith.subf %32, %33 : vector<1x1024xf32>
      %35 = vector.broadcast %31 : vector<1x1024xf32> to vector<8x1024xf32>
      %36 = arith.mulf %13, %35 : vector<8x1024xf32>
      %37 = vector.broadcast %34 : vector<1x1024xf32> to vector<8x1024xf32>
      %38 = arith.addf %36, %37 : vector<8x1024xf32>
      %cst_21 = arith.constant 1.000000e-01 : f32
      %39 = vector.broadcast %cst_21 : f32 to vector<8x1024xf32>
      %40 = arith.mulf %39, %38 : vector<8x1024xf32>
      %41 = arith.maximumf %38, %40 : vector<8x1024xf32>
      %c0_22 = arith.constant 0 : index
      %c0_23 = arith.constant 0 : index
      %42 = vector.load %arg5[%c0_22, %c0_23] : memref<8x1024xf32, #tpu.memory_space<vmem>>, vector<8x1024xf32>
      tpu.vector_store %arg5[%c0_22, %c0_23], %41 {strides = array<i32>} : memref<8x1024xf32, #tpu.memory_space<vmem>>, vector<8x1024xf32>,
    } else {
    }
    return
  }
  func.func @transform_0(%arg0: i32) -> (i32, i32) {
    %c0_i32 = arith.constant 0 : i32
    %c0_i32_0 = arith.constant 0 : i32
    return %c0_i32, %arg0 : i32, i32
  }
  func.func @transform_1(%arg0: i32) -> (i32, i32) {
    %c0_i32 = arith.constant 0 : i32
    %c0_i32_0 = arith.constant 0 : i32
    return %arg0, %c0_i32 : i32, i32
  }
  func.func @transform_2(%arg0: i32) -> (i32, i32) {
    %c0_i32 = arith.constant 0 : i32
    %c0_i32_0 = arith.constant 0 : i32
    %c0_i32_1 = arith.constant 0 : i32
    return %c0_i32, %c0_i32_0 : i32, i32
  }
  func.func @transform_3(%arg0: i32) -> (i32, i32) {
    %c0_i32 = arith.constant 0 : i32
    %c0_i32_0 = arith.constant 0 : i32
    %c0_i32_1 = arith.constant 0 : i32
    return %c0_i32, %c0_i32_0 : i32, i32
  }
  func.func @transform_4(%arg0: i32) -> (i32, i32) {
    %c0_i32 = arith.constant 0 : i32
    %c0_i32_0 = arith.constant 0 : i32
    %c0_i32_1 = arith.constant 0 : i32
    return %c0_i32, %c0_i32_0 : i32, i32
  }
}

</mosaic_0001>

<llo_original>
// kernel: discriminator_forward.3
$region0: #{discriminator_forward.3}
  #allocation0 [shape = 'u32[]', space=smem, size = 0x4, offset = 0x4, fixed_abs, tag = 'smem constant byte address 0x4 - core index']
  #allocation1 [shape = 'u32[144,128]{1,0:T(1,128)}', space=vmem, size = 0x12000, scoped, tag = 'internal scratch']
  %s0 = inlined_call_operand.vmem [shape: f32[392,16], index: 0, kind: input, shape index: {}]
  %s1 = inlined_call_operand.hbm [shape: f32[16,64], index: 1, kind: input, shape index: {}]
  %s2 = inlined_call_operand.hbm [shape: f32[1,64], index: 2, kind: input, shape index: {}]
  %s3 = inlined_call_operand.vmem [shape: f32[392,64], index: 3, kind: output, shape index: {}]
  %s4 = sld [smem:[#allocation0]]
  $region30: #{discriminator_forward.3} parent=0
    _
  %s6 = ssub.s32 1, %s4
  %s7 = scalar_select 0, %s6, %s4
  $region1: #{discriminator_forward.3} parent=0
    #allocation2 [shape = 'u8[8192]{0}', space=vmem, size = 0x2000, scoped, tag = 'input window, operand 1, single buffered']
    #allocation3 [shape = 's32[1]{0}', space=sflag, size = 0x4, scoped, tag = 'scoped memory for discriminator_forward.3']
    #allocation4 [shape = 'u8[512]{0}', space=vmem, size = 0x400, scoped, tag = 'input window, operand 2, single buffered']
    #allocation5 [shape = 's32[1]{0}', space=sflag, size = 0x4, scoped, tag = 'scoped memory for discriminator_forward.3']
    %8 = vsyncpa [#allocation3], 0
    %9 = vsyncpa [#allocation5], 0
    // Predicated region
    $region2: #{discriminator_forward.3} parent=1 // pred_check
      _
    $region3: #{discriminator_forward.3} parent=1 // pred_check_branch
      %11 = sbr.rel (0) target = $region5
    $region4: #{discriminator_forward.3} parent=1 // pred_region
      _
    $region5: #{discriminator_forward.3} parent=1 // pred_fallthru
      _
    // Predicated region
    $region6: #{discriminator_forward.3} parent=1 // pred_check
      _
    $region7: #{discriminator_forward.3} parent=1 // pred_check_branch
      %13 = sbr.rel (0) target = $region9
    $region8: #{discriminator_forward.3} parent=1 // pred_region
      %s15 = ssub.s32 256, 256
      %16 = vsyncadd [#allocation3], %s15
      %s17 = sshll.u32 [#allocation2], 4
      %s18 = int_to_ptr.vmem [resolvable:$true] %s17
      %23 = dma.hbm_to_vmem [thread:$0]  %s1, 256, %s18, [#allocation3], 128, 128, 8
    $region9: #{discriminator_forward.3} parent=1 // pred_fallthru
      _
    // Predicated region
    $region10: #{discriminator_forward.3} parent=1 // pred_check
      _
    $region11: #{discriminator_forward.3} parent=1 // pred_check_branch
      %25 = sbr.rel (0) target = $region13
    $region12: #{discriminator_forward.3} parent=1 // pred_region
      %s27 = ssub.s32 16, 16
      %28 = vsyncadd [#allocation5], %s27
      %s30 = sshll.u32 [#allocation4], 4
      %s31 = int_to_ptr.vmem [resolvable:$true] %s30
      %33 = dma.hbm_to_vmem [thread:$0]  %s2, 16, %s31, [#allocation5]
    $region13: #{discriminator_forward.3} parent=1 // pred_fallthru
      _
    // Predicated region
    $region14: #{discriminator_forward.3} parent=1 // pred_check
      _
    $region15: #{discriminator_forward.3} parent=1 // pred_check_branch
      %35 = sbr.rel (0) target = $region17
    $region16: #{discriminator_forward.3} parent=1 // pred_region
      %36 = dma.done [#allocation3], 256
    $region17: #{discriminator_forward.3} parent=1 // pred_fallthru
      _
    // Predicated region
    $region18: #{discriminator_forward.3} parent=1 // pred_check
      _
    $region19: #{discriminator_forward.3} parent=1 // pred_check_branch
      %38 = sbr.rel (0) target = $region21
    $region20: #{discriminator_forward.3} parent=1 // pred_region
      %39 = dma.done [#allocation5], 16
    $region21: #{discriminator_forward.3} parent=1 // pred_fallthru
      _
    %v40 = vld [vmem:[%s0] sm:$0xff]
    %v41 = vld [vmem:[%s0 + $0x8] sm:$0xff]
    %v42 = vld [vmem:[%s0 + $0x10] sm:$0xff]
    %v43 = vld [vmem:[%s0 + $0x18] sm:$0xff]
    %v44 = vld [vmem:[%s0 + $0x20] sm:$0xff]
    %v45 = vld [vmem:[%s0 + $0x28] sm:$0xff]
    %v46 = vld [vmem:[%s0 + $0x30] sm:$0xff]
    %v47 = vld [vmem:[%s0 + $0x38] sm:$0xff]
    %v48 = vld [vmem:[%s0 + $0x40] sm:$0xff]
    %v49 = vld [vmem:[%s0 + $0x48] sm:$0xff]
    %v50 = vld [vmem:[%s0 + $0x50] sm:$0xff]
    %v51 = vld [vmem:[%s0 + $0x58] sm:$0xff]
    %v52 = vld [vmem:[%s0 + $0x60] sm:$0xff]
    %v53 = vld [vmem:[%s0 + $0x68] sm:$0xff]
    %v54 = vld [vmem:[%s0 + $0x70] sm:$0xff]
    %v55 = vld [vmem:[%s0 + $0x78] sm:$0xff]
    %v56 = vld [vmem:[%s0 + $0x80] sm:$0xff]
    %v57 = vld [vmem:[%s0 + $0x88] sm:$0xff]
    %v58 = vld [vmem:[%s0 + $0x90] sm:$0xff]
    %v59 = vld [vmem:[%s0 + $0x98] sm:$0xff]
    %v60 = vld [vmem:[%s0 + $0xa0] sm:$0xff]
    %v61 = vld [vmem:[%s0 + $0xa8] sm:$0xff]
    %v62 = vld [vmem:[%s0 + $0xb0] sm:$0xff]
    %v63 = vld [vmem:[%s0 + $0xb8] sm:$0xff]
    %v64 = vld [vmem:[%s0 + $0xc0] sm:$0xff]
    %v65 = vld [vmem:[%s0 + $0xc8] sm:$0xff]
    %v66 = vld [vmem:[%s0 + $0xd0] sm:$0xff]
    %v67 = vld [vmem:[%s0 + $0xd8] sm:$0xff]
    %v68 = vld [vmem:[%s0 + $0xe0] sm:$0xff]
    %v69 = vld [vmem:[%s0 + $0xe8] sm:$0xff]
    %v70 = vld [vmem:[%s0 + $0xf0] sm:$0xff]
    %v71 = vld [vmem:[%s0 + $0xf8] sm:$0xff]
    %v72 = vld [vmem:[%s0 + $0x100] sm:$0xff]
    %v73 = vld [vmem:[%s0 + $0x108] sm:$0xff]
    %v74 = vld [vmem:[%s0 + $0x110] sm:$0xff]
    %v75 = vld [vmem:[%s0 + $0x118] sm:$0xff]
    %v76 = vld [vmem:[%s0 + $0x120] sm:$0xff]
    %v77 = vld [vmem:[%s0 + $0x128] sm:$0xff]
    %v78 = vld [vmem:[%s0 + $0x130] sm:$0xff]
    %v79 = vld [vmem:[%s0 + $0x138] sm:$0xff]
    %v80 = vld [vmem:[%s0 + $0x140] sm:$0xff]
    %v81 = vld [vmem:[%s0 + $0x148] sm:$0xff]
    %v82 = vld [vmem:[%s0 + $0x150] sm:$0xff]
    %v83 = vld [vmem:[%s0 + $0x158] sm:$0xff]
    %v84 = vld [vmem:[%s0 + $0x160] sm:$0xff]
    %v85 = vld [vmem:[%s0 + $0x168] sm:$0xff]
    %v86 = vld [vmem:[%s0 + $0x170] sm:$0xff]
    %v87 = vld [vmem:[%s0 + $0x178] sm:$0xff]
    %v88 = vld [vmem:[%s0 + $0x180] sm:$0xff]
    %v89 = vld [vmem:[#allocation2] sm:$0xff]
    %v90 = vld [vmem:[#allocation2 + $0x8] sm:$0xff]
    %v91 = vld [vmem:[#allocation4] sm:$0x1]
    %v93 = vlaneseq
    %v94 = vshrl.u32 %v93, 7
    %v95 = vsub.s32 0, %v94
    %v96 = vrot.slane %v91, %v95
    %vm98 = vcmask 130048
    %v100 = vsel %vm98, %v40, 0
    %v103 = vsel %vm98, %v41, 0
    %v106 = vsel %vm98, %v42, 0
    %v109 = vsel %vm98, %v43, 0
    %v112 = vsel %vm98, %v44, 0
    %v115 = vsel %vm98, %v45, 0
    %v118 = vsel %vm98, %v46, 0
    %v121 = vsel %vm98, %v47, 0
    %v124 = vsel %vm98, %v48, 0
    %v127 = vsel %vm98, %v49, 0
    %v130 = vsel %vm98, %v50, 0
    %v133 = vsel %vm98, %v51, 0
    %v136 = vsel %vm98, %v52, 0
    %v139 = vsel %vm98, %v53, 0
    %v142 = vsel %vm98, %v54, 0
    %v145 = vsel %vm98, %v55, 0
    %v148 = vsel %vm98, %v56, 0
    %v151 = vsel %vm98, %v57, 0
    %v154 = vsel %vm98, %v58, 0
    %v157 = vsel %vm98, %v59, 0
    %v160 = vsel %vm98, %v60, 0
    %v163 = vsel %vm98, %v61, 0
    %v166 = vsel %vm98, %v62, 0
    %v169 = vsel %vm98, %v63, 0
    %v172 = vsel %vm98, %v64, 0
    %v175 = vsel %vm98, %v65, 0
    %v178 = vsel %vm98, %v66, 0
    %v181 = vsel %vm98, %v67, 0
    %v184 = vsel %vm98, %v68, 0
    %v187 = vsel %vm98, %v69, 0
    %v190 = vsel %vm98, %v70, 0
    %v193 = vsel %vm98, %v71, 0
    %v196 = vsel %vm98, %v72, 0
    %v199 = vsel %vm98, %v73, 0
    %v202 = vsel %vm98, %v74, 0
    %v205 = vsel %vm98, %v75, 0
    %v208 = vsel %vm98, %v76, 0
    %v211 = vsel %vm98, %v77, 0
    %v214 = vsel %vm98, %v78, 0
    %v217 = vsel %vm98, %v79, 0
    %v220 = vsel %vm98, %v80, 0
    %v223 = vsel %vm98, %v81, 0
    %v226 = vsel %vm98, %v82, 0
    %v229 = vsel %vm98, %v83, 0
    %v232 = vsel %vm98, %v84, 0
    %v235 = vsel %vm98, %v85, 0
    %v238 = vsel %vm98, %v86, 0
    %v241 = vsel %vm98, %v87, 0
    %v244 = vsel %vm98, %v88, 0
    %246 = vmatprep.subr.mxu0 0.0
    %247 = vmatpush1.msra.mxu0 %v89
    %248 = vmatprep.subr.mxu0 0.0
    %249 = vmatpush1.msra.mxu0 %v90
    %250 = vmatprep.subr.mxu0 0.0
    %251 = vmatpush1.msra.mxu0 0.0
    %252 = vmatprep.subr.mxu0 0.0
    %253 = vmatpush1.msra.mxu0 0.0
    %254 = vmatprep.subr.mxu0 0.0
    %255 = vmatpush1.msra.mxu0 0.0
    %256 = vmatprep.subr.mxu0 0.0
    %257 = vmatpush1.msra.mxu0 0.0
    %258 = vmatprep.subr.mxu0 0.0
    %259 = vmatpush1.msra.mxu0 0.0
    %260 = vmatprep.subr.mxu0 0.0
    %261 = vmatpush1.msra.mxu0 0.0
    %262 = vmatprep.subr.mxu0 0.0
    %263 = vmatpush1.msra.mxu0 0.0
    %264 = vmatprep.subr.mxu0 0.0
    %265 = vmatpush1.msra.mxu0 0.0
    %266 = vmatprep.subr.mxu0 0.0
    %267 = vmatpush1.msra.mxu0 0.0
    %268 = vmatprep.subr.mxu0 0.0
    %269 = vmatpush1.msra.mxu0 0.0
    %270 = vmatprep.subr.mxu0 0.0
    %271 = vmatpush1.msra.mxu0 0.0
    %272 = vmatprep.subr.mxu0 0.0
    %273 = vmatpush1.msra.mxu0 0.0
    %274 = vmatprep.subr.mxu0 0.0
    %275 = vmatpush1.msra.mxu0 0.0
    %276 = vmatprep.subr.mxu0 0.0
    %277 = vmatpush1.msra.mxu0 0.0
    %278 = vmatprep.subr.mxu0 0.0
    %279 = vmatpush1.msra.mxu0 0.0
    %280 = vmatprep.subr.mxu0 0.0
    %281 = vmatpush1.msra.mxu0 0.0
    %282 = vmatprep.subr.mxu0 0.0
    %283 = vmatpush1.msra.mxu0 0.0
    %284 = vmatprep.subr.mxu0 0.0
    %285 = vmatpush1.msra.mxu0 0.0
    %286 = vmatprep.subr.mxu0 0.0
    %287 = vmatpush1.msra.mxu0 0.0
    %288 = vmatprep.subr.mxu0 0.0
    %289 = vmatpush1.msra.mxu0 0.0
    %290 = vmatprep.subr.mxu0 0.0
    %291 = vmatpush1.msra.mxu0 0.0
    %292 = vmatprep.subr.mxu0 0.0
    %293 = vmatpush1.msra.mxu0 0.0
    %294 = vmatprep.subr.mxu0 0.0
    %295 = vmatpush1.msra.mxu0 0.0
    %296 = vmatprep.subr.mxu0 0.0
    %297 = vmatpush1.msra.mxu0 0.0
    %298 = vmatprep.subr.mxu0 0.0
    %299 = vmatpush1.msra.mxu0 0.0
    %300 = vmatprep.subr.mxu0 0.0
    %301 = vmatpush1.msra.mxu0 0.0
    %302 = vmatprep.subr.mxu0 0.0
    %303 = vmatpush1.msra.mxu0 0.0
    %304 = vmatprep.subr.mxu0 0.0
    %305 = vmatpush1.msra.mxu0 0.0
    %306 = vmatprep.subr.mxu0 0.0
    %307 = vmatpush1.msra.mxu0 0.0
    %308 = vmatprep.subr.mxu0 0.0
    %309 = vmatpush1.msra.mxu0 0.0
    %310 = vmatprep.mubr.f32.mxu0 0.0
    %311 = vmatmul.mubr.f32.gmra.mrb[0].mxu0 %v100
    %v312 = vpop.f32.mrb[0].mxu0
    %v313 = vadd.f32 %v96, %v312
    %v314 = vpop.f32.mrb[0].mxu0
    %315 = vmatprep.mubr.f32.mxu0 0.0
    %316 = vmatmul.mubr.f32.gmra.mrb[0].mxu0 %v103
    %v317 = vpop.f32.mrb[0].mxu0
    %v318 = vadd.f32 %v96, %v317
    %v319 = vpop.f32.mrb[0].mxu0
    %320 = vmatprep.mubr.f32.mxu0 0.0
    %321 = vmatmul.mubr.f32.gmra.mrb[0].mxu0 %v106
    %v322 = vpop.f32.mrb[0].mxu0
    %v323 = vadd.f32 %v96, %v322
    %v324 = vpop.f32.mrb[0].mxu0
    %325 = vmatprep.mubr.f32.mxu0 0.0
    %326 = vmatmul.mubr.f32.gmra.mrb[0].mxu0 %v109
    %v327 = vpop.f32.mrb[0].mxu0
    %v328 = vadd.f32 %v96, %v327
    %v329 = vpop.f32.mrb[0].mxu0
    %330 = vmatprep.mubr.f32.mxu0 0.0
    %331 = vmatmul.mubr.f32.gmra.mrb[0].mxu0 %v112
    %v332 = vpop.f32.mrb[0].mxu0
    %v333 = vadd.f32 %v96, %v332
    %v334 = vpop.f32.mrb[0].mxu0
    %335 = vmatprep.mubr.f32.mxu0 0.0
    %336 = vmatmul.mubr.f32.gmra.mrb[0].mxu0 %v115
    %v337 = vpop.f32.mrb[0].mxu0
    %v338 = vadd.f32 %v96, %v337
    %v339 = vpop.f32.mrb[0].mxu0
    %340 = vmatprep.mubr.f32.mxu0 0.0
    %341 = vmatmul.mubr.f32.gmra.mrb[0].mxu0 %v118
    %v342 = vpop.f32.mrb[0].mxu0
    %v343 = vadd.f32 %v96, %v342
    %v344 = vpop.f32.mrb[0].mxu0
    %345 = vmatprep.mubr.f32.mxu0 0.0
    %346 = vmatmul.mubr.f32.gmra.mrb[0].mxu0 %v121
    %v347 = vpop.f32.mrb[0].mxu0
    %v348 = vadd.f32 %v96, %v347
    %v349 = vpop.f32.mrb[0].mxu0
    %350 = vmatprep.mubr.f32.mxu0 0.0
    %351 = vmatmul.mubr.f32.gmra.mrb[0].mxu0 %v124
    %v352 = vpop.f32.mrb[0].mxu0
    %v353 = vadd.f32 %v96, %v352
    %v354 = vpop.f32.mrb[0].mxu0
    %355 = vmatprep.mubr.f32.mxu0 0.0
    %356 = vmatmul.mubr.f32.gmra.mrb[0].mxu0 %v127
    %v357 = vpop.f32.mrb[0].mxu0
    %v358 = vadd.f32 %v96, %v357
    %v359 = vpop.f32.mrb[0].mxu0
    %360 = vmatprep.mubr.f32.mxu0 0.0
    %361 = vmatmul.mubr.f32.gmra.mrb[0].mxu0 %v130
    %v362 = vpop.f32.mrb[0].mxu0
    %v363 = vadd.f32 %v96, %v362
    %v364 = vpop.f32.mrb[0].mxu0
    %365 = vmatprep.mubr.f32.mxu0 0.0
    %366 = vmatmul.mubr.f32.gmra.mrb[0].mxu0 %v133
    %v367 = vpop.f32.mrb[0].mxu0
    %v368 = vadd.f32 %v96, %v367
    %v369 = vpop.f32.mrb[0].mxu0
    %370 = vmatprep.mubr.f32.mxu0 0.0
    %371 = vmatmul.mubr.f32.gmra.mrb[0].mxu0 %v136
    %v372 = vpop.f32.mrb[0].mxu0
    %v373 = vadd.f32 %v96, %v372
    %v374 = vpop.f32.mrb[0].mxu0
    %375 = vmatprep.mubr.f32.mxu0 0.0
    %376 = vmatmul.mubr.f32.gmra.mrb[0].mxu0 %v139
    %v377 = vpop.f32.mrb[0].mxu0
    %v378 = vadd.f32 %v96, %v377
    %v379 = vpop.f32.mrb[0].mxu0
    %380 = vmatprep.mubr.f32.mxu0 0.0
    %381 = vmatmul.mubr.f32.gmra.mrb[0].mxu0 %v142
    %v382 = vpop.f32.mrb[0].mxu0
    %v383 = vadd.f32 %v96, %v382
    %v384 = vpop.f32.mrb[0].mxu0
    %385 = vmatprep.mubr.f32.mxu0 0.0
    %386 = vmatmul.mubr.f32.gmra.mrb[0].mxu0 %v145
    %v387 = vpop.f32.mrb[0].mxu0
    %v388 = vadd.f32 %v96, %v387
    %v389 = vpop.f32.mrb[0].mxu0
    %390 = vmatprep.mubr.f32.mxu0 0.0
    %391 = vmatmul.mubr.f32.gmra.mrb[0].mxu0 %v148
    %v392 = vpop.f32.mrb[0].mxu0
    %v393 = vadd.f32 %v96, %v392
    %v394 = vpop.f32.mrb[0].mxu0
    %395 = vmatprep.mubr.f32.mxu0 0.0
    %396 = vmatmul.mubr.f32.gmra.mrb[0].mxu0 %v151
    %v397 = vpop.f32.mrb[0].mxu0
    %v398 = vadd.f32 %v96, %v397
    %v399 = vpop.f32.mrb[0].mxu0
    %400 = vmatprep.mubr.f32.mxu0 0.0
    %401 = vmatmul.mubr.f32.gmra.mrb[0].mxu0 %v154
    %v402 = vpop.f32.mrb[0].mxu0
    %v403 = vadd.f32 %v96, %v402
    %v404 = vpop.f32.mrb[0].mxu0
    %405 = vmatprep.mubr.f32.mxu0 0.0
    %406 = vmatmul.mubr.f32.gmra.mrb[0].mxu0 %v157
    %v407 = vpop.f32.mrb[0].mxu0
    %v408 = vadd.f32 %v96, %v407
    %v409 = vpop.f32.mrb[0].mxu0
    %410 = vmatprep.mubr.f32.mxu0 0.0
    %411 = vmatmul.mubr.f32.gmra.mrb[0].mxu0 %v160
    %v412 = vpop.f32.mrb[0].mxu0
    %v413 = vadd.f32 %v96, %v412
    %v414 = vpop.f32.mrb[0].mxu0
    %415 = vmatprep.mubr.f32.mxu0 0.0
    %416 = vmatmul.mubr.f32.gmra.mrb[0].mxu0 %v163
    %v417 = vpop.f32.mrb[0].mxu0
    %v418 = vadd.f32 %v96, %v417
    %v419 = vpop.f32.mrb[0].mxu0
    %420 = vmatprep.mubr.f32.mxu0 0.0
    %421 = vmatmul.mubr.f32.gmra.mrb[0].mxu0 %v166
    %v422 = vpop.f32.mrb[0].mxu0
    %v423 = vadd.f32 %v96, %v422
    %v424 = vpop.f32.mrb[0].mxu0
    %425 = vmatprep.mubr.f32.mxu0 0.0
    %426 = vmatmul.mubr.f32.gmra.mrb[0].mxu0 %v169
    %v427 = vpop.f32.mrb[0].mxu0
    %v428 = vadd.f32 %v96, %v427
    %v429 = vpop.f32.mrb[0].mxu0
    %430 = vmatprep.mubr.f32.mxu0 0.0
    %431 = vmatmul.mubr.f32.gmra.mrb[0].mxu0 %v172
    %v432 = vpop.f32.mrb[0].mxu0
    %v433 = vadd.f32 %v96, %v432
    %v434 = vpop.f32.mrb[0].mxu0
    %435 = vmatprep.mubr.f32.mxu0 0.0
    %436 = vmatmul.mubr.f32.gmra.mrb[0].mxu0 %v175
    %v437 = vpop.f32.mrb[0].mxu0
    %v438 = vadd.f32 %v96, %v437
    %v439 = vpop.f32.mrb[0].mxu0
    %440 = vmatprep.mubr.f32.mxu0 0.0
    %441 = vmatmul.mubr.f32.gmra.mrb[0].mxu0 %v178
    %v442 = vpop.f32.mrb[0].mxu0
    %v443 = vadd.f32 %v96, %v442
    %v444 = vpop.f32.mrb[0].mxu0
    %445 = vmatprep.mubr.f32.mxu0 0.0
    %446 = vmatmul.mubr.f32.gmra.mrb[0].mxu0 %v181
    %v447 = vpop.f32.mrb[0].mxu0
    %v448 = vadd.f32 %v96, %v447
    %v449 = vpop.f32.mrb[0].mxu0
    %450 = vmatprep.mubr.f32.mxu0 0.0
    %451 = vmatmul.mubr.f32.gmra.mrb[0].mxu0 %v184
    %v452 = vpop.f32.mrb[0].mxu0
    %v453 = vadd.f32 %v96, %v452
    %v454 = vpop.f32.mrb[0].mxu0
    %455 = vmatprep.mubr.f32.mxu0 0.0
    %456 = vmatmul.mubr.f32.gmra.mrb[0].mxu0 %v187
    %v457 = vpop.f32.mrb[0].mxu0
    %v458 = vadd.f32 %v96, %v457
    %v459 = vpop.f32.mrb[0].mxu0
    %460 = vmatprep.mubr.f32.mxu0 0.0
    %461 = vmatmul.mubr.f32.gmra.mrb[0].mxu0 %v190
    %v462 = vpop.f32.mrb[0].mxu0
    %v463 = vadd.f32 %v96, %v462
    %v464 = vpop.f32.mrb[0].mxu0
    %465 = vmatprep.mubr.f32.mxu0 0.0
    %466 = vmatmul.mubr.f32.gmra.mrb[0].mxu0 %v193
    %v467 = vpop.f32.mrb[0].mxu0
    %v468 = vadd.f32 %v96, %v467
    %v469 = vpop.f32.mrb[0].mxu0
    %470 = vmatprep.mubr.f32.mxu0 0.0
    %471 = vmatmul.mubr.f32.gmra.mrb[0].mxu0 %v196
    %v472 = vpop.f32.mrb[0].mxu0
    %v473 = vadd.f32 %v96, %v472
    %v474 = vpop.f32.mrb[0].mxu0
    %475 = vmatprep.mubr.f32.mxu0 0.0
    %476 = vmatmul.mubr.f32.gmra.mrb[0].mxu0 %v199
    %v477 = vpop.f32.mrb[0].mxu0
    %v478 = vadd.f32 %v96, %v477
    %v479 = vpop.f32.mrb[0].mxu0
    %480 = vmatprep.mubr.f32.mxu0 0.0
    %481 = vmatmul.mubr.f32.gmra.mrb[0].mxu0 %v202
    %v482 = vpop.f32.mrb[0].mxu0
    %v483 = vadd.f32 %v96, %v482
    %v484 = vpop.f32.mrb[0].mxu0
    %485 = vmatprep.mubr.f32.mxu0 0.0
    %486 = vmatmul.mubr.f32.gmra.mrb[0].mxu0 %v205
    %v487 = vpop.f32.mrb[0].mxu0
    %v488 = vadd.f32 %v96, %v487
    %v489 = vpop.f32.mrb[0].mxu0
    %490 = vmatprep.mubr.f32.mxu0 0.0
    %491 = vmatmul.mubr.f32.gmra.mrb[0].mxu0 %v208
    %v492 = vpop.f32.mrb[0].mxu0
    %v493 = vadd.f32 %v96, %v492
    %v494 = vpop.f32.mrb[0].mxu0
    %495 = vmatprep.mubr.f32.mxu0 0.0
    %496 = vmatmul.mubr.f32.gmra.mrb[0].mxu0 %v211
    %v497 = vpop.f32.mrb[0].mxu0
    %v498 = vadd.f32 %v96, %v497
    %v499 = vpop.f32.mrb[0].mxu0
    %500 = vmatprep.mubr.f32.mxu0 0.0
    %501 = vmatmul.mubr.f32.gmra.mrb[0].mxu0 %v214
    %v502 = vpop.f32.mrb[0].mxu0
    %v503 = vadd.f32 %v96, %v502
    %v504 = vpop.f32.mrb[0].mxu0
    %505 = vmatprep.mubr.f32.mxu0 0.0
    %506 = vmatmul.mubr.f32.gmra.mrb[0].mxu0 %v217
    %v507 = vpop.f32.mrb[0].mxu0
    %v508 = vadd.f32 %v96, %v507
    %v509 = vpop.f32.mrb[0].mxu0
    %510 = vmatprep.mubr.f32.mxu0 0.0
    %511 = vmatmul.mubr.f32.gmra.mrb[0].mxu0 %v220
    %v512 = vpop.f32.mrb[0].mxu0
    %v513 = vadd.f32 %v96, %v512
    %v514 = vpop.f32.mrb[0].mxu0
    %515 = vmatprep.mubr.f32.mxu0 0.0
    %516 = vmatmul.mubr.f32.gmra.mrb[0].mxu0 %v223
    %v517 = vpop.f32.mrb[0].mxu0
    %v518 = vadd.f32 %v96, %v517
    %v519 = vpop.f32.mrb[0].mxu0
    %520 = vmatprep.mubr.f32.mxu0 0.0
    %521 = vmatmul.mubr.f32.gmra.mrb[0].mxu0 %v226
    %v522 = vpop.f32.mrb[0].mxu0
    %v523 = vadd.f32 %v96, %v522
    %v524 = vpop.f32.mrb[0].mxu0
    %525 = vmatprep.mubr.f32.mxu0 0.0
    %526 = vmatmul.mubr.f32.gmra.mrb[0].mxu0 %v229
    %v527 = vpop.f32.mrb[0].mxu0
    %v528 = vadd.f32 %v96, %v527
    %v529 = vpop.f32.mrb[0].mxu0
    %530 = vmatprep.mubr.f32.mxu0 0.0
    %531 = vmatmul.mubr.f32.gmra.mrb[0].mxu0 %v232
    %v532 = vpop.f32.mrb[0].mxu0
    %v533 = vadd.f32 %v96, %v532
    %v534 = vpop.f32.mrb[0].mxu0
    %535 = vmatprep.mubr.f32.mxu0 0.0
    %536 = vmatmul.mubr.f32.gmra.mrb[0].mxu0 %v235
    %v537 = vpop.f32.mrb[0].mxu0
    %v538 = vadd.f32 %v96, %v537
    %v539 = vpop.f32.mrb[0].mxu0
    %540 = vmatprep.mubr.f32.mxu0 0.0
    %541 = vmatmul.mubr.f32.gmra.mrb[0].mxu0 %v238
    %v542 = vpop.f32.mrb[0].mxu0
    %v543 = vadd.f32 %v96, %v542
    %v544 = vpop.f32.mrb[0].mxu0
    %545 = vmatprep.mubr.f32.mxu0 0.0
    %546 = vmatmul.mubr.f32.gmra.mrb[0].mxu0 %v241
    %v547 = vpop.f32.mrb[0].mxu0
    %v548 = vadd.f32 %v96, %v547
    %v549 = vpop.f32.mrb[0].mxu0
    %550 = vmatprep.mubr.f32.mxu0 0.0
    %551 = vmatmul.mubr.f32.gmra.mrb[0].mxu0 %v244
    %v552 = vpop.f32.mrb[0].mxu0
    %v553 = vadd.f32 %v96, %v552
    %v554 = vpop.f32.mrb[0].mxu0
    %555 = vdwg.mxu0
    %v556 = vmul.f32 %v313, 0.1
    %v557 = vmul.f32 %v318, 0.1
    %v558 = vmul.f32 %v323, 0.1
    %v559 = vmul.f32 %v328, 0.1
    %v560 = vmul.f32 %v333, 0.1
    %v561 = vmul.f32 %v338, 0.1
    %v562 = vmul.f32 %v343, 0.1
    %v563 = vmul.f32 %v348, 0.1
    %v564 = vmul.f32 %v353, 0.1
    %v565 = vmul.f32 %v358, 0.1
    %v566 = vmul.f32 %v363, 0.1
    %v567 = vmul.f32 %v368, 0.1
    %v568 = vmul.f32 %v373, 0.1
    %v569 = vmul.f32 %v378, 0.1
    %v570 = vmul.f32 %v383, 0.1
    %v571 = vmul.f32 %v388, 0.1
    %v572 = vmul.f32 %v393, 0.1
    %v573 = vmul.f32 %v398, 0.1
    %v574 = vmul.f32 %v403, 0.1
    %v575 = vmul.f32 %v408, 0.1
    %v576 = vmul.f32 %v413, 0.1
    %v577 = vmul.f32 %v418, 0.1
    %v578 = vmul.f32 %v423, 0.1
    %v579 = vmul.f32 %v428, 0.1
    %v580 = vmul.f32 %v433, 0.1
    %v581 = vmul.f32 %v438, 0.1
    %v582 = vmul.f32 %v443, 0.1
    %v583 = vmul.f32 %v448, 0.1
    %v584 = vmul.f32 %v453, 0.1
    %v585 = vmul.f32 %v458, 0.1
    %v586 = vmul.f32 %v463, 0.1
    %v587 = vmul.f32 %v468, 0.1
    %v588 = vmul.f32 %v473, 0.1
    %v589 = vmul.f32 %v478, 0.1
    %v590 = vmul.f32 %v483, 0.1
    %v591 = vmul.f32 %v488, 0.1
    %v592 = vmul.f32 %v493, 0.1
    %v593 = vmul.f32 %v498, 0.1
    %v594 = vmul.f32 %v503, 0.1
    %v595 = vmul.f32 %v508, 0.1
    %v596 = vmul.f32 %v513, 0.1
    %v597 = vmul.f32 %v518, 0.1
    %v598 = vmul.f32 %v523, 0.1
    %v599 = vmul.f32 %v528, 0.1
    %v600 = vmul.f32 %v533, 0.1
    %v601 = vmul.f32 %v538, 0.1
    %v602 = vmul.f32 %v543, 0.1
    %v603 = vmul.f32 %v548, 0.1
    %v604 = vmul.f32 %v553, 0.1
    %v605 = vmax.f32 %v313, %v556
    %v606 = vmax.f32 %v318, %v557
    %v607 = vmax.f32 %v323, %v558
    %v608 = vmax.f32 %v328, %v559
    %v609 = vmax.f32 %v333, %v560
    %v610 = vmax.f32 %v338, %v561
    %v611 = vmax.f32 %v343, %v562
    %v612 = vmax.f32 %v348, %v563
    %v613 = vmax.f32 %v353, %v564
    %v614 = vmax.f32 %v358, %v565
    %v615 = vmax.f32 %v363, %v566
    %v616 = vmax.f32 %v368, %v567
    %v617 = vmax.f32 %v373, %v568
    %v618 = vmax.f32 %v378, %v569
    %v619 = vmax.f32 %v383, %v570
    %v620 = vmax.f32 %v388, %v571
    %v621 = vmax.f32 %v393, %v572
    %v622 = vmax.f32 %v398, %v573
    %v623 = vmax.f32 %v403, %v574
    %v624 = vmax.f32 %v408, %v575
    %v625 = vmax.f32 %v413, %v576
    %v626 = vmax.f32 %v418, %v577
    %v627 = vmax.f32 %v423, %v578
    %v628 = vmax.f32 %v428, %v579
    %v629 = vmax.f32 %v433, %v580
    %v630 = vmax.f32 %v438, %v581
    %v631 = vmax.f32 %v443, %v582
    %v632 = vmax.f32 %v448, %v583
    %v633 = vmax.f32 %v453, %v584
    %v634 = vmax.f32 %v458, %v585
    %v635 = vmax.f32 %v463, %v586
    %v636 = vmax.f32 %v468, %v587
    %v637 = vmax.f32 %v473, %v588
    %v638 = vmax.f32 %v478, %v589
    %v639 = vmax.f32 %v483, %v590
    %v640 = vmax.f32 %v488, %v591
    %v641 = vmax.f32 %v493, %v592
    %v642 = vmax.f32 %v498, %v593
    %v643 = vmax.f32 %v503, %v594
    %v644 = vmax.f32 %v508, %v595
    %v645 = vmax.f32 %v513, %v596
    %v646 = vmax.f32 %v518, %v597
    %v647 = vmax.f32 %v523, %v598
    %v648 = vmax.f32 %v528, %v599
    %v649 = vmax.f32 %v533, %v600
    %v650 = vmax.f32 %v538, %v601
    %v651 = vmax.f32 %v543, %v602
    %v652 = vmax.f32 %v548, %v603
    %v653 = vmax.f32 %v553, %v604
    %vm654 = vcmask 523264
    %655 = vst.msk [vmem:[%s3] sm:$0xff] %vm654, %v605
    %656 = vst.msk [vmem:[%s3 + $0x8] sm:$0xff] %vm654, %v606
    %657 = vst.msk [vmem:[%s3 + $0x10] sm:$0xff] %vm654, %v607
    %658 = vst.msk [vmem:[%s3 + $0x18] sm:$0xff] %vm654, %v608
    %659 = vst.msk [vmem:[%s3 + $0x20] sm:$0xff] %vm654, %v609
    %660 = vst.msk [vmem:[%s3 + $0x28] sm:$0xff] %vm654, %v610
    %661 = vst.msk [vmem:[%s3 + $0x30] sm:$0xff] %vm654, %v611
    %662 = vst.msk [vmem:[%s3 + $0x38] sm:$0xff] %vm654, %v612
    %663 = vst.msk [vmem:[%s3 + $0x40] sm:$0xff] %vm654, %v613
    %664 = vst.msk [vmem:[%s3 + $0x48] sm:$0xff] %vm654, %v614
    %665 = vst.msk [vmem:[%s3 + $0x50] sm:$0xff] %vm654, %v615
    %666 = vst.msk [vmem:[%s3 + $0x58] sm:$0xff] %vm654, %v616
    %667 = vst.msk [vmem:[%s3 + $0x60] sm:$0xff] %vm654, %v617
    %668 = vst.msk [vmem:[%s3 + $0x68] sm:$0xff] %vm654, %v618
    %669 = vst.msk [vmem:[%s3 + $0x70] sm:$0xff] %vm654, %v619
    %670 = vst.msk [vmem:[%s3 + $0x78] sm:$0xff] %vm654, %v620
    %671 = vst.msk [vmem:[%s3 + $0x80] sm:$0xff] %vm654, %v621
    %672 = vst.msk [vmem:[%s3 + $0x88] sm:$0xff] %vm654, %v622
    %673 = vst.msk [vmem:[%s3 + $0x90] sm:$0xff] %vm654, %v623
    %674 = vst.msk [vmem:[%s3 + $0x98] sm:$0xff] %vm654, %v624
    %675 = vst.msk [vmem:[%s3 + $0xa0] sm:$0xff] %vm654, %v625
    %676 = vst.msk [vmem:[%s3 + $0xa8] sm:$0xff] %vm654, %v626
    %677 = vst.msk [vmem:[%s3 + $0xb0] sm:$0xff] %vm654, %v627
    %678 = vst.msk [vmem:[%s3 + $0xb8] sm:$0xff] %vm654, %v628
    %679 = vst.msk [vmem:[%s3 + $0xc0] sm:$0xff] %vm654, %v629
    %680 = vst.msk [vmem:[%s3 + $0xc8] sm:$0xff] %vm654, %v630
    %681 = vst.msk [vmem:[%s3 + $0xd0] sm:$0xff] %vm654, %v631
    %682 = vst.msk [vmem:[%s3 + $0xd8] sm:$0xff] %vm654, %v632
    %683 = vst.msk [vmem:[%s3 + $0xe0] sm:$0xff] %vm654, %v633
    %684 = vst.msk [vmem:[%s3 + $0xe8] sm:$0xff] %vm654, %v634
    %685 = vst.msk [vmem:[%s3 + $0xf0] sm:$0xff] %vm654, %v635
    %686 = vst.msk [vmem:[%s3 + $0xf8] sm:$0xff] %vm654, %v636
    %687 = vst.msk [vmem:[%s3 + $0x100] sm:$0xff] %vm654, %v637
    %688 = vst.msk [vmem:[%s3 + $0x108] sm:$0xff] %vm654, %v638
    %689 = vst.msk [vmem:[%s3 + $0x110] sm:$0xff] %vm654, %v639
    %690 = vst.msk [vmem:[%s3 + $0x118] sm:$0xff] %vm654, %v640
    %691 = vst.msk [vmem:[%s3 + $0x120] sm:$0xff] %vm654, %v641
    %692 = vst.msk [vmem:[%s3 + $0x128] sm:$0xff] %vm654, %v642
    %693 = vst.msk [vmem:[%s3 + $0x130] sm:$0xff] %vm654, %v643
    %694 = vst.msk [vmem:[%s3 + $0x138] sm:$0xff] %vm654, %v644
    %695 = vst.msk [vmem:[%s3 + $0x140] sm:$0xff] %vm654, %v645
    %696 = vst.msk [vmem:[%s3 + $0x148] sm:$0xff] %vm654, %v646
    %697 = vst.msk [vmem:[%s3 + $0x150] sm:$0xff] %vm654, %v647
    %698 = vst.msk [vmem:[%s3 + $0x158] sm:$0xff] %vm654, %v648
    %699 = vst.msk [vmem:[%s3 + $0x160] sm:$0xff] %vm654, %v649
    %700 = vst.msk [vmem:[%s3 + $0x168] sm:$0xff] %vm654, %v650
    %701 = vst.msk [vmem:[%s3 + $0x170] sm:$0xff] %vm654, %v651
    %702 = vst.msk [vmem:[%s3 + $0x178] sm:$0xff] %vm654, %v652
    %703 = vst.msk [vmem:[%s3 + $0x180] sm:$0xff] %vm654, %v653
    // Predicated region
    $region22: #{discriminator_forward.3} parent=1 // pred_check
      _
    $region23: #{discriminator_forward.3} parent=1 // pred_check_branch
      %705 = sbr.rel (0) target = $region25
    $region24: #{discriminator_forward.3} parent=1 // pred_region
      _
    $region25: #{discriminator_forward.3} parent=1 // pred_fallthru
      _
    // Predicated region
    $region26: #{discriminator_forward.3} parent=1 // pred_check
      _
    $region27: #{discriminator_forward.3} parent=1 // pred_check_branch
      %707 = sbr.rel (0) target = $region29
    $region28: #{discriminator_forward.3} parent=1 // pred_region
      _
    $region29: #{discriminator_forward.3} parent=1 // pred_fallthru
      _
    %708 = vsyncpa [#allocation3], 1
    %709 = vsyncpa [#allocation5], 1

// kernel: discriminator_forward.4
$region0: #{discriminator_forward.4}
  #allocation0 [shape = 'u32[]', space=smem, size = 0x4, offset = 0x4, fixed_abs, tag = 'smem constant byte address 0x4 - core index']
  #allocation1 [shape = 'u32[144,128]{1,0:T(1,128)}', space=vmem, size = 0x12000, scoped, tag = 'internal scratch']
  %s0 = inlined_call_operand.vmem [shape: f32[104,1024], index: 0, kind: input, shape index: {}]
  %s1 = inlined_call_operand.vmem [shape: bf16[1024,128], index: 1, kind: input, shape index: {}]
  %s2 = inlined_call_operand.vmem [shape: f32[1,128], index: 2, kind: input, shape index: {}]
  %s3 = inlined_call_operand.vmem [shape: f32[1,128], index: 3, kind: input, shape index: {}]
  %s4 = inlined_call_operand.vmem [shape: f32[104,128], index: 4, kind: output, shape index: {}]
  %s5 = sld [smem:[#allocation0]]
  $region34: #{discriminator_forward.4} parent=0
    _
  %s7 = ssub.s32 1, %s5
  %s8 = scalar_select 0, %s7, %s5
  // Predicated region
  $region2: #{discriminator_forward.4} parent=0 // pred_check
    _
  $region3: #{discriminator_forward.4} parent=0 // pred_check_branch
    %10 = sbr.rel (0) target = $region5
  $region4: #{discriminator_forward.4} parent=0 // pred_region
    _
  $region5: #{discriminator_forward.4} parent=0 // pred_fallthru
    _
  // Predicated region
  $region6: #{discriminator_forward.4} parent=0 // pred_check
    _
  $region7: #{discriminator_forward.4} parent=0 // pred_check_branch
    %12 = sbr.rel (0) target = $region9
  $region8: #{discriminator_forward.4} parent=0 // pred_region
    _
  $region9: #{discriminator_forward.4} parent=0 // pred_fallthru
    _
  // Predicated region
  $region10: #{discriminator_forward.4} parent=0 // pred_check
    _
  $region11: #{discriminator_forward.4} parent=0 // pred_check_branch
    %14 = sbr.rel (0) target = $region13
  $region12: #{discriminator_forward.4} parent=0 // pred_region
    _
  $region13: #{discriminator_forward.4} parent=0 // pred_fallthru
    _
  // Predicated region
  $region14: #{discriminator_forward.4} parent=0 // pred_check
    _
  $region15: #{discriminator_forward.4} parent=0 // pred_check_branch
    %16 = sbr.rel (0) target = $region17
  $region16: #{discriminator_forward.4} parent=0 // pred_region
    _
  $region17: #{discriminator_forward.4} parent=0 // pred_fallthru
    _
  %p17 = scmp.eq.s32.totalorder 0, 0
  // Predicated region
  $region18: #{discriminator_forward.4} parent=0 // pred_check
    %p18 = pneg %p17
  $region19: #{discriminator_forward.4} parent=0 // pred_check_branch
    %20 = sbr.rel (%p18) target = $region21
  $region20: #{discriminator_forward.4} parent=0 // pred_region
    %21 = vst [vmem:[%s4] sm:$0xff] 0.0
    %22 = vst [vmem:[%s4 + $0x8] sm:$0xff] 0.0
    %23 = vst [vmem:[%s4 + $0x10] sm:$0xff] 0.0
    %24 = vst [vmem:[%s4 + $0x18] sm:$0xff] 0.0
    %25 = vst [vmem:[%s4 + $0x20] sm:$0xff] 0.0
    %26 = vst [vmem:[%s4 + $0x28] sm:$0xff] 0.0
    %27 = vst [vmem:[%s4 + $0x30] sm:$0xff] 0.0
    %28 = vst [vmem:[%s4 + $0x38] sm:$0xff] 0.0
    %29 = vst [vmem:[%s4 + $0x40] sm:$0xff] 0.0
    %30 = vst [vmem:[%s4 + $0x48] sm:$0xff] 0.0
    %31 = vst [vmem:[%s4 + $0x50] sm:$0xff] 0.0
    %32 = vst [vmem:[%s4 + $0x58] sm:$0xff] 0.0
    %33 = vst [vmem:[%s4 + $0x60] sm:$0xff] 0.0
  $region21: #{discriminator_forward.4} parent=0 // pred_fallthru
    _
  %v34 = vld [vmem:[%s4] sm:$0xff]
  %v35 = vld [vmem:[%s4 + $0x8] sm:$0xff]
  %v36 = vld [vmem:[%s4 + $0x10] sm:$0xff]
  %v37 = vld [vmem:[%s4 + $0x18] sm:$0xff]
  %v38 = vld [vmem:[%s4 + $0x20] sm:$0xff]
  %v39 = vld [vmem:[%s4 + $0x28] sm:$0xff]
  %v40 = vld [vmem:[%s4 + $0x30] sm:$0xff]
  %v41 = vld [vmem:[%s4 + $0x38] sm:$0xff]
  %v42 = vld [vmem:[%s4 + $0x40] sm:$0xff]
  %v43 = vld [vmem:[%s4 + $0x48] sm:$0xff]
  %v44 = vld [vmem:[%s4 + $0x50] sm:$0xff]
  %v45 = vld [vmem:[%s4 + $0x58] sm:$0xff]
  %v46 = vld [vmem:[%s4 + $0x60] sm:$0xff]
  %v47 = vld [vmem:[%s0] sm:$0xff]
  %v48 = vld [vmem:[%s0 + $0x8] sm:$0xff]
  %v49 = vld [vmem:[%s0 + $0x10] sm:$0xff]
  %v50 = vld [vmem:[%s0 + $0x18] sm:$0xff]
  %v51 = vld [vmem:[%s0 + $0x20] sm:$0xff]
  %v52 = vld [vmem:[%s0 + $0x28] sm:$0xff]
  %v53 = vld [vmem:[%s0 + $0x30] sm:$0xff]
  %v54 = vld [vmem:[%s0 + $0x38] sm:$0xff]
  %v55 = vld [vmem:[%s0 + $0x40] sm:$0xff]
  %v56 = vld [vmem:[%s0 + $0x48] sm:$0xff]
  %v57 = vld [vmem:[%s0 + $0x50] sm:$0xff]
  %v58 = vld [vmem:[%s0 + $0x58] sm:$0xff]
  %v59 = vld [vmem:[%s0 + $0x60] sm:$0xff]
  %v60 = vld [vmem:[%s0 + $0x68] sm:$0xff]
  %v61 = vld [vmem:[%s0 + $0x70] sm:$0xff]
  %v62 = vld [vmem:[%s0 + $0x78] sm:$0xff]
  %v63 = vld [vmem:[%s0 + $0x80] sm:$0xff]
  %v64 = vld [vmem:[%s0 + $0x88] sm:$0xff]
  %v65 = vld [vmem:[%s0 + $0x90] sm:$0xff]
  %v66 = vld [vmem:[%s0 + $0x98] sm:$0xff]
  %v67 = vld [vmem:[%s0 + $0xa0] sm:$0xff]
  %v68 = vld [vmem:[%s0 + $0xa8] sm:$0xff]
  %v69 = vld [vmem:[%s0 + $0xb0] sm:$0xff]
  %v70 = vld [vmem:[%s0 + $0xb8] sm:$0xff]
  %v71 = vld [vmem:[%s0 + $0xc0] sm:$0xff]
  %v72 = vld [vmem:[%s0 + $0xc8] sm:$0xff]
  %v73 = vld [vmem:[%s0 + $0xd0] sm:$0xff]
  %v74 = vld [vmem:[%s0 + $0xd8] sm:$0xff]
  %v75 = vld [vmem:[%s0 + $0xe0] sm:$0xff]
  %v76 = vld [vmem:[%s0 + $0xe8] sm:$0xff]
  %v77 = vld [vmem:[%s0 + $0xf0] sm:$0xff]
  %v78 = vld [vmem:[%s0 + $0xf8] sm:$0xff]
  %v79 = vld [vmem:[%s0 + $0x100] sm:$0xff]
  %v80 = vld [vmem:[%s0 + $0x108] sm:$0xff]
  %v81 = vld [vmem:[%s0 + $0x110] sm:$0xff]
  %v82 = vld [vmem:[%s0 + $0x118] sm:$0xff]
  %v83 = vld [vmem:[%s0 + $0x120] sm:$0xff]
  %v84 = vld [vmem:[%s0 + $0x128] sm:$0xff]
  %v85 = vld [vmem:[%s0 + $0x130] sm:$0xff]
  %v86 = vld [vmem:[%s0 + $0x138] sm:$0xff]
  %v87 = vld [vmem:[%s0 + $0x140] sm:$0xff]
  %v88 = vld [vmem:[%s0 + $0x148] sm:$0xff]
  %v89 = vld [vmem:[%s0 + $0x150] sm:$0xff]
  %v90 = vld [vmem:[%s0 + $0x158] sm:$0xff]
  %v91 = vld [vmem:[%s0 + $0x160] sm:$0xff]
  %v92 = vld [vmem:[%s0 + $0x168] sm:$0xff]
  %v93 = vld [vmem:[%s0 + $0x170] sm:$0xff]
  %v94 = vld [vmem:[%s0 + $0x178] sm:$0xff]
  %v95 = vld [vmem:[%s0 + $0x180] sm:$0xff]
  %v96 = vld [vmem:[%s0 + $0x188] sm:$0xff]
  %v97 = vld [vmem:[%s0 + $0x190] sm:$0xff]
  %v98 = vld [vmem:[%s0 + $0x198] sm:$0xff]
  %v99 = vld [vmem:[%s0 + $0x1a0] sm:$0xff]
  %v100 = vld [vmem:[%s0 + $0x1a8] sm:$0xff]
  %v101 = vld [vmem:[%s0 + $0x1b0] sm:$0xff]
  %v102 = vld [vmem:[%s0 + $0x1b8] sm:$0xff]
  %v103 = vld [vmem:[%s0 + $0x1c0] sm:$0xff]
  %v104 = vld [vmem:[%s0 + $0x1c8] sm:$0xff]
  %v105 = vld [vmem:[%s0 + $0x1d0] sm:$0xff]
  %v106 = vld [vmem:[%s0 + $0x1d8] sm:$0xff]
  %v107 = vld [vmem:[%s0 + $0x1e0] sm:$0xff]
  %v108 = vld [vmem:[%s0 + $0x1e8] sm:$0xff]
  %v109 = vld [vmem:[%s0 + $0x1f0] sm:$0xff]
  %v110 = vld [vmem:[%s0 + $0x1f8] sm:$0xff]
  %v111 = vld [vmem:[%s0 + $0x200] sm:$0xff]
  %v112 = vld [vmem:[%s0 + $0x208] sm:$0xff]
  %v113 = vld [vmem:[%s0 + $0x210] sm:$0xff]
  %v114 = vld [vmem:[%s0 + $0x218] sm:$0xff]
  %v115 = vld [vmem:[%s0 + $0x220] sm:$0xff]
  %v116 = vld [vmem:[%s0 + $0x228] sm:$0xff]
  %v117 = vld [vmem:[%s0 + $0x230] sm:$0xff]
  %v118 = vld [vmem:[%s0 + $0x238] sm:$0xff]
  %v119 = vld [vmem:[%s0 + $0x240] sm:$0xff]
  %v120 = vld [vmem:[%s0 + $0x248] sm:$0xff]
  %v121 = vld [vmem:[%s0 + $0x250] sm:$0xff]
  %v122 = vld [vmem:[%s0 + $0x258] sm:$0xff]
  %v123 = vld [vmem:[%s0 + $0x260] sm:$0xff]
  %v124 = vld [vmem:[%s0 + $0x268] sm:$0xff]
  %v125 = vld [vmem:[%s0 + $0x270] sm:$0xff]
  %v126 = vld [vmem:[%s0 + $0x278] sm:$0xff]
  %v127 = vld [vmem:[%s0 + $0x280] sm:$0xff]
  %v128 = vld [vmem:[%s0 + $0x288] sm:$0xff]
  %v129 = vld [vmem:[%s0 + $0x290] sm:$0xff]
  %v130 = vld [vmem:[%s0 + $0x298] sm:$0xff]
  %v131 = vld [vmem:[%s0 + $0x2a0] sm:$0xff]
  %v132 = vld [vmem:[%s0 + $0x2a8] sm:$0xff]
  %v133 = vld [vmem:[%s0 + $0x2b0] sm:$0xff]
  %v134 = vld [vmem:[%s0 + $0x2b8] sm:$0xff]
  %v135 = vld [vmem:[%s0 + $0x2c0] sm:$0xff]
  %v136 = vld [vmem:[%s0 + $0x2c8] sm:$0xff]
  %v137 = vld [vmem:[%s0 + $0x2d0] sm:$0xff]
  %v138 = vld [vmem:[%s0 + $0x2d8] sm:$0xff]
  %v139 = vld [vmem:[%s0 + $0x2e0] sm:$0xff]
  %v140 = vld [vmem:[%s0 + $0x2e8] sm:$0xff]
  %v141 = vld [vmem:[%s0 + $0x2f0] sm:$0xff]
  %v142 = vld [vmem:[%s0 + $0x2f8] sm:$0xff]
  %v143 = vld [vmem:[%s0 + $0x300] sm:$0xff]
  %v144 = vld [vmem:[%s0 + $0x308] sm:$0xff]
  %v145 = vld [vmem:[%s0 + $0x310] sm:$0xff]
  %v146 = vld [vmem:[%s0 + $0x318] sm:$0xff]
  %v147 = vld [vmem:[%s0 + $0x320] sm:$0xff]
  %v148 = vld [vmem:[%s0 + $0x328] sm:$0xff]
  %v149 = vld [vmem:[%s0 + $0x330] sm:$0xff]
  %v150 = vld [vmem:[%s0 + $0x338] sm:$0xff]
  %v151 = vld [vmem:[%s1] sm:$0xf]
  %v152 = vld [vmem:[%s1 + $0x4] sm:$0xf]
  %v153 = vld [vmem:[%s1 + $0x8] sm:$0xf]
  %v154 = vld [vmem:[%s1 + $0xc] sm:$0xf]
  %v155 = vld [vmem:[%s1 + $0x10] sm:$0xf]
  %v156 = vld [vmem:[%s1 + $0x14] sm:$0xf]
  %v157 = vld [vmem:[%s1 + $0x18] sm:$0xf]
  %v158 = vld [vmem:[%s1 + $0x1c] sm:$0xf]
  %v159 = vld [vmem:[%s1 + $0x20] sm:$0xf]
  %v160 = vld [vmem:[%s1 + $0x24] sm:$0xf]
  %v161 = vld [vmem:[%s1 + $0x28] sm:$0xf]
  %v162 = vld [vmem:[%s1 + $0x2c] sm:$0xf]
  %v163 = vld [vmem:[%s1 + $0x30] sm:$0xf]
  %v164 = vld [vmem:[%s1 + $0x34] sm:$0xf]
  %v165 = vld [vmem:[%s1 + $0x38] sm:$0xf]
  %v166 = vld [vmem:[%s1 + $0x3c] sm:$0xf]
  %v167 = vld [vmem:[%s1 + $0x40] sm:$0xf]
  %v168 = vld [vmem:[%s1 + $0x44] sm:$0xf]
  %v169 = vld [vmem:[%s1 + $0x48] sm:$0xf]
  %v170 = vld [vmem:[%s1 + $0x4c] sm:$0xf]
  %v171 = vld [vmem:[%s1 + $0x50] sm:$0xf]
  %v172 = vld [vmem:[%s1 + $0x54] sm:$0xf]
  %v173 = vld [vmem:[%s1 + $0x58] sm:$0xf]
  %v174 = vld [vmem:[%s1 + $0x5c] sm:$0xf]
  %v175 = vld [vmem:[%s1 + $0x60] sm:$0xf]
  %v176 = vld [vmem:[%s1 + $0x64] sm:$0xf]
  %v177 = vld [vmem:[%s1 + $0x68] sm:$0xf]
  %v178 = vld [vmem:[%s1 + $0x6c] sm:$0xf]
  %v179 = vld [vmem:[%s1 + $0x70] sm:$0xf]
  %v180 = vld [vmem:[%s1 + $0x74] sm:$0xf]
  %v181 = vld [vmem:[%s1 + $0x78] sm:$0xf]
  %v182 = vld [vmem:[%s1 + $0x7c] sm:$0xf]
  %v183 = vld [vmem:[%s1 + $0x80] sm:$0xf]
  %v184 = vld [vmem:[%s1 + $0x84] sm:$0xf]
  %v185 = vld [vmem:[%s1 + $0x88] sm:$0xf]
  %v186 = vld [vmem:[%s1 + $0x8c] sm:$0xf]
  %v187 = vld [vmem:[%s1 + $0x90] sm:$0xf]
  %v188 = vld [vmem:[%s1 + $0x94] sm:$0xf]
  %v189 = vld [vmem:[%s1 + $0x98] sm:$0xf]
  %v190 = vld [vmem:[%s1 + $0x9c] sm:$0xf]
  %v191 = vld [vmem:[%s1 + $0xa0] sm:$0xf]
  %v192 = vld [vmem:[%s1 + $0xa4] sm:$0xf]
  %v193 = vld [vmem:[%s1 + $0xa8] sm:$0xf]
  %v194 = vld [vmem:[%s1 + $0xac] sm:$0xf]
  %v195 = vld [vmem:[%s1 + $0xb0] sm:$0xf]
  %v196 = vld [vmem:[%s1 + $0xb4] sm:$0xf]
  %v197 = vld [vmem:[%s1 + $0xb8] sm:$0xf]
  %v198 = vld [vmem:[%s1 + $0xbc] sm:$0xf]
  %v199 = vld [vmem:[%s1 + $0xc0] sm:$0xf]
  %v200 = vld [vmem:[%s1 + $0xc4] sm:$0xf]
  %v201 = vld [vmem:[%s1 + $0xc8] sm:$0xf]
  %v202 = vld [vmem:[%s1 + $0xcc] sm:$0xf]
  %v203 = vld [vmem:[%s1 + $0xd0] sm:$0xf]
  %v204 = vld [vmem:[%s1 + $0xd4] sm:$0xf]
  %v205 = vld [vmem:[%s1 + $0xd8] sm:$0xf]
  %v206 = vld [vmem:[%s1 + $0xdc] sm:$0xf]
  %v207 = vld [vmem:[%s1 + $0xe0] sm:$0xf]
  %v208 = vld [vmem:[%s1 + $0xe4] sm:$0xf]
  %v209 = vld [vmem:[%s1 + $0xe8] sm:$0xf]
  %v210 = vld [vmem:[%s1 + $0xec] sm:$0xf]
  %v211 = vld [vmem:[%s1 + $0xf0] sm:$0xf]
  %v212 = vld [vmem:[%s1 + $0xf4] sm:$0xf]
  %v213 = vld [vmem:[%s1 + $0xf8] sm:$0xf]
  %v214 = vld [vmem:[%s1 + $0xfc] sm:$0xf]
  %v215 = vld [vmem:[%s1 + $0x100] sm:$0xf]
  %v216 = vld [vmem:[%s1 + $0x104] sm:$0xf]
  %v217 = vld [vmem:[%s1 + $0x108] sm:$0xf]
  %v218 = vld [vmem:[%s1 + $0x10c] sm:$0xf]
  %v219 = vld [vmem:[%s1 + $0x110] sm:$0xf]
  %v220 = vld [vmem:[%s1 + $0x114] sm:$0xf]
  %v221 = vld [vmem:[%s1 + $0x118] sm:$0xf]
  %v222 = vld [vmem:[%s1 + $0x11c] sm:$0xf]
  %v223 = vld [vmem:[%s1 + $0x120] sm:$0xf]
  %v224 = vld [vmem:[%s1 + $0x124] sm:$0xf]
  %v225 = vld [vmem:[%s1 + $0x128] sm:$0xf]
  %v226 = vld [vmem:[%s1 + $0x12c] sm:$0xf]
  %v227 = vld [vmem:[%s1 + $0x130] sm:$0xf]
  %v228 = vld [vmem:[%s1 + $0x134] sm:$0xf]
  %v229 = vld [vmem:[%s1 + $0x138] sm:$0xf]
  %v230 = vld [vmem:[%s1 + $0x13c] sm:$0xf]
  %v231 = vld [vmem:[%s1 + $0x140] sm:$0xf]
  %v232 = vld [vmem:[%s1 + $0x144] sm:$0xf]
  %v233 = vld [vmem:[%s1 + $0x148] sm:$0xf]
  %v234 = vld [vmem:[%s1 + $0x14c] sm:$0xf]
  %v235 = vld [vmem:[%s1 + $0x150] sm:$0xf]
  %v236 = vld [vmem:[%s1 + $0x154] sm:$0xf]
  %v237 = vld [vmem:[%s1 + $0x158] sm:$0xf]
  %v238 = vld [vmem:[%s1 + $0x15c] sm:$0xf]
  %v239 = vld [vmem:[%s1 + $0x160] sm:$0xf]
  %v240 = vld [vmem:[%s1 + $0x164] sm:$0xf]
  %v241 = vld [vmem:[%s1 + $0x168] sm:$0xf]
  %v242 = vld [vmem:[%s1 + $0x16c] sm:$0xf]
  %v243 = vld [vmem:[%s1 + $0x170] sm:$0xf]
  %v244 = vld [vmem:[%s1 + $0x174] sm:$0xf]
  %v245 = vld [vmem:[%s1 + $0x178] sm:$0xf]
  %v246 = vld [vmem:[%s1 + $0x17c] sm:$0xf]
  %v247 = vld [vmem:[%s1 + $0x180] sm:$0xf]
  %v248 = vld [vmem:[%s1 + $0x184] sm:$0xf]
  %v249 = vld [vmem:[%s1 + $0x188] sm:$0xf]
  %v250 = vld [vmem:[%s1 + $0x18c] sm:$0xf]
  %v251 = vld [vmem:[%s1 + $0x190] sm:$0xf]
  %v252 = vld [vmem:[%s1 + $0x194] sm:$0xf]
  %v253 = vld [vmem:[%s1 + $0x198] sm:$0xf]
  %v254 = vld [vmem:[%s1 + $0x19c] sm:$0xf]
  %v255 = vld [vmem:[%s1 + $0x1a0] sm:$0xf]
  %v256 = vld [vmem:[%s1 + $0x1a4] sm:$0xf]
  %v257 = vld [vmem:[%s1 + $0x1a8] sm:$0xf]
  %v258 = vld [vmem:[%s1 + $0x1ac] sm:$0xf]
  %v259 = vld [vmem:[%s1 + $0x1b0] sm:$0xf]
  %v260 = vld [vmem:[%s1 + $0x1b4] sm:$0xf]
  %v261 = vld [vmem:[%s1 + $0x1b8] sm:$0xf]
  %v262 = vld [vmem:[%s1 + $0x1bc] sm:$0xf]
  %v263 = vld [vmem:[%s1 + $0x1c0] sm:$0xf]
  %v264 = vld [vmem:[%s1 + $0x1c4] sm:$0xf]
  %v265 = vld [vmem:[%s1 + $0x1c8] sm:$0xf]
  %v266 = vld [vmem:[%s1 + $0x1cc] sm:$0xf]
  %v267 = vld [vmem:[%s1 + $0x1d0] sm:$0xf]
  %v268 = vld [vmem:[%s1 + $0x1d4] sm:$0xf]
  %v269 = vld [vmem:[%s1 + $0x1d8] sm:$0xf]
  %v270 = vld [vmem:[%s1 + $0x1dc] sm:$0xf]
  %v271 = vld [vmem:[%s1 + $0x1e0] sm:$0xf]
  %v272 = vld [vmem:[%s1 + $0x1e4] sm:$0xf]
  %v273 = vld [vmem:[%s1 + $0x1e8] sm:$0xf]
  %v274 = vld [vmem:[%s1 + $0x1ec] sm:$0xf]
  %v275 = vld [vmem:[%s1 + $0x1f0] sm:$0xf]
  %v276 = vld [vmem:[%s1 + $0x1f4] sm:$0xf]
  %v277 = vld [vmem:[%s1 + $0x1f8] sm:$0xf]
  %v278 = vld [vmem:[%s1 + $0x1fc] sm:$0xf]
  %v279 = vunpack.c.l.bf16 %v151
  %v280 = vunpack.c.l.bf16 %v152
  %v281 = vunpack.c.l.bf16 %v153
  %v282 = vunpack.c.l.bf16 %v154
  %v283 = vunpack.c.l.bf16 %v155
  %v284 = vunpack.c.l.bf16 %v156
  %v285 = vunpack.c.l.bf16 %v157
  %v286 = vunpack.c.l.bf16 %v158
  %v287 = vunpack.c.l.bf16 %v159
  %v288 = vunpack.c.l.bf16 %v160
  %v289 = vunpack.c.l.bf16 %v161
  %v290 = vunpack.c.l.bf16 %v162
  %v291 = vunpack.c.l.bf16 %v163
  %v292 = vunpack.c.l.bf16 %v164
  %v293 = vunpack.c.l.bf16 %v165
  %v294 = vunpack.c.l.bf16 %v166
  %v295 = vunpack.c.l.bf16 %v167
  %v296 = vunpack.c.l.bf16 %v168
  %v297 = vunpack.c.l.bf16 %v169
  %v298 = vunpack.c.l.bf16 %v170
  %v299 = vunpack.c.l.bf16 %v171
  %v300 = vunpack.c.l.bf16 %v172
  %v301 = vunpack.c.l.bf16 %v173
  %v302 = vunpack.c.l.bf16 %v174
  %v303 = vunpack.c.l.bf16 %v175
  %v304 = vunpack.c.l.bf16 %v176
  %v305 = vunpack.c.l.bf16 %v177
  %v306 = vunpack.c.l.bf16 %v178
  %v307 = vunpack.c.l.bf16 %v179
  %v308 = vunpack.c.l.bf16 %v180
  %v309 = vunpack.c.l.bf16 %v181
  %v310 = vunpack.c.l.bf16 %v182
  %v311 = vunpack.c.l.bf16 %v183
  %v312 = vunpack.c.l.bf16 %v184
  %v313 = vunpack.c.l.bf16 %v185
  %v314 = vunpack.c.l.bf16 %v186
  %v315 = vunpack.c.l.bf16 %v187
  %v316 = vunpack.c.l.bf16 %v188
  %v317 = vunpack.c.l.bf16 %v189
  %v318 = vunpack.c.l.bf16 %v190
  %v319 = vunpack.c.l.bf16 %v191
  %v320 = vunpack.c.l.bf16 %v192
  %v321 = vunpack.c.l.bf16 %v193
  %v322 = vunpack.c.l.bf16 %v194
  %v323 = vunpack.c.l.bf16 %v195
  %v324 = vunpack.c.l.bf16 %v196
  %v325 = vunpack.c.l.bf16 %v197
  %v326 = vunpack.c.l.bf16 %v198
  %v327 = vunpack.c.l.bf16 %v199
  %v328 = vunpack.c.l.bf16 %v200
  %v329 = vunpack.c.l.bf16 %v201
  %v330 = vunpack.c.l.bf16 %v202
  %v331 = vunpack.c.l.bf16 %v203
  %v332 = vunpack.c.l.bf16 %v204
  %v333 = vunpack.c.l.bf16 %v205
  %v334 = vunpack.c.l.bf16 %v206
  %v335 = vunpack.c.l.bf16 %v207
  %v336 = vunpack.c.l.bf16 %v208
  %v337 = vunpack.c.l.bf16 %v209
  %v338 = vunpack.c.l.bf16 %v210
  %v339 = vunpack.c.l.bf16 %v211
  %v340 = vunpack.c.l.bf16 %v212
  %v341 = vunpack.c.l.bf16 %v213
  %v342 = vunpack.c.l.bf16 %v214
  %v343 = vunpack.c.l.bf16 %v215
  %v344 = vunpack.c.l.bf16 %v216
  %v345 = vunpack.c.l.bf16 %v217
  %v346 = vunpack.c.l.bf16 %v218
  %v347 = vunpack.c.l.bf16 %v219
  %v348 = vunpack.c.l.bf16 %v220
  %v349 = vunpack.c.l.bf16 %v221
  %v350 = vunpack.c.l.bf16 %v222
  %v351 = vunpack.c.l.bf16 %v223
  %v352 = vunpack.c.l.bf16 %v224
  %v353 = vunpack.c.l.bf16 %v225
  %v354 = vunpack.c.l.bf16 %v226
  %v355 = vunpack.c.l.bf16 %v227
  %v356 = vunpack.c.l.bf16 %v228
  %v357 = vunpack.c.l.bf16 %v229
  %v358 = vunpack.c.l.bf16 %v230
  %v359 = vunpack.c.l.bf16 %v231
  %v360 = vunpack.c.l.bf16 %v232
  %v361 = vunpack.c.l.bf16 %v233
  %v362 = vunpack.c.l.bf16 %v234
  %v363 = vunpack.c.l.bf16 %v235
  %v364 = vunpack.c.l.bf16 %v236
  %v365 = vunpack.c.l.bf16 %v237
  %v366 = vunpack.c.l.bf16 %v238
  %v367 = vunpack.c.l.bf16 %v239
  %v368 = vunpack.c.l.bf16 %v240
  %v369 = vunpack.c.l.bf16 %v241
  %v370 = vunpack.c.l.bf16 %v242
  %v371 = vunpack.c.l.bf16 %v243
  %v372 = vunpack.c.l.bf16 %v244
  %v373 = vunpack.c.l.bf16 %v245
  %v374 = vunpack.c.l.bf16 %v246
  %v375 = vunpack.c.l.bf16 %v247
  %v376 = vunpack.c.l.bf16 %v248
  %v377 = vunpack.c.l.bf16 %v249
  %v378 = vunpack.c.l.bf16 %v250
  %v379 = vunpack.c.l.bf16 %v251
  %v380 = vunpack.c.l.bf16 %v252
  %v381 = vunpack.c.l.bf16 %v253
  %v382 = vunpack.c.l.bf16 %v254
  %v383 = vunpack.c.l.bf16 %v255
  %v384 = vunpack.c.l.bf16 %v256
  %v385 = vunpack.c.l.bf16 %v257
  %v386 = vunpack.c.l.bf16 %v258
  %v387 = vunpack.c.l.bf16 %v259
  %v388 = vunpack.c.l.bf16 %v260
  %v389 = vunpack.c.l.bf16 %v261
  %v390 = vunpack.c.l.bf16 %v262
  %v391 = vunpack.c.l.bf16 %v263
  %v392 = vunpack.c.l.bf16 %v264
  %v393 = vunpack.c.l.bf16 %v265
  %v394 = vunpack.c.l.bf16 %v266
  %v395 = vunpack.c.l.bf16 %v267
  %v396 = vunpack.c.l.bf16 %v268
  %v397 = vunpack.c.l.bf16 %v269
  %v398 = vunpack.c.l.bf16 %v270
  %v399 = vunpack.c.l.bf16 %v271
  %v400 = vunpack.c.l.bf16 %v272
  %v401 = vunpack.c.l.bf16 %v273
  %v402 = vunpack.c.l.bf16 %v274
  %v403 = vunpack.c.l.bf16 %v275
  %v404 = vunpack.c.l.bf16 %v276
  %v405 = vunpack.c.l.bf16 %v277
  %v406 = vunpack.c.l.bf16 %v278
  %407 = vmatprep.subr.mxu0 0.0
  %408 = vmatpush1.msra.mxu0 %v279
  %409 = vmatprep.subr.mxu0 0.0
  %410 = vmatpush1.msra.mxu0 %v280
  %411 = vmatprep.subr.mxu0 0.0
  %412 = vmatpush1.msra.mxu0 %v281
  %413 = vmatprep.subr.mxu0 0.0
  %414 = vmatpush1.msra.mxu0 %v282
  %415 = vmatprep.subr.mxu0 0.0
  %416 = vmatpush1.msra.mxu0 %v283
  %417 = vmatprep.subr.mxu0 0.0
  %418 = vmatpush1.msra.mxu0 %v284
  %419 = vmatprep.subr.mxu0 0.0
  %420 = vmatpush1.msra.mxu0 %v285
  %421 = vmatprep.subr.mxu0 0.0
  %422 = vmatpush1.msra.mxu0 %v286
  %423 = vmatprep.subr.mxu0 0.0
  %424 = vmatpush1.msra.mxu0 %v287
  %425 = vmatprep.subr.mxu0 0.0
  %426 = vmatpush1.msra.mxu0 %v288
  %427 = vmatprep.subr.mxu0 0.0
  %428 = vmatpush1.msra.mxu0 %v289
  %429 = vmatprep.subr.mxu0 0.0
  %430 = vmatpush1.msra.mxu0 %v290
  %431 = vmatprep.subr.mxu0 0.0
  %432 = vmatpush1.msra.mxu0 %v291
  %433 = vmatprep.subr.mxu0 0.0
  %434 = vmatpush1.msra.mxu0 %v292
  %435 = vmatprep.subr.mxu0 0.0
  %436 = vmatpush1.msra.mxu0 %v293
  %437 = vmatprep.subr.mxu0 0.0
  %438 = vmatpush1.msra.mxu0 %v294
  %439 = vmatprep.subr.mxu0 0.0
  %440 = vmatpush1.msra.mxu0 %v295
  %441 = vmatprep.subr.mxu0 0.0
  %442 = vmatpush1.msra.mxu0 %v296
  %443 = vmatprep.subr.mxu0 0.0
  %444 = vmatpush1.msra.mxu0 %v297
  %445 = vmatprep.subr.mxu0 0.0
  %446 = vmatpush1.msra.mxu0 %v298
  %447 = vmatprep.subr.mxu0 0.0
  %448 = vmatpush1.msra.mxu0 %v299
  %449 = vmatprep.subr.mxu0 0.0
  %450 = vmatpush1.msra.mxu0 %v300
  %451 = vmatprep.subr.mxu0 0.0
  %452 = vmatpush1.msra.mxu0 %v301
  %453 = vmatprep.subr.mxu0 0.0
  %454 = vmatpush1.msra.mxu0 %v302
  %455 = vmatprep.subr.mxu0 0.0
  %456 = vmatpush1.msra.mxu0 %v303
  %457 = vmatprep.subr.mxu0 0.0
  %458 = vmatpush1.msra.mxu0 %v304
  %459 = vmatprep.subr.mxu0 0.0
  %460 = vmatpush1.msra.mxu0 %v305
  %461 = vmatprep.subr.mxu0 0.0
  %462 = vmatpush1.msra.mxu0 %v306
  %463 = vmatprep.subr.mxu0 0.0
  %464 = vmatpush1.msra.mxu0 %v307
  %465 = vmatprep.subr.mxu0 0.0
  %466 = vmatpush1.msra.mxu0 %v308
  %467 = vmatprep.subr.mxu0 0.0
  %468 = vmatpush1.msra.mxu0 %v309
  %469 = vmatprep.subr.mxu0 0.0
  %470 = vmatpush1.msra.mxu0 %v310
  %471 = vmatprep.mubr.f32.mxu0 %v48
  %472 = vmatmul.mubr.f32.gmra.mrb[0].mxu0 %v47
  %v473 = vpop.f32.mrb[0].mxu0
  %v474 = vadd.f32 0.0, %v473
  %v475 = vpop.f32.mrb[0].mxu0
  %476 = vmatprep.mubr.f32.mxu0 %v56
  %477 = vmatmul.mubr.f32.gmra.mrb[0].mxu0 %v55
  %v478 = vpop.f32.mrb[0].mxu0
  %v479 = vadd.f32 0.0, %v478
  %v480 = vpop.f32.mrb[0].mxu0
  %481 = vmatprep.mubr.f32.mxu0 %v64
  %482 = vmatmul.mubr.f32.gmra.mrb[0].mxu0 %v63
  %v483 = vpop.f32.mrb[0].mxu0
  %v484 = vadd.f32 0.0, %v483
  %v485 = vpop.f32.mrb[0].mxu0
  %486 = vmatprep.mubr.f32.mxu0 %v72
  %487 = vmatmul.mubr.f32.gmra.mrb[0].mxu0 %v71
  %v488 = vpop.f32.mrb[0].mxu0
  %v489 = vadd.f32 0.0, %v488
  %v490 = vpop.f32.mrb[0].mxu0
  %491 = vmatprep.mubr.f32.mxu0 %v80
  %492 = vmatmul.mubr.f32.gmra.mrb[0].mxu0 %v79
  %v493 = vpop.f32.mrb[0].mxu0
  %v494 = vadd.f32 0.0, %v493
  %v495 = vpop.f32.mrb[0].mxu0
  %496 = vmatprep.mubr.f32.mxu0 %v88
  %497 = vmatmul.mubr.f32.gmra.mrb[0].mxu0 %v87
  %v498 = vpop.f32.mrb[0].mxu0
  %v499 = vadd.f32 0.0, %v498
  %v500 = vpop.f32.mrb[0].mxu0
  %501 = vmatprep.mubr.f32.mxu0 %v96
  %502 = vmatmul.mubr.f32.gmra.mrb[0].mxu0 %v95
  %v503 = vpop.f32.mrb[0].mxu0
  %v504 = vadd.f32 0.0, %v503
  %v505 = vpop.f32.mrb[0].mxu0
  %506 = vmatprep.mubr.f32.mxu0 %v104
  %507 = vmatmul.mubr.f32.gmra.mrb[0].mxu0 %v103
  %v508 = vpop.f32.mrb[0].mxu0
  %v509 = vadd.f32 0.0, %v508
  %v510 = vpop.f32.mrb[0].mxu0
  %511 = vmatprep.mubr.f32.mxu0 %v112
  %512 = vmatmul.mubr.f32.gmra.mrb[0].mxu0 %v111
  %v513 = vpop.f32.mrb[0].mxu0
  %v514 = vadd.f32 0.0, %v513
  %v515 = vpop.f32.mrb[0].mxu0
  %516 = vmatprep.mubr.f32.mxu0 %v120
  %517 = vmatmul.mubr.f32.gmra.mrb[0].mxu0 %v119
  %v518 = vpop.f32.mrb[0].mxu0
  %v519 = vadd.f32 0.0, %v518
  %v520 = vpop.f32.mrb[0].mxu0
  %521 = vmatprep.mubr.f32.mxu0 %v128
  %522 = vmatmul.mubr.f32.gmra.mrb[0].mxu0 %v127
  %v523 = vpop.f32.mrb[0].mxu0
  %v524 = vadd.f32 0.0, %v523
  %v525 = vpop.f32.mrb[0].mxu0
  %526 = vmatprep.mubr.f32.mxu0 %v136
  %527 = vmatmul.mubr.f32.gmra.mrb[0].mxu0 %v135
  %v528 = vpop.f32.mrb[0].mxu0
  %v529 = vadd.f32 0.0, %v528
  %v530 = vpop.f32.mrb[0].mxu0
  %531 = vmatprep.mubr.f32.mxu0 %v144
  %532 = vmatmul.mubr.f32.gmra.mrb[0].mxu0 %v143
  %v533 = vpop.f32.mrb[0].mxu0
  %v534 = vadd.f32 0.0, %v533
  %v535 = vpop.f32.mrb[0].mxu0
  %536 = vdwg.mxu0
  %537 = vmatprep.subr.mxu0 0.0
  %538 = vmatpush1.msra.mxu0 %v311
  %539 = vmatprep.subr.mxu0 0.0
  %540 = vmatpush1.msra.mxu0 %v312
  %541 = vmatprep.subr.mxu0 0.0
  %542 = vmatpush1.msra.mxu0 %v313
  %543 = vmatprep.subr.mxu0 0.0
  %544 = vmatpush1.msra.mxu0 %v314
  %545 = vmatprep.subr.mxu0 0.0
  %546 = vmatpush1.msra.mxu0 %v315
  %547 = vmatprep.subr.mxu0 0.0
  %548 = vmatpush1.msra.mxu0 %v316
  %549 = vmatprep.subr.mxu0 0.0
  %550 = vmatpush1.msra.mxu0 %v317
  %551 = vmatprep.subr.mxu0 0.0
  %552 = vmatpush1.msra.mxu0 %v318
  %553 = vmatprep.subr.mxu0 0.0
  %554 = vmatpush1.msra.mxu0 %v319
  %555 = vmatprep.subr.mxu0 0.0
  %556 = vmatpush1.msra.mxu0 %v320
  %557 = vmatprep.subr.mxu0 0.0
  %558 = vmatpush1.msra.mxu0 %v321
  %559 = vmatprep.subr.mxu0 0.0
  %560 = vmatpush1.msra.mxu0 %v322
  %561 = vmatprep.subr.mxu0 0.0
  %562 = vmatpush1.msra.mxu0 %v323
  %563 = vmatprep.subr.mxu0 0.0
  %564 = vmatpush1.msra.mxu0 %v324
  %565 = vmatprep.subr.mxu0 0.0
  %566 = vmatpush1.msra.mxu0 %v325
  %567 = vmatprep.subr.mxu0 0.0
  %568 = vmatpush1.msra.mxu0 %v326
  %569 = vmatprep.subr.mxu0 0.0
  %570 = vmatpush1.msra.mxu0 %v327
  %571 = vmatprep.subr.mxu0 0.0
  %572 = vmatpush1.msra.mxu0 %v328
  %573 = vmatprep.subr.mxu0 0.0
  %574 = vmatpush1.msra.mxu0 %v329
  %575 = vmatprep.subr.mxu0 0.0
  %576 = vmatpush1.msra.mxu0 %v330
  %577 = vmatprep.subr.mxu0 0.0
  %578 = vmatpush1.msra.mxu0 %v331
  %579 = vmatprep.subr.mxu0 0.0
  %580 = vmatpush1.msra.mxu0 %v332
  %581 = vmatprep.subr.mxu0 0.0
  %582 = vmatpush1.msra.mxu0 %v333
  %583 = vmatprep.subr.mxu0 0.0
  %584 = vmatpush1.msra.mxu0 %v334
  %585 = vmatprep.subr.mxu0 0.0
  %586 = vmatpush1.msra.mxu0 %v335
  %587 = vmatprep.subr.mxu0 0.0
  %588 = vmatpush1.msra.mxu0 %v336
  %589 = vmatprep.subr.mxu0 0.0
  %590 = vmatpush1.msra.mxu0 %v337
  %591 = vmatprep.subr.mxu0 0.0
  %592 = vmatpush1.msra.mxu0 %v338
  %593 = vmatprep.subr.mxu0 0.0
  %594 = vmatpush1.msra.mxu0 %v339
  %595 = vmatprep.subr.mxu0 0.0
  %596 = vmatpush1.msra.mxu0 %v340
  %597 = vmatprep.subr.mxu0 0.0
  %598 = vmatpush1.msra.mxu0 %v341
  %599 = vmatprep.subr.mxu0 0.0
  %600 = vmatpush1.msra.mxu0 %v342
  %601 = vmatprep.mubr.f32.mxu0 %v50
  %602 = vmatmul.mubr.f32.gmra.mrb[0].mxu0 %v49
  %v603 = vpop.f32.mrb[0].mxu0
  %v604 = vadd.f32 %v474, %v603
  %v605 = vpop.f32.mrb[0].mxu0
  %606 = vmatprep.mubr.f32.mxu0 %v58
  %607 = vmatmul.mubr.f32.gmra.mrb[0].mxu0 %v57
  %v608 = vpop.f32.mrb[0].mxu0
  %v609 = vadd.f32 %v479, %v608
  %v610 = vpop.f32.mrb[0].mxu0
  %611 = vmatprep.mubr.f32.mxu0 %v66
  %612 = vmatmul.mubr.f32.gmra.mrb[0].mxu0 %v65
  %v613 = vpop.f32.mrb[0].mxu0
  %v614 = vadd.f32 %v484, %v613
  %v615 = vpop.f32.mrb[0].mxu0
  %616 = vmatprep.mubr.f32.mxu0 %v74
  %617 = vmatmul.mubr.f32.gmra.mrb[0].mxu0 %v73
  %v618 = vpop.f32.mrb[0].mxu0
  %v619 = vadd.f32 %v489, %v618
  %v620 = vpop.f32.mrb[0].mxu0
  %621 = vmatprep.mubr.f32.mxu0 %v82
  %622 = vmatmul.mubr.f32.gmra.mrb[0].mxu0 %v81
  %v623 = vpop.f32.mrb[0].mxu0
  %v624 = vadd.f32 %v494, %v623
  %v625 = vpop.f32.mrb[0].mxu0
  %626 = vmatprep.mubr.f32.mxu0 %v90
  %627 = vmatmul.mubr.f32.gmra.mrb[0].mxu0 %v89
  %v628 = vpop.f32.mrb[0].mxu0
  %v629 = vadd.f32 %v499, %v628
  %v630 = vpop.f32.mrb[0].mxu0
  %631 = vmatprep.mubr.f32.mxu0 %v98
  %632 = vmatmul.mubr.f32.gmra.mrb[0].mxu0 %v97
  %v633 = vpop.f32.mrb[0].mxu0
  %v634 = vadd.f32 %v504, %v633
  %v635 = vpop.f32.mrb[0].mxu0
  %636 = vmatprep.mubr.f32.mxu0 %v106
  %637 = vmatmul.mubr.f32.gmra.mrb[0].mxu0 %v105
  %v638 = vpop.f32.mrb[0].mxu0
  %v639 = vadd.f32 %v509, %v638
  %v640 = vpop.f32.mrb[0].mxu0
  %641 = vmatprep.mubr.f32.mxu0 %v114
  %642 = vmatmul.mubr.f32.gmra.mrb[0].mxu0 %v113
  %v643 = vpop.f32.mrb[0].mxu0
  %v644 = vadd.f32 %v514, %v643
  %v645 = vpop.f32.mrb[0].mxu0
  %646 = vmatprep.mubr.f32.mxu0 %v122
  %647 = vmatmul.mubr.f32.gmra.mrb[0].mxu0 %v121
  %v648 = vpop.f32.mrb[0].mxu0
  %v649 = vadd.f32 %v519, %v648
  %v650 = vpop.f32.mrb[0].mxu0
  %651 = vmatprep.mubr.f32.mxu0 %v130
  %652 = vmatmul.mubr.f32.gmra.mrb[0].mxu0 %v129
  %v653 = vpop.f32.mrb[0].mxu0
  %v654 = vadd.f32 %v524, %v653
  %v655 = vpop.f32.mrb[0].mxu0
  %656 = vmatprep.mubr.f32.mxu0 %v138
  %657 = vmatmul.mubr.f32.gmra.mrb[0].mxu0 %v137
  %v658 = vpop.f32.mrb[0].mxu0
  %v659 = vadd.f32 %v529, %v658
  %v660 = vpop.f32.mrb[0].mxu0
  %661 = vmatprep.mubr.f32.mxu0 %v146
  %662 = vmatmul.mubr.f32.gmra.mrb[0].mxu0 %v145
  %v663 = vpop.f32.mrb[0].mxu0
  %v664 = vadd.f32 %v534, %v663
  %v665 = vpop.f32.mrb[0].mxu0
  %666 = vdwg.mxu0
  %667 = vmatprep.subr.mxu0 0.0
  %668 = vmatpush1.msra.mxu0 %v343
  %669 = vmatprep.subr.mxu0 0.0
  %670 = vmatpush1.msra.mxu0 %v344
  %671 = vmatprep.subr.mxu0 0.0
  %672 = vmatpush1.msra.mxu0 %v345
  %673 = vmatprep.subr.mxu0 0.0
  %674 = vmatpush1.msra.mxu0 %v346
  %675 = vmatprep.subr.mxu0 0.0
  %676 = vmatpush1.msra.mxu0 %v347
  %677 = vmatprep.subr.mxu0 0.0
  %678 = vmatpush1.msra.mxu0 %v348
  %679 = vmatprep.subr.mxu0 0.0
  %680 = vmatpush1.msra.mxu0 %v349
  %681 = vmatprep.subr.mxu0 0.0
  %682 = vmatpush1.msra.mxu0 %v350
  %683 = vmatprep.subr.mxu0 0.0
  %684 = vmatpush1.msra.mxu0 %v351
  %685 = vmatprep.subr.mxu0 0.0
  %686 = vmatpush1.msra.mxu0 %v352
  %687 = vmatprep.subr.mxu0 0.0
  %688 = vmatpush1.msra.mxu0 %v353
  %689 = vmatprep.subr.mxu0 0.0
  %690 = vmatpush1.msra.mxu0 %v354
  %691 = vmatprep.subr.mxu0 0.0
  %692 = vmatpush1.msra.mxu0 %v355
  %693 = vmatprep.subr.mxu0 0.0
  %694 = vmatpush1.msra.mxu0 %v356
  %695 = vmatprep.subr.mxu0 0.0
  %696 = vmatpush1.msra.mxu0 %v357
  %697 = vmatprep.subr.mxu0 0.0
  %698 = vmatpush1.msra.mxu0 %v358
  %699 = vmatprep.subr.mxu0 0.0
  %700 = vmatpush1.msra.mxu0 %v359
  %701 = vmatprep.subr.mxu0 0.0
  %702 = vmatpush1.msra.mxu0 %v360
  %703 = vmatprep.subr.mxu0 0.0
  %704 = vmatpush1.msra.mxu0 %v361
  %705 = vmatprep.subr.mxu0 0.0
  %706 = vmatpush1.msra.mxu0 %v362
  %707 = vmatprep.subr.mxu0 0.0
  %708 = vmatpush1.msra.mxu0 %v363
  %709 = vmatprep.subr.mxu0 0.0
  %710 = vmatpush1.msra.mxu0 %v364
  %711 = vmatprep.subr.mxu0 0.0
  %712 = vmatpush1.msra.mxu0 %v365
  %713 = vmatprep.subr.mxu0 0.0
  %714 = vmatpush1.msra.mxu0 %v366
  %715 = vmatprep.subr.mxu0 0.0
  %716 = vmatpush1.msra.mxu0 %v367
  %717 = vmatprep.subr.mxu0 0.0
  %718 = vmatpush1.msra.mxu0 %v368
  %719 = vmatprep.subr.mxu0 0.0
  %720 = vmatpush1.msra.mxu0 %v369
  %721 = vmatprep.subr.mxu0 0.0
  %722 = vmatpush1.msra.mxu0 %v370
  %723 = vmatprep.subr.mxu0 0.0
  %724 = vmatpush1.msra.mxu0 %v371
  %725 = vmatprep.subr.mxu0 0.0
  %726 = vmatpush1.msra.mxu0 %v372
  %727 = vmatprep.subr.mxu0 0.0
  %728 = vmatpush1.msra.mxu0 %v373
  %729 = vmatprep.subr.mxu0 0.0
  %730 = vmatpush1.msra.mxu0 %v374
  %731 = vmatprep.mubr.f32.mxu0 %v52
  %732 = vmatmul.mubr.f32.gmra.mrb[0].mxu0 %v51
  %v733 = vpop.f32.mrb[0].mxu0
  %v734 = vadd.f32 %v604, %v733
  %v735 = vpop.f32.mrb[0].mxu0
  %736 = vmatprep.mubr.f32.mxu0 %v60
  %737 = vmatmul.mubr.f32.gmra.mrb[0].mxu0 %v59
  %v738 = vpop.f32.mrb[0].mxu0
  %v739 = vadd.f32 %v609, %v738
  %v740 = vpop.f32.mrb[0].mxu0
  %741 = vmatprep.mubr.f32.mxu0 %v68
  %742 = vmatmul.mubr.f32.gmra.mrb[0].mxu0 %v67
  %v743 = vpop.f32.mrb[0].mxu0
  %v744 = vadd.f32 %v614, %v743
  %v745 = vpop.f32.mrb[0].mxu0
  %746 = vmatprep.mubr.f32.mxu0 %v76
  %747 = vmatmul.mubr.f32.gmra.mrb[0].mxu0 %v75
  %v748 = vpop.f32.mrb[0].mxu0
  %v749 = vadd.f32 %v619, %v748
  %v750 = vpop.f32.mrb[0].mxu0
  %751 = vmatprep.mubr.f32.mxu0 %v84
  %752 = vmatmul.mubr.f32.gmra.mrb[0].mxu0 %v83
  %v753 = vpop.f32.mrb[0].mxu0
  %v754 = vadd.f32 %v624, %v753
  %v755 = vpop.f32.mrb[0].mxu0
  %756 = vmatprep.mubr.f32.mxu0 %v92
  %757 = vmatmul.mubr.f32.gmra.mrb[0].mxu0 %v91
  %v758 = vpop.f32.mrb[0].mxu0
  %v759 = vadd.f32 %v629, %v758
  %v760 = vpop.f32.mrb[0].mxu0
  %761 = vmatprep.mubr.f32.mxu0 %v100
  %762 = vmatmul.mubr.f32.gmra.mrb[0].mxu0 %v99
  %v763 = vpop.f32.mrb[0].mxu0
  %v764 = vadd.f32 %v634, %v763
  %v765 = vpop.f32.mrb[0].mxu0
  %766 = vmatprep.mubr.f32.mxu0 %v108
  %767 = vmatmul.mubr.f32.gmra.mrb[0].mxu0 %v107
  %v768 = vpop.f32.mrb[0].mxu0
  %v769 = vadd.f32 %v639, %v768
  %v770 = vpop.f32.mrb[0].mxu0
  %771 = vmatprep.mubr.f32.mxu0 %v116
  %772 = vmatmul.mubr.f32.gmra.mrb[0].mxu0 %v115
  %v773 = vpop.f32.mrb[0].mxu0
  %v774 = vadd.f32 %v644, %v773
  %v775 = vpop.f32.mrb[0].mxu0
  %776 = vmatprep.mubr.f32.mxu0 %v124
  %777 = vmatmul.mubr.f32.gmra.mrb[0].mxu0 %v123
  %v778 = vpop.f32.mrb[0].mxu0
  %v779 = vadd.f32 %v649, %v778
  %v780 = vpop.f32.mrb[0].mxu0
  %781 = vmatprep.mubr.f32.mxu0 %v132
  %782 = vmatmul.mubr.f32.gmra.mrb[0].mxu0 %v131
  %v783 = vpop.f32.mrb[0].mxu0
  %v784 = vadd.f32 %v654, %v783
  %v785 = vpop.f32.mrb[0].mxu0
  %786 = vmatprep.mubr.f32.mxu0 %v140
  %787 = vmatmul.mubr.f32.gmra.mrb[0].mxu0 %v139
  %v788 = vpop.f32.mrb[0].mxu0
  %v789 = vadd.f32 %v659, %v788
  %v790 = vpop.f32.mrb[0].mxu0
  %791 = vmatprep.mubr.f32.mxu0 %v148
  %792 = vmatmul.mubr.f32.gmra.mrb[0].mxu0 %v147
  %v793 = vpop.f32.mrb[0].mxu0
  %v794 = vadd.f32 %v664, %v793
  %v795 = vpop.f32.mrb[0].mxu0
  %796 = vdwg.mxu0
  %797 = vmatprep.subr.mxu0 0.0
  %798 = vmatpush1.msra.mxu0 %v375
  %799 = vmatprep.subr.mxu0 0.0
  %800 = vmatpush1.msra.mxu0 %v376
  %801 = vmatprep.subr.mxu0 0.0
  %802 = vmatpush1.msra.mxu0 %v377
  %803 = vmatprep.subr.mxu0 0.0
  %804 = vmatpush1.msra.mxu0 %v378
  %805 = vmatprep.subr.mxu0 0.0
  %806 = vmatpush1.msra.mxu0 %v379
  %807 = vmatprep.subr.mxu0 0.0
  %808 = vmatpush1.msra.mxu0 %v380
  %809 = vmatprep.subr.mxu0 0.0
  %810 = vmatpush1.msra.mxu0 %v381
  %811 = vmatprep.subr.mxu0 0.0
  %812 = vmatpush1.msra.mxu0 %v382
  %813 = vmatprep.subr.mxu0 0.0
  %814 = vmatpush1.msra.mxu0 %v383
  %815 = vmatprep.subr.mxu0 0.0
  %816 = vmatpush1.msra.mxu0 %v384
  %817 = vmatprep.subr.mxu0 0.0
  %818 = vmatpush1.msra.mxu0 %v385
  %819 = vmatprep.subr.mxu0 0.0
  %820 = vmatpush1.msra.mxu0 %v386
  %821 = vmatprep.subr.mxu0 0.0
  %822 = vmatpush1.msra.mxu0 %v387
  %823 = vmatprep.subr.mxu0 0.0
  %824 = vmatpush1.msra.mxu0 %v388
  %825 = vmatprep.subr.mxu0 0.0
  %826 = vmatpush1.msra.mxu0 %v389
  %827 = vmatprep.subr.mxu0 0.0
  %828 = vmatpush1.msra.mxu0 %v390
  %829 = vmatprep.subr.mxu0 0.0
  %830 = vmatpush1.msra.mxu0 %v391
  %831 = vmatprep.subr.mxu0 0.0
  %832 = vmatpush1.msra.mxu0 %v392
  %833 = vmatprep.subr.mxu0 0.0
  %834 = vmatpush1.msra.mxu0 %v393
  %835 = vmatprep.subr.mxu0 0.0
  %836 = vmatpush1.msra.mxu0 %v394
  %837 = vmatprep.subr.mxu0 0.0
  %838 = vmatpush1.msra.mxu0 %v395
  %839 = vmatprep.subr.mxu0 0.0
  %840 = vmatpush1.msra.mxu0 %v396
  %841 = vmatprep.subr.mxu0 0.0
  %842 = vmatpush1.msra.mxu0 %v397
  %843 = vmatprep.subr.mxu0 0.0
  %844 = vmatpush1.msra.mxu0 %v398
  %845 = vmatprep.subr.mxu0 0.0
  %846 = vmatpush1.msra.mxu0 %v399
  %847 = vmatprep.subr.mxu0 0.0
  %848 = vmatpush1.msra.mxu0 %v400
  %849 = vmatprep.subr.mxu0 0.0
  %850 = vmatpush1.msra.mxu0 %v401
  %851 = vmatprep.subr.mxu0 0.0
  %852 = vmatpush1.msra.mxu0 %v402
  %853 = vmatprep.subr.mxu0 0.0
  %854 = vmatpush1.msra.mxu0 %v403
  %855 = vmatprep.subr.mxu0 0.0
  %856 = vmatpush1.msra.mxu0 %v404
  %857 = vmatprep.subr.mxu0 0.0
  %858 = vmatpush1.msra.mxu0 %v405
  %859 = vmatprep.subr.mxu0 0.0
  %860 = vmatpush1.msra.mxu0 %v406
  %861 = vmatprep.mubr.f32.mxu0 %v54
  %862 = vmatmul.mubr.f32.gmra.mrb[0].mxu0 %v53
  %v863 = vpop.f32.mrb[0].mxu0
  %v864 = vadd.f32 %v734, %v863
  %v865 = vpop.f32.mrb[0].mxu0
  %866 = vmatprep.mubr.f32.mxu0 %v62
  %867 = vmatmul.mubr.f32.gmra.mrb[0].mxu0 %v61
  %v868 = vpop.f32.mrb[0].mxu0
  %v869 = vadd.f32 %v739, %v868
  %v870 = vpop.f32.mrb[0].mxu0
  %871 = vmatprep.mubr.f32.mxu0 %v70
  %872 = vmatmul.mubr.f32.gmra.mrb[0].mxu0 %v69
  %v873 = vpop.f32.mrb[0].mxu0
  %v874 = vadd.f32 %v744, %v873
  %v875 = vpop.f32.mrb[0].mxu0
  %876 = vmatprep.mubr.f32.mxu0 %v78
  %877 = vmatmul.mubr.f32.gmra.mrb[0].mxu0 %v77
  %v878 = vpop.f32.mrb[0].mxu0
  %v879 = vadd.f32 %v749, %v878
  %v880 = vpop.f32.mrb[0].mxu0
  %881 = vmatprep.mubr.f32.mxu0 %v86
  %882 = vmatmul.mubr.f32.gmra.mrb[0].mxu0 %v85
  %v883 = vpop.f32.mrb[0].mxu0
  %v884 = vadd.f32 %v754, %v883
  %v885 = vpop.f32.mrb[0].mxu0
  %886 = vmatprep.mubr.f32.mxu0 %v94
  %887 = vmatmul.mubr.f32.gmra.mrb[0].mxu0 %v93
  %v888 = vpop.f32.mrb[0].mxu0
  %v889 = vadd.f32 %v759, %v888
  %v890 = vpop.f32.mrb[0].mxu0
  %891 = vmatprep.mubr.f32.mxu0 %v102
  %892 = vmatmul.mubr.f32.gmra.mrb[0].mxu0 %v101
  %v893 = vpop.f32.mrb[0].mxu0
  %v894 = vadd.f32 %v764, %v893
  %v895 = vpop.f32.mrb[0].mxu0
  %896 = vmatprep.mubr.f32.mxu0 %v110
  %897 = vmatmul.mubr.f32.gmra.mrb[0].mxu0 %v109
  %v898 = vpop.f32.mrb[0].mxu0
  %v899 = vadd.f32 %v769, %v898
  %v900 = vpop.f32.mrb[0].mxu0
  %901 = vmatprep.mubr.f32.mxu0 %v118
  %902 = vmatmul.mubr.f32.gmra.mrb[0].mxu0 %v117
  %v903 = vpop.f32.mrb[0].mxu0
  %v904 = vadd.f32 %v774, %v903
  %v905 = vpop.f32.mrb[0].mxu0
  %906 = vmatprep.mubr.f32.mxu0 %v126
  %907 = vmatmul.mubr.f32.gmra.mrb[0].mxu0 %v125
  %v908 = vpop.f32.mrb[0].mxu0
  %v909 = vadd.f32 %v779, %v908
  %v910 = vpop.f32.mrb[0].mxu0
  %911 = vmatprep.mubr.f32.mxu0 %v134
  %912 = vmatmul.mubr.f32.gmra.mrb[0].mxu0 %v133
  %v913 = vpop.f32.mrb[0].mxu0
  %v914 = vadd.f32 %v784, %v913
  %v915 = vpop.f32.mrb[0].mxu0
  %916 = vmatprep.mubr.f32.mxu0 %v142
  %917 = vmatmul.mubr.f32.gmra.mrb[0].mxu0 %v141
  %v918 = vpop.f32.mrb[0].mxu0
  %v919 = vadd.f32 %v789, %v918
  %v920 = vpop.f32.mrb[0].mxu0
  %921 = vmatprep.mubr.f32.mxu0 %v150
  %922 = vmatmul.mubr.f32.gmra.mrb[0].mxu0 %v149
  %v923 = vpop.f32.mrb[0].mxu0
  %v924 = vadd.f32 %v794, %v923
  %v925 = vpop.f32.mrb[0].mxu0
  %926 = vdwg.mxu0
  %v927 = vadd.f32 %v34, %v864
  %v928 = vadd.f32 %v35, %v869
  %v929 = vadd.f32 %v36, %v874
  %v930 = vadd.f32 %v37, %v879
  %v931 = vadd.f32 %v38, %v884
  %v932 = vadd.f32 %v39, %v889
  %v933 = vadd.f32 %v40, %v894
  %v934 = vadd.f32 %v41, %v899
  %v935 = vadd.f32 %v42, %v904
  %v936 = vadd.f32 %v43, %v909
  %v937 = vadd.f32 %v44, %v914
  %v938 = vadd.f32 %v45, %v919
  %v939 = vadd.f32 %v46, %v924
  %940 = vst [vmem:[%s4] sm:$0xff] %v927
  %941 = vst [vmem:[%s4 + $0x8] sm:$0xff] %v928
  %942 = vst [vmem:[%s4 + $0x10] sm:$0xff] %v929
  %943 = vst [vmem:[%s4 + $0x18] sm:$0xff] %v930
  %944 = vst [vmem:[%s4 + $0x20] sm:$0xff] %v931
  %945 = vst [vmem:[%s4 + $0x28] sm:$0xff] %v932
  %946 = vst [vmem:[%s4 + $0x30] sm:$0xff] %v933
  %947 = vst [vmem:[%s4 + $0x38] sm:$0xff] %v934
  %948 = vst [vmem:[%s4 + $0x40] sm:$0xff] %v935
  %949 = vst [vmem:[%s4 + $0x48] sm:$0xff] %v936
  %950 = vst [vmem:[%s4 + $0x50] sm:$0xff] %v937
  %951 = vst [vmem:[%s4 + $0x58] sm:$0xff] %v938
  %952 = vst [vmem:[%s4 + $0x60] sm:$0xff] %v939
  // Predicated region
  $region22: #{discriminator_forward.4} parent=0 // pred_check
    %p953 = pneg %p17
  $region23: #{discriminator_forward.4} parent=0 // pred_check_branch
    %955 = sbr.rel (%p953) target = $region25
  $region24: #{discriminator_forward.4} parent=0 // pred_region
    %v956 = vld [vmem:[%s4] sm:$0xff]
    %v957 = vld [vmem:[%s4 + $0x8] sm:$0xff]
    %v958 = vld [vmem:[%s4 + $0x10] sm:$0xff]
    %v959 = vld [vmem:[%s4 + $0x18] sm:$0xff]
    %v960 = vld [vmem:[%s4 + $0x20] sm:$0xff]
    %v961 = vld [vmem:[%s4 + $0x28] sm:$0xff]
    %v962 = vld [vmem:[%s4 + $0x30] sm:$0xff]
    %v963 = vld [vmem:[%s4 + $0x38] sm:$0xff]
    %v964 = vld [vmem:[%s4 + $0x40] sm:$0xff]
    %v965 = vld [vmem:[%s4 + $0x48] sm:$0xff]
    %v966 = vld [vmem:[%s4 + $0x50] sm:$0xff]
    %v967 = vld [vmem:[%s4 + $0x58] sm:$0xff]
    %v968 = vld [vmem:[%s4 + $0x60] sm:$0xff]
    %v969 = vadd.f32 %v956, %v957
    %v970 = vadd.f32 %v969, %v958
    %v971 = vadd.f32 %v970, %v959
    %v972 = vadd.f32 %v971, %v960
    %v973 = vadd.f32 %v972, %v961
    %v974 = vadd.f32 %v973, %v962
    %v975 = vadd.f32 %v974, %v963
    %v976 = vadd.f32 %v975, %v964
    %v977 = vadd.f32 %v976, %v965
    %v978 = vadd.f32 %v977, %v966
    %v979 = vadd.f32 %v978, %v967
    %v980 = vadd.f32 %v979, %v968
    %v981 = vrot.slane %v980, 4
    %v982 = vadd.f32 %v980, %v981
    %v983 = vrot.slane %v982, 2
    %v984 = vadd.f32 %v982, %v983
    %v985 = vrot.slane %v984, 1
    %v986 = vadd.f32 %v984, %v985
    %v987 = vmul.f32 %v986, 0.010204081
    %v988 = vmul.f32 %v956, %v956
    %v989 = vmul.f32 %v957, %v957
    %v990 = vmul.f32 %v958, %v958
    %v991 = vmul.f32 %v959, %v959
    %v992 = vmul.f32 %v960, %v960
    %v993 = vmul.f32 %v961, %v961
    %v994 = vmul.f32 %v962, %v962
    %v995 = vmul.f32 %v963, %v963
    %v996 = vmul.f32 %v964, %v964
    %v997 = vmul.f32 %v965, %v965
    %v998 = vmul.f32 %v966, %v966
    %v999 = vmul.f32 %v967, %v967
    %v1000 = vmul.f32 %v968, %v968
    %v1001 = vadd.f32 %v988, %v989
    %v1002 = vadd.f32 %v1001, %v990
    %v1003 = vadd.f32 %v1002, %v991
    %v1004 = vadd.f32 %v1003, %v992
    %v1005 = vadd.f32 %v1004, %v993
    %v1006 = vadd.f32 %v1005, %v994
    %v1007 = vadd.f32 %v1006, %v995
    %v1008 = vadd.f32 %v1007, %v996
    %v1009 = vadd.f32 %v1008, %v997
    %v1010 = vadd.f32 %v1009, %v998
    %v1011 = vadd.f32 %v1010, %v999
    %v1012 = vadd.f32 %v1011, %v1000
    %v1013 = vrot.slane %v1012, 4
    %v1014 = vadd.f32 %v1012, %v1013
    %v1015 = vrot.slane %v1014, 2
    %v1016 = vadd.f32 %v1014, %v1015
    %v1017 = vrot.slane %v1016, 1
    %v1018 = vadd.f32 %v1016, %v1017
    %v1019 = vmul.f32 %v1018, 0.010204081
    %v1020 = vmul.f32 %v987, %v987
    %v1021 = vsub.f32 %v1019, %v1020
    %v1022 = vmax.f32 %v1021, 0.0
    %v1023 = vadd.f32 %v1022, 1e-05
    %v1024 = vrsqrt.pop %v1023
    %v1025 = vld [vmem:[%s2] sm:$0x1]
    %v1026 = vmul.f32 %v1025, %v1024
    %v1027 = vld [vmem:[%s3] sm:$0x1]
    %v1028 = vmul.f32 %v987, %v1026
    %v1029 = vsub.f32 %v1027, %v1028
    %v1031 = vlaneseq
    %v1032 = vshrl.u32 %v1031, 7
    %v1033 = vsub.s32 0, %v1032
    %v1034 = vrot.slane %v1026, %v1033
    %v1036 = vmul.f32 %v956, %v1034
    %v1037 = vmul.f32 %v957, %v1034
    %v1038 = vmul.f32 %v958, %v1034
    %v1039 = vmul.f32 %v959, %v1034
    %v1040 = vmul.f32 %v960, %v1034
    %v1041 = vmul.f32 %v961, %v1034
    %v1042 = vmul.f32 %v962, %v1034
    %v1043 = vmul.f32 %v963, %v1034
    %v1044 = vmul.f32 %v964, %v1034
    %v1045 = vmul.f32 %v965, %v1034
    %v1046 = vmul.f32 %v966, %v1034
    %v1047 = vmul.f32 %v967, %v1034
    %v1048 = vmul.f32 %v968, %v1034
    %v1050 = vlaneseq
    %v1051 = vshrl.u32 %v1050, 7
    %v1052 = vsub.s32 0, %v1051
    %v1053 = vrot.slane %v1029, %v1052
    %v1055 = vadd.f32 %v1036, %v1053
    %v1056 = vadd.f32 %v1037, %v1053
    %v1057 = vadd.f32 %v1038, %v1053
    %v1058 = vadd.f32 %v1039, %v1053
    %v1059 = vadd.f32 %v1040, %v1053
    %v1060 = vadd.f32 %v1041, %v1053
    %v1061 = vadd.f32 %v1042, %v1053
    %v1062 = vadd.f32 %v1043, %v1053
    %v1063 = vadd.f32 %v1044, %v1053
    %v1064 = vadd.f32 %v1045, %v1053
    %v1065 = vadd.f32 %v1046, %v1053
    %v1066 = vadd.f32 %v1047, %v1053
    %v1067 = vadd.f32 %v1048, %v1053
    %v1068 = vmul.f32 %v1055, 0.1
    %v1069 = vmul.f32 %v1056, 0.1
    %v1070 = vmul.f32 %v1057, 0.1
    %v1071 = vmul.f32 %v1058, 0.1
    %v1072 = vmul.f32 %v1059, 0.1
    %v1073 = vmul.f32 %v1060, 0.1
    %v1074 = vmul.f32 %v1061, 0.1
    %v1075 = vmul.f32 %v1062, 0.1
    %v1076 = vmul.f32 %v1063, 0.1
    %v1077 = vmul.f32 %v1064, 0.1
    %v1078 = vmul.f32 %v1065, 0.1
    %v1079 = vmul.f32 %v1066, 0.1
    %v1080 = vmul.f32 %v1067, 0.1
    %v1081 = vmax.f32 %v1055, %v1068
    %v1082 = vmax.f32 %v1056, %v1069
    %v1083 = vmax.f32 %v1057, %v1070
    %v1084 = vmax.f32 %v1058, %v1071
    %v1085 = vmax.f32 %v1059, %v1072
    %v1086 = vmax.f32 %v1060, %v1073
    %v1087 = vmax.f32 %v1061, %v1074
    %v1088 = vmax.f32 %v1062, %v1075
    %v1089 = vmax.f32 %v1063, %v1076
    %v1090 = vmax.f32 %v1064, %v1077
    %v1091 = vmax.f32 %v1065, %v1078
    %v1092 = vmax.f32 %v1066, %v1079
    %v1093 = vmax.f32 %v1067, %v1080
    %1094 = vst [vmem:[%s4] sm:$0xff] %v1081
    %1095 = vst [vmem:[%s4 + $0x8] sm:$0xff] %v1082
    %1096 = vst [vmem:[%s4 + $0x10] sm:$0xff] %v1083
    %1097 = vst [vmem:[%s4 + $0x18] sm:$0xff] %v1084
    %1098 = vst [vmem:[%s4 + $0x20] sm:$0xff] %v1085
    %1099 = vst [vmem:[%s4 + $0x28] sm:$0xff] %v1086
    %1100 = vst [vmem:[%s4 + $0x30] sm:$0xff] %v1087
    %1101 = vst [vmem:[%s4 + $0x38] sm:$0xff] %v1088
    %1102 = vst [vmem:[%s4 + $0x40] sm:$0xff] %v1089
    %1103 = vst [vmem:[%s4 + $0x48] sm:$0xff] %v1090
    %1104 = vst [vmem:[%s4 + $0x50] sm:$0xff] %v1091
    %1105 = vst [vmem:[%s4 + $0x58] sm:$0xff] %v1092
    %1106 = vst [vmem:[%s4 + $0x60] sm:$0xff] %v1093
  $region25: #{discriminator_forward.4} parent=0 // pred_fallthru
    _
  // Predicated region
  $region26: #{discriminator_forward.4} parent=0 // pred_check
    _
  $region27: #{discriminator_forward.4} parent=0 // pred_check_branch
    %1108 = sbr.rel (0) target = $region29
  $region28: #{discriminator_forward.4} parent=0 // pred_region
    _
  $region29: #{discriminator_forward.4} parent=0 // pred_fallthru
    _
  // Predicated region
  $region30: #{discriminator_forward.4} parent=0 // pred_check
    _
  $region31: #{discriminator_forward.4} parent=0 // pred_check_branch
    %1110 = sbr.rel (0) target = $region33
  $region32: #{discriminator_forward.4} parent=0 // pred_region
    _
  $region33: #{discriminator_forward.4} parent=0 // pred_fallthru
    _

// kernel: discriminator_forward.5
$region0: #{discriminator_forward.5}
  #allocation0 [shape = 'u32[]', space=smem, size = 0x4, offset = 0x4, fixed_abs, tag = 'smem constant byte address 0x4 - core index']
  #allocation1 [shape = 'u32[144,128]{1,0:T(1,128)}', space=vmem, size = 0x12000, scoped, tag = 'internal scratch']
  %s0 = inlined_call_operand.vmem [shape: f32[8,6272], index: 0, kind: input, shape index: {}]
  %s1 = inlined_call_operand.vmem [shape: bf16[6272,1024], index: 1, kind: input, shape index: {}]
  %s2 = inlined_call_operand.vmem [shape: f32[1,1024], index: 2, kind: input, shape index: {}]
  %s3 = inlined_call_operand.vmem [shape: f32[1,1024], index: 3, kind: input, shape index: {}]
  %s4 = inlined_call_operand.vmem [shape: f32[8,1024], index: 4, kind: output, shape index: {}]
  %s5 = sld [smem:[#allocation0]]
  $region57: #{discriminator_forward.5} parent=0
    _
  %s7 = ssub.s32 1, %s5
  %s8 = scalar_select 0, %s7, %s5
  loop: start=0, step=1, limit=9
  $region2: #{discriminator_forward.5} parent=0 // loop_pre_header
    _
  $region3: #{discriminator_forward.5} parent=0 // loop_header
    %s10 = sphi 0, %s14
    %p11 = scmp.ge.s32.totalorder %s10, 9
    %s20 = sphi 0, %s22
    %s23 = sphi 0, %s20
    %s24 = sphi 0, %s23
    %s40 = sphi 0, %s24
    %s46 = sphi 0, %s48
    %s49 = sphi 0, %s46
    %s50 = sphi 0, %s49
    %s66 = sphi 0, %s50
    %s70 = sphi 0, %s70
    %s72 = sphi 0, %s70
    %s73 = sphi 0, %s72
    %s87 = sphi 0, %s73
    %s91 = sphi 0, %s91
    %s93 = sphi 0, %s91
    %s94 = sphi 0, %s93
    %s108 = sphi 0, %s94
    %s112 = sphi 0, %s112
    %s114 = sphi 0, %s112
    %s115 = sphi 0, %s114
    %s129 = sphi 0, %s115
  $region4: #{discriminator_forward.5} parent=0 // loop_header_branch
    %13 = sbr.rel (%p11) target = $region8
  $region5: #{discriminator_forward.5} parent=0 // loop_body
    %s15 = ssub.s32 %s10, 1
    %s16 = ssub.s32 %s10, 2
    %s17 = sadd.s32 %s10, 1
    %s18 = ssub.s32 %s10, %s17
    %p19 = scmp.eq.s32.totalorder %s18, 0
    %s21 = sadd.s32 %s20, 1
    %s22 = scalar_select %p19, %s20, %s21
    %p25 = pneg %p19
    %p26 = scmp.eq.s32.totalorder %s10, 6
    %p27 = por %p25, %p26
    %p28 = scmp.ne.s32.totalorder %s20, %s23
    %p29 = scmp.eq.s32.totalorder %s10, 0
    %p30 = por %p28, %p29
    %p31 = scmp.ne.s32.totalorder %s20, %s23
    %p32 = scmp.eq.s32.totalorder %s15, 6
    %p33 = por %p31, %p32
    %p34 = scmp.ne.s32.totalorder %s23, %s24
    %p35 = scmp.eq.s32.totalorder %s15, 0
    %p36 = por %p34, %p35
    %p37 = scmp.ne.s32.totalorder %s23, %s24
    %p38 = scmp.eq.s32.totalorder %s16, 6
    %p39 = por %p37, %p38
    %p41 = scmp.ne.s32.totalorder %s24, %s40
    %p42 = scmp.eq.s32.totalorder %s16, 0
    %p43 = por %p41, %p42
    %s44 = ssub.s32 %s10, %s17
    %p45 = scmp.eq.s32.totalorder %s44, 0
    %s47 = sadd.s32 %s46, 1
    %s48 = scalar_select %p45, %s46, %s47
    %p51 = pneg %p45
    %p52 = scmp.eq.s32.totalorder %s10, 6
    %p53 = por %p51, %p52
    %p54 = scmp.ne.s32.totalorder %s46, %s49
    %p55 = scmp.eq.s32.totalorder %s10, 0
    %p56 = por %p54, %p55
    %p57 = scmp.ne.s32.totalorder %s46, %s49
    %p58 = scmp.eq.s32.totalorder %s15, 6
    %p59 = por %p57, %p58
    %p60 = scmp.ne.s32.totalorder %s49, %s50
    %p61 = scmp.eq.s32.totalorder %s15, 0
    %p62 = por %p60, %p61
    %p63 = scmp.ne.s32.totalorder %s49, %s50
    %p64 = scmp.eq.s32.totalorder %s16, 6
    %p65 = por %p63, %p64
    %p67 = scmp.ne.s32.totalorder %s50, %s66
    %p68 = scmp.eq.s32.totalorder %s16, 0
    %p69 = por %p67, %p68
    %s71 = sadd.s32 %s70, 1
    %p74 = scmp.eq.s32.totalorder %s10, 6
    %p75 = scmp.ne.s32.totalorder %s70, %s72
    %p76 = scmp.eq.s32.totalorder %s10, 0
    %p77 = por %p75, %p76
    %p78 = scmp.ne.s32.totalorder %s70, %s72
    %p79 = scmp.eq.s32.totalorder %s15, 6
    %p80 = por %p78, %p79
    %p81 = scmp.ne.s32.totalorder %s72, %s73
    %p82 = scmp.eq.s32.totalorder %s15, 0
    %p83 = por %p81, %p82
    %p84 = scmp.ne.s32.totalorder %s72, %s73
    %p85 = scmp.eq.s32.totalorder %s16, 6
    %p86 = por %p84, %p85
    %p88 = scmp.ne.s32.totalorder %s73, %s87
    %p89 = scmp.eq.s32.totalorder %s16, 0
    %p90 = por %p88, %p89
    %s92 = sadd.s32 %s91, 1
    %p95 = scmp.eq.s32.totalorder %s10, 6
    %p96 = scmp.ne.s32.totalorder %s91, %s93
    %p97 = scmp.eq.s32.totalorder %s10, 0
    %p98 = por %p96, %p97
    %p99 = scmp.ne.s32.totalorder %s91, %s93
    %p100 = scmp.eq.s32.totalorder %s15, 6
    %p101 = por %p99, %p100
    %p102 = scmp.ne.s32.totalorder %s93, %s94
    %p103 = scmp.eq.s32.totalorder %s15, 0
    %p104 = por %p102, %p103
    %p105 = scmp.ne.s32.totalorder %s93, %s94
    %p106 = scmp.eq.s32.totalorder %s16, 6
    %p107 = por %p105, %p106
    %p109 = scmp.ne.s32.totalorder %s94, %s108
    %p110 = scmp.eq.s32.totalorder %s16, 0
    %p111 = por %p109, %p110
    %s113 = sadd.s32 %s112, 1
    %p116 = scmp.eq.s32.totalorder %s10, 6
    %p117 = scmp.ne.s32.totalorder %s112, %s114
    %p118 = scmp.eq.s32.totalorder %s10, 0
    %p119 = por %p117, %p118
    %p120 = scmp.ne.s32.totalorder %s112, %s114
    %p121 = scmp.eq.s32.totalorder %s15, 6
    %p122 = por %p120, %p121
    %p123 = scmp.ne.s32.totalorder %s114, %s115
    %p124 = scmp.eq.s32.totalorder %s15, 0
    %p125 = por %p123, %p124
    %p126 = scmp.ne.s32.totalorder %s114, %s115
    %p127 = scmp.eq.s32.totalorder %s16, 6
    %p128 = por %p126, %p127
    %p130 = scmp.ne.s32.totalorder %s115, %s129
    %p131 = scmp.eq.s32.totalorder %s16, 0
    %p132 = por %p130, %p131
    %p133 = scmp.le.s32.totalorder 1, %s10
    %p134 = scmp.lt.s32.totalorder %s10, 8
    %p135 = pnand %p133, %p134
    %p136 = pneg %p135
    // Predicated region
    $region9: #{discriminator_forward.5} parent=5 // pred_check
      _
    $region10: #{discriminator_forward.5} parent=5 // pred_check_branch
      %138 = sbr.rel (%p135) target = $region12
    $region11: #{discriminator_forward.5} parent=5 // pred_region
      %s139 = ssub.s32 %s10, 1
      // Predicated region
      $region13: #{discriminator_forward.5} parent=11 // pred_check
        %p140 = pneg %p83
      $region14: #{discriminator_forward.5} parent=11 // pred_check_branch
        %142 = sbr.rel (%p140) target = $region16
      $region15: #{discriminator_forward.5} parent=11 // pred_region
        _
      $region16: #{discriminator_forward.5} parent=11 // pred_fallthru
        _
      // Predicated region
      $region17: #{discriminator_forward.5} parent=11 // pred_check
        %p143 = pneg %p104
      $region18: #{discriminator_forward.5} parent=11 // pred_check_branch
        %145 = sbr.rel (%p143) target = $region20
      $region19: #{discriminator_forward.5} parent=11 // pred_region
        _
      $region20: #{discriminator_forward.5} parent=11 // pred_fallthru
        _
    $region12: #{discriminator_forward.5} parent=5 // pred_fallthru
      _
    %p146 = scmp.lt.s32.totalorder %s10, 7
    // Predicated region
    $region21: #{discriminator_forward.5} parent=5 // pred_check
      %p147 = pneg %p146
    $region22: #{discriminator_forward.5} parent=5 // pred_check_branch
      %149 = sbr.rel (%p147) target = $region24
    $region23: #{discriminator_forward.5} parent=5 // pred_region
      // Predicated region
      $region25: #{discriminator_forward.5} parent=23 // pred_check
        %p150 = pneg %p30
      $region26: #{discriminator_forward.5} parent=23 // pred_check_branch
        %152 = sbr.rel (%p150) target = $region28
      $region27: #{discriminator_forward.5} parent=23 // pred_region
        %s153 = smul.u32 7, %s10
        %p154 = scmp.lt.s32.totalorder %s153, 48
        %s155 = scalar_select %p154, %s153, 48
        %s156 = smul.addr %s155, 8
        %s157 = scalar_lea.vmem %s0, %s156
        %s158 = smul.u32 7, %s10
      $region28: #{discriminator_forward.5} parent=23 // pred_fallthru
        _
      // Predicated region
      $region29: #{discriminator_forward.5} parent=23 // pred_check
        %p159 = pneg %p56
      $region30: #{discriminator_forward.5} parent=23 // pred_check_branch
        %161 = sbr.rel (%p159) target = $region32
      $region31: #{discriminator_forward.5} parent=23 // pred_region
        %s162 = smul.u32 112, %s10
        %p163 = scmp.lt.s32.totalorder %s162, 783
        %s164 = scalar_select %p163, %s162, 783
        %s165 = smul.addr %s164, 8
        %s166 = smul.addr %s165, 4
        %s167 = scalar_lea.vmem %s1, %s166
        %s168 = smul.u32 112, %s10
      $region32: #{discriminator_forward.5} parent=23 // pred_fallthru
        _
    $region24: #{discriminator_forward.5} parent=5 // pred_fallthru
      _
    %p169 = scmp.le.s32.totalorder 1, %s10
    %p170 = scmp.lt.s32.totalorder %s10, 8
    %p171 = pnand %p169, %p170
    %p172 = pneg %p171
    // Predicated region
    $region33: #{discriminator_forward.5} parent=5 // pred_check
      _
    $region34: #{discriminator_forward.5} parent=5 // pred_check_branch
      %174 = sbr.rel (%p171) target = $region36
    $region35: #{discriminator_forward.5} parent=5 // pred_region
      %s175 = ssub.s32 %s10, 1
      %s176 = smul.u32 7, %s15
      %p177 = scmp.lt.s32.totalorder %s176, 48
      %s178 = scalar_select %p177, %s176, 48
      %s179 = smul.addr %s178, 8
      %s180 = scalar_lea.vmem %s0, %s179
      %p181 = pneg %p36
      %p182 = pneg %p33
      %s183 = smul.u32 112, %s15
      %p184 = scmp.lt.s32.totalorder %s183, 783
      %s185 = scalar_select %p184, %s183, 783
      %s186 = smul.addr %s185, 8
      %s187 = smul.addr %s186, 4
      %s188 = scalar_lea.vmem %s1, %s187
      %p189 = pneg %p62
      %p190 = pneg %p59
      %p191 = pneg %p83
      %p192 = pneg %p80
      %p193 = pneg %p104
      %p194 = pneg %p101
      %p195 = pneg %p125
      %p196 = pneg %p122
      %s197 = smul.u32 7, %s15
      %p198 = scmp.lt.s32.totalorder %s197, 48
      %s199 = scalar_select %p198, %s197, 48
      %s200 = smul.addr %s199, 8
      %s201 = scalar_lea.vmem %s0, %s200
      %s202 = smul.u32 7, %s15
      %s203 = smul.u32 112, %s15
      %p204 = scmp.lt.s32.totalorder %s203, 783
      %s205 = scalar_select %p204, %s203, 783
      %s206 = smul.addr %s205, 8
      %s207 = smul.addr %s206, 4
      %s208 = scalar_lea.vmem %s1, %s207
      %s209 = smul.u32 112, %s15
      %p210 = scmp.eq.s32.totalorder %s15, 0
      // Predicated region
      $region37: #{discriminator_forward.5} parent=35 // pred_check
        %p211 = pneg %p210
      $region38: #{discriminator_forward.5} parent=35 // pred_check_branch
        %213 = sbr.rel (%p211) target = $region40
      $region39: #{discriminator_forward.5} parent=35 // pred_region
        %214 = vst [vmem:[%s4] sm:$0xff] 0.0
        %215 = vst [vmem:[%s4 + $0x8] sm:$0xff] 0.0
        %216 = vst [vmem:[%s4 + $0x10] sm:$0xff] 0.0
        %217 = vst [vmem:[%s4 + $0x18] sm:$0xff] 0.0
        %218 = vst [vmem:[%s4 + $0x20] sm:$0xff] 0.0
        %219 = vst [vmem:[%s4 + $0x28] sm:$0xff] 0.0
        %220 = vst [vmem:[%s4 + $0x30] sm:$0xff] 0.0
        %221 = vst [vmem:[%s4 + $0x38] sm:$0xff] 0.0
      $region40: #{discriminator_forward.5} parent=35 // pred_fallthru
        _
      %v222 = vld [vmem:[%s4] sm:$0xff]
      %v223 = vld [vmem:[%s4 + $0x8] sm:$0xff]
      %v224 = vld [vmem:[%s4 + $0x10] sm:$0xff]
      %v225 = vld [vmem:[%s4 + $0x18] sm:$0xff]
      %v226 = vld [vmem:[%s4 + $0x20] sm:$0xff]
      %v227 = vld [vmem:[%s4 + $0x28] sm:$0xff]
      %v228 = vld [vmem:[%s4 + $0x30] sm:$0xff]
      %v229 = vld [vmem:[%s4 + $0x38] sm:$0xff]
      %v230 = vld [vmem:[%s201] sm:$0xff]
      %v231 = vld [vmem:[%s201 + $0x8] sm:$0xff]
      %v232 = vld [vmem:[%s201 + $0x10] sm:$0xff]
      %v233 = vld [vmem:[%s201 + $0x18] sm:$0xff]
      %v234 = vld [vmem:[%s201 + $0x20] sm:$0xff]
      %v235 = vld [vmem:[%s201 + $0x28] sm:$0xff]
      %v236 = vld [vmem:[%s201 + $0x30] sm:$0xff]
      %v237 = vld [vmem:[%s208] sm:$0xff]
      %v238 = vld [vmem:[%s208 + $0x8] sm:$0xff]
      %v239 = vld [vmem:[%s208 + $0x10] sm:$0xff]
      %v240 = vld [vmem:[%s208 + $0x18] sm:$0xff]
      %v241 = vld [vmem:[%s208 + $0x20] sm:$0xff]
      %v242 = vld [vmem:[%s208 + $0x28] sm:$0xff]
      %v243 = vld [vmem:[%s208 + $0x30] sm:$0xff]
      %v244 = vld [vmem:[%s208 + $0x38] sm:$0xff]
      %v245 = vld [vmem:[%s208 + $0x40] sm:$0xff]
      %v246 = vld [vmem:[%s208 + $0x48] sm:$0xff]
      %v247 = vld [vmem:[%s208 + $0x50] sm:$0xff]
      %v248 = vld [vmem:[%s208 + $0x58] sm:$0xff]
      %v249 = vld [vmem:[%s208 + $0x60] sm:$0xff]
      %v250 = vld [vmem:[%s208 + $0x68] sm:$0xff]
      %v251 = vld [vmem:[%s208 + $0x70] sm:$0xff]
      %v252 = vld [vmem:[%s208 + $0x78] sm:$0xff]
      %v253 = vld [vmem:[%s208 + $0x80] sm:$0xff]
      %v254 = vld [vmem:[%s208 + $0x88] sm:$0xff]
      %v255 = vld [vmem:[%s208 + $0x90] sm:$0xff]
      %v256 = vld [vmem:[%s208 + $0x98] sm:$0xff]
      %v257 = vld [vmem:[%s208 + $0xa0] sm:$0xff]
      %v258 = vld [vmem:[%s208 + $0xa8] sm:$0xff]
      %v259 = vld [vmem:[%s208 + $0xb0] sm:$0xff]
      %v260 = vld [vmem:[%s208 + $0xb8] sm:$0xff]
      %v261 = vld [vmem:[%s208 + $0xc0] sm:$0xff]
      %v262 = vld [vmem:[%s208 + $0xc8] sm:$0xff]
      %v263 = vld [vmem:[%s208 + $0xd0] sm:$0xff]
      %v264 = vld [vmem:[%s208 + $0xd8] sm:$0xff]
      %v265 = vld [vmem:[%s208 + $0xe0] sm:$0xff]
      %v266 = vld [vmem:[%s208 + $0xe8] sm:$0xff]
      %v267 = vld [vmem:[%s208 + $0xf0] sm:$0xff]
      %v268 = vld [vmem:[%s208 + $0xf8] sm:$0xff]
      %v269 = vld [vmem:[%s208 + $0x100] sm:$0xff]
      %v270 = vld [vmem:[%s208 + $0x108] sm:$0xff]
      %v271 = vld [vmem:[%s208 + $0x110] sm:$0xff]
      %v272 = vld [vmem:[%s208 + $0x118] sm:$0xff]
      %v273 = vld [vmem:[%s208 + $0x120] sm:$0xff]
      %v274 = vld [vmem:[%s208 + $0x128] sm:$0xff]
      %v275 = vld [vmem:[%s208 + $0x130] sm:$0xff]
      %v276 = vld [vmem:[%s208 + $0x138] sm:$0xff]
      %v277 = vld [vmem:[%s208 + $0x140] sm:$0xff]
      %v278 = vld [vmem:[%s208 + $0x148] sm:$0xff]
      %v279 = vld [vmem:[%s208 + $0x150] sm:$0xff]
      %v280 = vld [vmem:[%s208 + $0x158] sm:$0xff]
      %v281 = vld [vmem:[%s208 + $0x160] sm:$0xff]
      %v282 = vld [vmem:[%s208 + $0x168] sm:$0xff]
      %v283 = vld [vmem:[%s208 + $0x170] sm:$0xff]
      %v284 = vld [vmem:[%s208 + $0x178] sm:$0xff]
      %v285 = vld [vmem:[%s208 + $0x180] sm:$0xff]
      %v286 = vld [vmem:[%s208 + $0x188] sm:$0xff]
      %v287 = vld [vmem:[%s208 + $0x190] sm:$0xff]
      %v288 = vld [vmem:[%s208 + $0x198] sm:$0xff]
      %v289 = vld [vmem:[%s208 + $0x1a0] sm:$0xff]
      %v290 = vld [vmem:[%s208 + $0x1a8] sm:$0xff]
      %v291 = vld [vmem:[%s208 + $0x1b0] sm:$0xff]
      %v292 = vld [vmem:[%s208 + $0x1b8] sm:$0xff]
      %v293 = vld [vmem:[%s208 + $0x1c0] sm:$0xff]
      %v294 = vld [vmem:[%s208 + $0x1c8] sm:$0xff]
      %v295 = vld [vmem:[%s208 + $0x1d0] sm:$0xff]
      %v296 = vld [vmem:[%s208 + $0x1d8] sm:$0xff]
      %v297 = vld [vmem:[%s208 + $0x1e0] sm:$0xff]
      %v298 = vld [vmem:[%s208 + $0x1e8] sm:$0xff]
      %v299 = vld [vmem:[%s208 + $0x1f0] sm:$0xff]
      %v300 = vld [vmem:[%s208 + $0x1f8] sm:$0xff]
      %v301 = vld [vmem:[%s208 + $0x200] sm:$0xff]
      %v302 = vld [vmem:[%s208 + $0x208] sm:$0xff]
      %v303 = vld [vmem:[%s208 + $0x210] sm:$0xff]
      %v304 = vld [vmem:[%s208 + $0x218] sm:$0xff]
      %v305 = vld [vmem:[%s208 + $0x220] sm:$0xff]
      %v306 = vld [vmem:[%s208 + $0x228] sm:$0xff]
      %v307 = vld [vmem:[%s208 + $0x230] sm:$0xff]
      %v308 = vld [vmem:[%s208 + $0x238] sm:$0xff]
      %v309 = vld [vmem:[%s208 + $0x240] sm:$0xff]
      %v310 = vld [vmem:[%s208 + $0x248] sm:$0xff]
      %v311 = vld [vmem:[%s208 + $0x250] sm:$0xff]
      %v312 = vld [vmem:[%s208 + $0x258] sm:$0xff]
      %v313 = vld [vmem:[%s208 + $0x260] sm:$0xff]
      %v314 = vld [vmem:[%s208 + $0x268] sm:$0xff]
      %v315 = vld [vmem:[%s208 + $0x270] sm:$0xff]
      %v316 = vld [vmem:[%s208 + $0x278] sm:$0xff]
      %v317 = vld [vmem:[%s208 + $0x280] sm:$0xff]
      %v318 = vld [vmem:[%s208 + $0x288] sm:$0xff]
      %v319 = vld [vmem:[%s208 + $0x290] sm:$0xff]
      %v320 = vld [vmem:[%s208 + $0x298] sm:$0xff]
      %v321 = vld [vmem:[%s208 + $0x2a0] sm:$0xff]
      %v322 = vld [vmem:[%s208 + $0x2a8] sm:$0xff]
      %v323 = vld [vmem:[%s208 + $0x2b0] sm:$0xff]
      %v324 = vld [vmem:[%s208 + $0x2b8] sm:$0xff]
      %v325 = vld [vmem:[%s208 + $0x2c0] sm:$0xff]
      %v326 = vld [vmem:[%s208 + $0x2c8] sm:$0xff]
      %v327 = vld [vmem:[%s208 + $0x2d0] sm:$0xff]
      %v328 = vld [vmem:[%s208 + $0x2d8] sm:$0xff]
      %v329 = vld [vmem:[%s208 + $0x2e0] sm:$0xff]
      %v330 = vld [vmem:[%s208 + $0x2e8] sm:$0xff]
      %v331 = vld [vmem:[%s208 + $0x2f0] sm:$0xff]
      %v332 = vld [vmem:[%s208 + $0x2f8] sm:$0xff]
      %v333 = vld [vmem:[%s208 + $0x300] sm:$0xff]
      %v334 = vld [vmem:[%s208 + $0x308] sm:$0xff]
      %v335 = vld [vmem:[%s208 + $0x310] sm:$0xff]
      %v336 = vld [vmem:[%s208 + $0x318] sm:$0xff]
      %v337 = vld [vmem:[%s208 + $0x320] sm:$0xff]
      %v338 = vld [vmem:[%s208 + $0x328] sm:$0xff]
      %v339 = vld [vmem:[%s208 + $0x330] sm:$0xff]
      %v340 = vld [vmem:[%s208 + $0x338] sm:$0xff]
      %v341 = vld [vmem:[%s208 + $0x340] sm:$0xff]
      %v342 = vld [vmem:[%s208 + $0x348] sm:$0xff]
      %v343 = vld [vmem:[%s208 + $0x350] sm:$0xff]
      %v344 = vld [vmem:[%s208 + $0x358] sm:$0xff]
      %v345 = vld [vmem:[%s208 + $0x360] sm:$0xff]
      %v346 = vld [vmem:[%s208 + $0x368] sm:$0xff]
      %v347 = vld [vmem:[%s208 + $0x370] sm:$0xff]
      %v348 = vld [vmem:[%s208 + $0x378] sm:$0xff]
      %v349 = vld [vmem:[%s208 + $0x380] sm:$0xff]
      %v350 = vld [vmem:[%s208 + $0x388] sm:$0xff]
      %v351 = vld [vmem:[%s208 + $0x390] sm:$0xff]
      %v352 = vld [vmem:[%s208 + $0x398] sm:$0xff]
      %v353 = vld [vmem:[%s208 + $0x3a0] sm:$0xff]
      %v354 = vld [vmem:[%s208 + $0x3a8] sm:$0xff]
      %v355 = vld [vmem:[%s208 + $0x3b0] sm:$0xff]
      %v356 = vld [vmem:[%s208 + $0x3b8] sm:$0xff]
      %v357 = vld [vmem:[%s208 + $0x3c0] sm:$0xff]
      %v358 = vld [vmem:[%s208 + $0x3c8] sm:$0xff]
      %v359 = vld [vmem:[%s208 + $0x3d0] sm:$0xff]
      %v360 = vld [vmem:[%s208 + $0x3d8] sm:$0xff]
      %v361 = vld [vmem:[%s208 + $0x3e0] sm:$0xff]
      %v362 = vld [vmem:[%s208 + $0x3e8] sm:$0xff]
      %v363 = vld [vmem:[%s208 + $0x3f0] sm:$0xff]
      %v364 = vld [vmem:[%s208 + $0x3f8] sm:$0xff]
      %v365 = vld [vmem:[%s208 + $0x400] sm:$0xff]
      %v366 = vld [vmem:[%s208 + $0x408] sm:$0xff]
      %v367 = vld [vmem:[%s208 + $0x410] sm:$0xff]
      %v368 = vld [vmem:[%s208 + $0x418] sm:$0xff]
      %v369 = vld [vmem:[%s208 + $0x420] sm:$0xff]
      %v370 = vld [vmem:[%s208 + $0x428] sm:$0xff]
      %v371 = vld [vmem:[%s208 + $0x430] sm:$0xff]
      %v372 = vld [vmem:[%s208 + $0x438] sm:$0xff]
      %v373 = vld [vmem:[%s208 + $0x440] sm:$0xff]
      %v374 = vld [vmem:[%s208 + $0x448] sm:$0xff]
      %v375 = vld [vmem:[%s208 + $0x450] sm:$0xff]
      %v376 = vld [vmem:[%s208 + $0x458] sm:$0xff]
      %v377 = vld [vmem:[%s208 + $0x460] sm:$0xff]
      %v378 = vld [vmem:[%s208 + $0x468] sm:$0xff]
      %v379 = vld [vmem:[%s208 + $0x470] sm:$0xff]
      %v380 = vld [vmem:[%s208 + $0x478] sm:$0xff]
      %v381 = vld [vmem:[%s208 + $0x480] sm:$0xff]
      %v382 = vld [vmem:[%s208 + $0x488] sm:$0xff]
      %v383 = vld [vmem:[%s208 + $0x490] sm:$0xff]
      %v384 = vld [vmem:[%s208 + $0x498] sm:$0xff]
      %v385 = vld [vmem:[%s208 + $0x4a0] sm:$0xff]
      %v386 = vld [vmem:[%s208 + $0x4a8] sm:$0xff]
      %v387 = vld [vmem:[%s208 + $0x4b0] sm:$0xff]
      %v388 = vld [vmem:[%s208 + $0x4b8] sm:$0xff]
      %v389 = vld [vmem:[%s208 + $0x4c0] sm:$0xff]
      %v390 = vld [vmem:[%s208 + $0x4c8] sm:$0xff]
      %v391 = vld [vmem:[%s208 + $0x4d0] sm:$0xff]
      %v392 = vld [vmem:[%s208 + $0x4d8] sm:$0xff]
      %v393 = vld [vmem:[%s208 + $0x4e0] sm:$0xff]
      %v394 = vld [vmem:[%s208 + $0x4e8] sm:$0xff]
      %v395 = vld [vmem:[%s208 + $0x4f0] sm:$0xff]
      %v396 = vld [vmem:[%s208 + $0x4f8] sm:$0xff]
      %v397 = vld [vmem:[%s208 + $0x500] sm:$0xff]
      %v398 = vld [vmem:[%s208 + $0x508] sm:$0xff]
      %v399 = vld [vmem:[%s208 + $0x510] sm:$0xff]
      %v400 = vld [vmem:[%s208 + $0x518] sm:$0xff]
      %v401 = vld [vmem:[%s208 + $0x520] sm:$0xff]
      %v402 = vld [vmem:[%s208 + $0x528] sm:$0xff]
      %v403 = vld [vmem:[%s208 + $0x530] sm:$0xff]
      %v404 = vld [vmem:[%s208 + $0x538] sm:$0xff]
      %v405 = vld [vmem:[%s208 + $0x540] sm:$0xff]
      %v406 = vld [vmem:[%s208 + $0x548] sm:$0xff]
      %v407 = vld [vmem:[%s208 + $0x550] sm:$0xff]
      %v408 = vld [vmem:[%s208 + $0x558] sm:$0xff]
      %v409 = vld [vmem:[%s208 + $0x560] sm:$0xff]
      %v410 = vld [vmem:[%s208 + $0x568] sm:$0xff]
      %v411 = vld [vmem:[%s208 + $0x570] sm:$0xff]
      %v412 = vld [vmem:[%s208 + $0x578] sm:$0xff]
      %v413 = vld [vmem:[%s208 + $0x580] sm:$0xff]
      %v414 = vld [vmem:[%s208 + $0x588] sm:$0xff]
      %v415 = vld [vmem:[%s208 + $0x590] sm:$0xff]
      %v416 = vld [vmem:[%s208 + $0x598] sm:$0xff]
      %v417 = vld [vmem:[%s208 + $0x5a0] sm:$0xff]
      %v418 = vld [vmem:[%s208 + $0x5a8] sm:$0xff]
      %v419 = vld [vmem:[%s208 + $0x5b0] sm:$0xff]
      %v420 = vld [vmem:[%s208 + $0x5b8] sm:$0xff]
      %v421 = vld [vmem:[%s208 + $0x5c0] sm:$0xff]
      %v422 = vld [vmem:[%s208 + $0x5c8] sm:$0xff]
      %v423 = vld [vmem:[%s208 + $0x5d0] sm:$0xff]
      %v424 = vld [vmem:[%s208 + $0x5d8] sm:$0xff]
      %v425 = vld [vmem:[%s208 + $0x5e0] sm:$0xff]
      %v426 = vld [vmem:[%s208 + $0x5e8] sm:$0xff]
      %v427 = vld [vmem:[%s208 + $0x5f0] sm:$0xff]
      %v428 = vld [vmem:[%s208 + $0x5f8] sm:$0xff]
      %v429 = vld [vmem:[%s208 + $0x600] sm:$0xff]
      %v430 = vld [vmem:[%s208 + $0x608] sm:$0xff]
      %v431 = vld [vmem:[%s208 + $0x610] sm:$0xff]
      %v432 = vld [vmem:[%s208 + $0x618] sm:$0xff]
      %v433 = vld [vmem:[%s208 + $0x620] sm:$0xff]
      %v434 = vld [vmem:[%s208 + $0x628] sm:$0xff]
      %v435 = vld [vmem:[%s208 + $0x630] sm:$0xff]
      %v436 = vld [vmem:[%s208 + $0x638] sm:$0xff]
      %v437 = vld [vmem:[%s208 + $0x640] sm:$0xff]
      %v438 = vld [vmem:[%s208 + $0x648] sm:$0xff]
      %v439 = vld [vmem:[%s208 + $0x650] sm:$0xff]
      %v440 = vld [vmem:[%s208 + $0x658] sm:$0xff]
      %v441 = vld [vmem:[%s208 + $0x660] sm:$0xff]
      %v442 = vld [vmem:[%s208 + $0x668] sm:$0xff]
      %v443 = vld [vmem:[%s208 + $0x670] sm:$0xff]
      %v444 = vld [vmem:[%s208 + $0x678] sm:$0xff]
      %v445 = vld [vmem:[%s208 + $0x680] sm:$0xff]
      %v446 = vld [vmem:[%s208 + $0x688] sm:$0xff]
      %v447 = vld [vmem:[%s208 + $0x690] sm:$0xff]
      %v448 = vld [vmem:[%s208 + $0x698] sm:$0xff]
      %v449 = vld [vmem:[%s208 + $0x6a0] sm:$0xff]
      %v450 = vld [vmem:[%s208 + $0x6a8] sm:$0xff]
      %v451 = vld [vmem:[%s208 + $0x6b0] sm:$0xff]
      %v452 = vld [vmem:[%s208 + $0x6b8] sm:$0xff]
      %v453 = vld [vmem:[%s208 + $0x6c0] sm:$0xff]
      %v454 = vld [vmem:[%s208 + $0x6c8] sm:$0xff]
      %v455 = vld [vmem:[%s208 + $0x6d0] sm:$0xff]
      %v456 = vld [vmem:[%s208 + $0x6d8] sm:$0xff]
      %v457 = vld [vmem:[%s208 + $0x6e0] sm:$0xff]
      %v458 = vld [vmem:[%s208 + $0x6e8] sm:$0xff]
      %v459 = vld [vmem:[%s208 + $0x6f0] sm:$0xff]
      %v460 = vld [vmem:[%s208 + $0x6f8] sm:$0xff]
      %v461 = vld [vmem:[%s208 + $0x700] sm:$0xff]
      %v462 = vld [vmem:[%s208 + $0x708] sm:$0xff]
      %v463 = vld [vmem:[%s208 + $0x710] sm:$0xff]
      %v464 = vld [vmem:[%s208 + $0x718] sm:$0xff]
      %v465 = vld [vmem:[%s208 + $0x720] sm:$0xff]
      %v466 = vld [vmem:[%s208 + $0x728] sm:$0xff]
      %v467 = vld [vmem:[%s208 + $0x730] sm:$0xff]
      %v468 = vld [vmem:[%s208 + $0x738] sm:$0xff]
      %v469 = vld [vmem:[%s208 + $0x740] sm:$0xff]
      %v470 = vld [vmem:[%s208 + $0x748] sm:$0xff]
      %v471 = vld [vmem:[%s208 + $0x750] sm:$0xff]
      %v472 = vld [vmem:[%s208 + $0x758] sm:$0xff]
      %v473 = vld [vmem:[%s208 + $0x760] sm:$0xff]
      %v474 = vld [vmem:[%s208 + $0x768] sm:$0xff]
      %v475 = vld [vmem:[%s208 + $0x770] sm:$0xff]
      %v476 = vld [vmem:[%s208 + $0x778] sm:$0xff]
      %v477 = vld [vmem:[%s208 + $0x780] sm:$0xff]
      %v478 = vld [vmem:[%s208 + $0x788] sm:$0xff]
      %v479 = vld [vmem:[%s208 + $0x790] sm:$0xff]
      %v480 = vld [vmem:[%s208 + $0x798] sm:$0xff]
      %v481 = vld [vmem:[%s208 + $0x7a0] sm:$0xff]
      %v482 = vld [vmem:[%s208 + $0x7a8] sm:$0xff]
      %v483 = vld [vmem:[%s208 + $0x7b0] sm:$0xff]
      %v484 = vld [vmem:[%s208 + $0x7b8] sm:$0xff]
      %v485 = vld [vmem:[%s208 + $0x7c0] sm:$0xff]
      %v486 = vld [vmem:[%s208 + $0x7c8] sm:$0xff]
      %v487 = vld [vmem:[%s208 + $0x7d0] sm:$0xff]
      %v488 = vld [vmem:[%s208 + $0x7d8] sm:$0xff]
      %v489 = vld [vmem:[%s208 + $0x7e0] sm:$0xff]
      %v490 = vld [vmem:[%s208 + $0x7e8] sm:$0xff]
      %v491 = vld [vmem:[%s208 + $0x7f0] sm:$0xff]
      %v492 = vld [vmem:[%s208 + $0x7f8] sm:$0xff]
      %v493 = vld [vmem:[%s208 + $0x800] sm:$0xff]
      %v494 = vld [vmem:[%s208 + $0x808] sm:$0xff]
      %v495 = vld [vmem:[%s208 + $0x810] sm:$0xff]
      %v496 = vld [vmem:[%s208 + $0x818] sm:$0xff]
      %v497 = vld [vmem:[%s208 + $0x820] sm:$0xff]
      %v498 = vld [vmem:[%s208 + $0x828] sm:$0xff]
      %v499 = vld [vmem:[%s208 + $0x830] sm:$0xff]
      %v500 = vld [vmem:[%s208 + $0x838] sm:$0xff]
      %v501 = vld [vmem:[%s208 + $0x840] sm:$0xff]
      %v502 = vld [vmem:[%s208 + $0x848] sm:$0xff]
      %v503 = vld [vmem:[%s208 + $0x850] sm:$0xff]
      %v504 = vld [vmem:[%s208 + $0x858] sm:$0xff]
      %v505 = vld [vmem:[%s208 + $0x860] sm:$0xff]
      %v506 = vld [vmem:[%s208 + $0x868] sm:$0xff]
      %v507 = vld [vmem:[%s208 + $0x870] sm:$0xff]
      %v508 = vld [vmem:[%s208 + $0x878] sm:$0xff]
      %v509 = vld [vmem:[%s208 + $0x880] sm:$0xff]
      %v510 = vld [vmem:[%s208 + $0x888] sm:$0xff]
      %v511 = vld [vmem:[%s208 + $0x890] sm:$0xff]
      %v512 = vld [vmem:[%s208 + $0x898] sm:$0xff]
      %v513 = vld [vmem:[%s208 + $0x8a0] sm:$0xff]
      %v514 = vld [vmem:[%s208 + $0x8a8] sm:$0xff]
      %v515 = vld [vmem:[%s208 + $0x8b0] sm:$0xff]
      %v516 = vld [vmem:[%s208 + $0x8b8] sm:$0xff]
      %v517 = vld [vmem:[%s208 + $0x8c0] sm:$0xff]
      %v518 = vld [vmem:[%s208 + $0x8c8] sm:$0xff]
      %v519 = vld [vmem:[%s208 + $0x8d0] sm:$0xff]
      %v520 = vld [vmem:[%s208 + $0x8d8] sm:$0xff]
      %v521 = vld [vmem:[%s208 + $0x8e0] sm:$0xff]
      %v522 = vld [vmem:[%s208 + $0x8e8] sm:$0xff]
      %v523 = vld [vmem:[%s208 + $0x8f0] sm:$0xff]
      %v524 = vld [vmem:[%s208 + $0x8f8] sm:$0xff]
      %v525 = vld [vmem:[%s208 + $0x900] sm:$0xff]
      %v526 = vld [vmem:[%s208 + $0x908] sm:$0xff]
      %v527 = vld [vmem:[%s208 + $0x910] sm:$0xff]
      %v528 = vld [vmem:[%s208 + $0x918] sm:$0xff]
      %v529 = vld [vmem:[%s208 + $0x920] sm:$0xff]
      %v530 = vld [vmem:[%s208 + $0x928] sm:$0xff]
      %v531 = vld [vmem:[%s208 + $0x930] sm:$0xff]
      %v532 = vld [vmem:[%s208 + $0x938] sm:$0xff]
      %v533 = vld [vmem:[%s208 + $0x940] sm:$0xff]
      %v534 = vld [vmem:[%s208 + $0x948] sm:$0xff]
      %v535 = vld [vmem:[%s208 + $0x950] sm:$0xff]
      %v536 = vld [vmem:[%s208 + $0x958] sm:$0xff]
      %v537 = vld [vmem:[%s208 + $0x960] sm:$0xff]
      %v538 = vld [vmem:[%s208 + $0x968] sm:$0xff]
      %v539 = vld [vmem:[%s208 + $0x970] sm:$0xff]
      %v540 = vld [vmem:[%s208 + $0x978] sm:$0xff]
      %v541 = vld [vmem:[%s208 + $0x980] sm:$0xff]
      %v542 = vld [vmem:[%s208 + $0x988] sm:$0xff]
      %v543 = vld [vmem:[%s208 + $0x990] sm:$0xff]
      %v544 = vld [vmem:[%s208 + $0x998] sm:$0xff]
      %v545 = vld [vmem:[%s208 + $0x9a0] sm:$0xff]
      %v546 = vld [vmem:[%s208 + $0x9a8] sm:$0xff]
      %v547 = vld [vmem:[%s208 + $0x9b0] sm:$0xff]
      %v548 = vld [vmem:[%s208 + $0x9b8] sm:$0xff]
      %v549 = vld [vmem:[%s208 + $0x9c0] sm:$0xff]
      %v550 = vld [vmem:[%s208 + $0x9c8] sm:$0xff]
      %v551 = vld [vmem:[%s208 + $0x9d0] sm:$0xff]
      %v552 = vld [vmem:[%s208 + $0x9d8] sm:$0xff]
      %v553 = vld [vmem:[%s208 + $0x9e0] sm:$0xff]
      %v554 = vld [vmem:[%s208 + $0x9e8] sm:$0xff]
      %v555 = vld [vmem:[%s208 + $0x9f0] sm:$0xff]
      %v556 = vld [vmem:[%s208 + $0x9f8] sm:$0xff]
      %v557 = vld [vmem:[%s208 + $0xa00] sm:$0xff]
      %v558 = vld [vmem:[%s208 + $0xa08] sm:$0xff]
      %v559 = vld [vmem:[%s208 + $0xa10] sm:$0xff]
      %v560 = vld [vmem:[%s208 + $0xa18] sm:$0xff]
      %v561 = vld [vmem:[%s208 + $0xa20] sm:$0xff]
      %v562 = vld [vmem:[%s208 + $0xa28] sm:$0xff]
      %v563 = vld [vmem:[%s208 + $0xa30] sm:$0xff]
      %v564 = vld [vmem:[%s208 + $0xa38] sm:$0xff]
      %v565 = vld [vmem:[%s208 + $0xa40] sm:$0xff]
      %v566 = vld [vmem:[%s208 + $0xa48] sm:$0xff]
      %v567 = vld [vmem:[%s208 + $0xa50] sm:$0xff]
      %v568 = vld [vmem:[%s208 + $0xa58] sm:$0xff]
      %v569 = vld [vmem:[%s208 + $0xa60] sm:$0xff]
      %v570 = vld [vmem:[%s208 + $0xa68] sm:$0xff]
      %v571 = vld [vmem:[%s208 + $0xa70] sm:$0xff]
      %v572 = vld [vmem:[%s208 + $0xa78] sm:$0xff]
      %v573 = vld [vmem:[%s208 + $0xa80] sm:$0xff]
      %v574 = vld [vmem:[%s208 + $0xa88] sm:$0xff]
      %v575 = vld [vmem:[%s208 + $0xa90] sm:$0xff]
      %v576 = vld [vmem:[%s208 + $0xa98] sm:$0xff]
      %v577 = vld [vmem:[%s208 + $0xaa0] sm:$0xff]
      %v578 = vld [vmem:[%s208 + $0xaa8] sm:$0xff]
      %v579 = vld [vmem:[%s208 + $0xab0] sm:$0xff]
      %v580 = vld [vmem:[%s208 + $0xab8] sm:$0xff]
      %v581 = vld [vmem:[%s208 + $0xac0] sm:$0xff]
      %v582 = vld [vmem:[%s208 + $0xac8] sm:$0xff]
      %v583 = vld [vmem:[%s208 + $0xad0] sm:$0xff]
      %v584 = vld [vmem:[%s208 + $0xad8] sm:$0xff]
      %v585 = vld [vmem:[%s208 + $0xae0] sm:$0xff]
      %v586 = vld [vmem:[%s208 + $0xae8] sm:$0xff]
      %v587 = vld [vmem:[%s208 + $0xaf0] sm:$0xff]
      %v588 = vld [vmem:[%s208 + $0xaf8] sm:$0xff]
      %v589 = vld [vmem:[%s208 + $0xb00] sm:$0xff]
      %v590 = vld [vmem:[%s208 + $0xb08] sm:$0xff]
      %v591 = vld [vmem:[%s208 + $0xb10] sm:$0xff]
      %v592 = vld [vmem:[%s208 + $0xb18] sm:$0xff]
      %v593 = vld [vmem:[%s208 + $0xb20] sm:$0xff]
      %v594 = vld [vmem:[%s208 + $0xb28] sm:$0xff]
      %v595 = vld [vmem:[%s208 + $0xb30] sm:$0xff]
      %v596 = vld [vmem:[%s208 + $0xb38] sm:$0xff]
      %v597 = vld [vmem:[%s208 + $0xb40] sm:$0xff]
      %v598 = vld [vmem:[%s208 + $0xb48] sm:$0xff]
      %v599 = vld [vmem:[%s208 + $0xb50] sm:$0xff]
      %v600 = vld [vmem:[%s208 + $0xb58] sm:$0xff]
      %v601 = vld [vmem:[%s208 + $0xb60] sm:$0xff]
      %v602 = vld [vmem:[%s208 + $0xb68] sm:$0xff]
      %v603 = vld [vmem:[%s208 + $0xb70] sm:$0xff]
      %v604 = vld [vmem:[%s208 + $0xb78] sm:$0xff]
      %v605 = vld [vmem:[%s208 + $0xb80] sm:$0xff]
      %v606 = vld [vmem:[%s208 + $0xb88] sm:$0xff]
      %v607 = vld [vmem:[%s208 + $0xb90] sm:$0xff]
      %v608 = vld [vmem:[%s208 + $0xb98] sm:$0xff]
      %v609 = vld [vmem:[%s208 + $0xba0] sm:$0xff]
      %v610 = vld [vmem:[%s208 + $0xba8] sm:$0xff]
      %v611 = vld [vmem:[%s208 + $0xbb0] sm:$0xff]
      %v612 = vld [vmem:[%s208 + $0xbb8] sm:$0xff]
      %v613 = vld [vmem:[%s208 + $0xbc0] sm:$0xff]
      %v614 = vld [vmem:[%s208 + $0xbc8] sm:$0xff]
      %v615 = vld [vmem:[%s208 + $0xbd0] sm:$0xff]
      %v616 = vld [vmem:[%s208 + $0xbd8] sm:$0xff]
      %v617 = vld [vmem:[%s208 + $0xbe0] sm:$0xff]
      %v618 = vld [vmem:[%s208 + $0xbe8] sm:$0xff]
      %v619 = vld [vmem:[%s208 + $0xbf0] sm:$0xff]
      %v620 = vld [vmem:[%s208 + $0xbf8] sm:$0xff]
      %v621 = vld [vmem:[%s208 + $0xc00] sm:$0xff]
      %v622 = vld [vmem:[%s208 + $0xc08] sm:$0xff]
      %v623 = vld [vmem:[%s208 + $0xc10] sm:$0xff]
      %v624 = vld [vmem:[%s208 + $0xc18] sm:$0xff]
      %v625 = vld [vmem:[%s208 + $0xc20] sm:$0xff]
      %v626 = vld [vmem:[%s208 + $0xc28] sm:$0xff]
      %v627 = vld [vmem:[%s208 + $0xc30] sm:$0xff]
      %v628 = vld [vmem:[%s208 + $0xc38] sm:$0xff]
      %v629 = vld [vmem:[%s208 + $0xc40] sm:$0xff]
      %v630 = vld [vmem:[%s208 + $0xc48] sm:$0xff]
      %v631 = vld [vmem:[%s208 + $0xc50] sm:$0xff]
      %v632 = vld [vmem:[%s208 + $0xc58] sm:$0xff]
      %v633 = vld [vmem:[%s208 + $0xc60] sm:$0xff]
      %v634 = vld [vmem:[%s208 + $0xc68] sm:$0xff]
      %v635 = vld [vmem:[%s208 + $0xc70] sm:$0xff]
      %v636 = vld [vmem:[%s208 + $0xc78] sm:$0xff]
      %v637 = vld [vmem:[%s208 + $0xc80] sm:$0xff]
      %v638 = vld [vmem:[%s208 + $0xc88] sm:$0xff]
      %v639 = vld [vmem:[%s208 + $0xc90] sm:$0xff]
      %v640 = vld [vmem:[%s208 + $0xc98] sm:$0xff]
      %v641 = vld [vmem:[%s208 + $0xca0] sm:$0xff]
      %v642 = vld [vmem:[%s208 + $0xca8] sm:$0xff]
      %v643 = vld [vmem:[%s208 + $0xcb0] sm:$0xff]
      %v644 = vld [vmem:[%s208 + $0xcb8] sm:$0xff]
      %v645 = vld [vmem:[%s208 + $0xcc0] sm:$0xff]
      %v646 = vld [vmem:[%s208 + $0xcc8] sm:$0xff]
      %v647 = vld [vmem:[%s208 + $0xcd0] sm:$0xff]
      %v648 = vld [vmem:[%s208 + $0xcd8] sm:$0xff]
      %v649 = vld [vmem:[%s208 + $0xce0] sm:$0xff]
      %v650 = vld [vmem:[%s208 + $0xce8] sm:$0xff]
      %v651 = vld [vmem:[%s208 + $0xcf0] sm:$0xff]
      %v652 = vld [vmem:[%s208 + $0xcf8] sm:$0xff]
      %v653 = vld [vmem:[%s208 + $0xd00] sm:$0xff]
      %v654 = vld [vmem:[%s208 + $0xd08] sm:$0xff]
      %v655 = vld [vmem:[%s208 + $0xd10] sm:$0xff]
      %v656 = vld [vmem:[%s208 + $0xd18] sm:$0xff]
      %v657 = vld [vmem:[%s208 + $0xd20] sm:$0xff]
      %v658 = vld [vmem:[%s208 + $0xd28] sm:$0xff]
      %v659 = vld [vmem:[%s208 + $0xd30] sm:$0xff]
      %v660 = vld [vmem:[%s208 + $0xd38] sm:$0xff]
      %v661 = vld [vmem:[%s208 + $0xd40] sm:$0xff]
      %v662 = vld [vmem:[%s208 + $0xd48] sm:$0xff]
      %v663 = vld [vmem:[%s208 + $0xd50] sm:$0xff]
      %v664 = vld [vmem:[%s208 + $0xd58] sm:$0xff]
      %v665 = vld [vmem:[%s208 + $0xd60] sm:$0xff]
      %v666 = vld [vmem:[%s208 + $0xd68] sm:$0xff]
      %v667 = vld [vmem:[%s208 + $0xd70] sm:$0xff]
      %v668 = vld [vmem:[%s208 + $0xd78] sm:$0xff]
      %v669 = vld [vmem:[%s208 + $0xd80] sm:$0xff]
      %v670 = vld [vmem:[%s208 + $0xd88] sm:$0xff]
      %v671 = vld [vmem:[%s208 + $0xd90] sm:$0xff]
      %v672 = vld [vmem:[%s208 + $0xd98] sm:$0xff]
      %v673 = vld [vmem:[%s208 + $0xda0] sm:$0xff]
      %v674 = vld [vmem:[%s208 + $0xda8] sm:$0xff]
      %v675 = vld [vmem:[%s208 + $0xdb0] sm:$0xff]
      %v676 = vld [vmem:[%s208 + $0xdb8] sm:$0xff]
      %v677 = vld [vmem:[%s208 + $0xdc0] sm:$0xff]
      %v678 = vld [vmem:[%s208 + $0xdc8] sm:$0xff]
      %v679 = vld [vmem:[%s208 + $0xdd0] sm:$0xff]
      %v680 = vld [vmem:[%s208 + $0xdd8] sm:$0xff]
      %v681 = vld [vmem:[%s208 + $0xde0] sm:$0xff]
      %v682 = vld [vmem:[%s208 + $0xde8] sm:$0xff]
      %v683 = vld [vmem:[%s208 + $0xdf0] sm:$0xff]
      %v684 = vld [vmem:[%s208 + $0xdf8] sm:$0xff]
      %v685 = vunpack.c.l.bf16 %v237
      %v686 = vunpack.c.h.bf16 %v237
      %v687 = vunpack.c.l.bf16 %v238
      %v688 = vunpack.c.h.bf16 %v238
      %v689 = vunpack.c.l.bf16 %v239
      %v690 = vunpack.c.h.bf16 %v239
      %v691 = vunpack.c.l.bf16 %v240
      %v692 = vunpack.c.h.bf16 %v240
      %v693 = vunpack.c.l.bf16 %v241
      %v694 = vunpack.c.h.bf16 %v241
      %v695 = vunpack.c.l.bf16 %v242
      %v696 = vunpack.c.h.bf16 %v242
      %v697 = vunpack.c.l.bf16 %v243
      %v698 = vunpack.c.h.bf16 %v243
      %v699 = vunpack.c.l.bf16 %v244
      %v700 = vunpack.c.h.bf16 %v244
      %v701 = vunpack.c.l.bf16 %v245
      %v702 = vunpack.c.h.bf16 %v245
      %v703 = vunpack.c.l.bf16 %v246
      %v704 = vunpack.c.h.bf16 %v246
      %v705 = vunpack.c.l.bf16 %v247
      %v706 = vunpack.c.h.bf16 %v247
      %v707 = vunpack.c.l.bf16 %v248
      %v708 = vunpack.c.h.bf16 %v248
      %v709 = vunpack.c.l.bf16 %v249
      %v710 = vunpack.c.h.bf16 %v249
      %v711 = vunpack.c.l.bf16 %v250
      %v712 = vunpack.c.h.bf16 %v250
      %v713 = vunpack.c.l.bf16 %v251
      %v714 = vunpack.c.h.bf16 %v251
      %v715 = vunpack.c.l.bf16 %v252
      %v716 = vunpack.c.h.bf16 %v252
      %v717 = vunpack.c.l.bf16 %v253
      %v718 = vunpack.c.h.bf16 %v253
      %v719 = vunpack.c.l.bf16 %v254
      %v720 = vunpack.c.h.bf16 %v254
      %v721 = vunpack.c.l.bf16 %v255
      %v722 = vunpack.c.h.bf16 %v255
      %v723 = vunpack.c.l.bf16 %v256
      %v724 = vunpack.c.h.bf16 %v256
      %v725 = vunpack.c.l.bf16 %v257
      %v726 = vunpack.c.h.bf16 %v257
      %v727 = vunpack.c.l.bf16 %v258
      %v728 = vunpack.c.h.bf16 %v258
      %v729 = vunpack.c.l.bf16 %v259
      %v730 = vunpack.c.h.bf16 %v259
      %v731 = vunpack.c.l.bf16 %v260
      %v732 = vunpack.c.h.bf16 %v260
      %v733 = vunpack.c.l.bf16 %v261
      %v734 = vunpack.c.h.bf16 %v261
      %v735 = vunpack.c.l.bf16 %v262
      %v736 = vunpack.c.h.bf16 %v262
      %v737 = vunpack.c.l.bf16 %v263
      %v738 = vunpack.c.h.bf16 %v263
      %v739 = vunpack.c.l.bf16 %v264
      %v740 = vunpack.c.h.bf16 %v264
      %v741 = vunpack.c.l.bf16 %v265
      %v742 = vunpack.c.h.bf16 %v265
      %v743 = vunpack.c.l.bf16 %v266
      %v744 = vunpack.c.h.bf16 %v266
      %v745 = vunpack.c.l.bf16 %v267
      %v746 = vunpack.c.h.bf16 %v267
      %v747 = vunpack.c.l.bf16 %v268
      %v748 = vunpack.c.h.bf16 %v268
      %v749 = vunpack.c.l.bf16 %v269
      %v750 = vunpack.c.h.bf16 %v269
      %v751 = vunpack.c.l.bf16 %v270
      %v752 = vunpack.c.h.bf16 %v270
      %v753 = vunpack.c.l.bf16 %v271
      %v754 = vunpack.c.h.bf16 %v271
      %v755 = vunpack.c.l.bf16 %v272
      %v756 = vunpack.c.h.bf16 %v272
      %v757 = vunpack.c.l.bf16 %v273
      %v758 = vunpack.c.h.bf16 %v273
      %v759 = vunpack.c.l.bf16 %v274
      %v760 = vunpack.c.h.bf16 %v274
      %v761 = vunpack.c.l.bf16 %v275
      %v762 = vunpack.c.h.bf16 %v275
      %v763 = vunpack.c.l.bf16 %v276
      %v764 = vunpack.c.h.bf16 %v276
      %v765 = vunpack.c.l.bf16 %v277
      %v766 = vunpack.c.h.bf16 %v277
      %v767 = vunpack.c.l.bf16 %v278
      %v768 = vunpack.c.h.bf16 %v278
      %v769 = vunpack.c.l.bf16 %v279
      %v770 = vunpack.c.h.bf16 %v279
      %v771 = vunpack.c.l.bf16 %v280
      %v772 = vunpack.c.h.bf16 %v280
      %v773 = vunpack.c.l.bf16 %v281
      %v774 = vunpack.c.h.bf16 %v281
      %v775 = vunpack.c.l.bf16 %v282
      %v776 = vunpack.c.h.bf16 %v282
      %v777 = vunpack.c.l.bf16 %v283
      %v778 = vunpack.c.h.bf16 %v283
      %v779 = vunpack.c.l.bf16 %v284
      %v780 = vunpack.c.h.bf16 %v284
      %v781 = vunpack.c.l.bf16 %v285
      %v782 = vunpack.c.h.bf16 %v285
      %v783 = vunpack.c.l.bf16 %v286
      %v784 = vunpack.c.h.bf16 %v286
      %v785 = vunpack.c.l.bf16 %v287
      %v786 = vunpack.c.h.bf16 %v287
      %v787 = vunpack.c.l.bf16 %v288
      %v788 = vunpack.c.h.bf16 %v288
      %v789 = vunpack.c.l.bf16 %v289
      %v790 = vunpack.c.h.bf16 %v289
      %v791 = vunpack.c.l.bf16 %v290
      %v792 = vunpack.c.h.bf16 %v290
      %v793 = vunpack.c.l.bf16 %v291
      %v794 = vunpack.c.h.bf16 %v291
      %v795 = vunpack.c.l.bf16 %v292
      %v796 = vunpack.c.h.bf16 %v292
      %v797 = vunpack.c.l.bf16 %v293
      %v798 = vunpack.c.h.bf16 %v293
      %v799 = vunpack.c.l.bf16 %v294
      %v800 = vunpack.c.h.bf16 %v294
      %v801 = vunpack.c.l.bf16 %v295
      %v802 = vunpack.c.h.bf16 %v295
      %v803 = vunpack.c.l.bf16 %v296
      %v804 = vunpack.c.h.bf16 %v296
      %v805 = vunpack.c.l.bf16 %v297
      %v806 = vunpack.c.h.bf16 %v297
      %v807 = vunpack.c.l.bf16 %v298
      %v808 = vunpack.c.h.bf16 %v298
      %v809 = vunpack.c.l.bf16 %v299
      %v810 = vunpack.c.h.bf16 %v299
      %v811 = vunpack.c.l.bf16 %v300
      %v812 = vunpack.c.h.bf16 %v300
      %v813 = vunpack.c.l.bf16 %v301
      %v814 = vunpack.c.h.bf16 %v301
      %v815 = vunpack.c.l.bf16 %v302
      %v816 = vunpack.c.h.bf16 %v302
      %v817 = vunpack.c.l.bf16 %v303
      %v818 = vunpack.c.h.bf16 %v303
      %v819 = vunpack.c.l.bf16 %v304
      %v820 = vunpack.c.h.bf16 %v304
      %v821 = vunpack.c.l.bf16 %v305
      %v822 = vunpack.c.h.bf16 %v305
      %v823 = vunpack.c.l.bf16 %v306
      %v824 = vunpack.c.h.bf16 %v306
      %v825 = vunpack.c.l.bf16 %v307
      %v826 = vunpack.c.h.bf16 %v307
      %v827 = vunpack.c.l.bf16 %v308
      %v828 = vunpack.c.h.bf16 %v308
      %v829 = vunpack.c.l.bf16 %v309
      %v830 = vunpack.c.h.bf16 %v309
      %v831 = vunpack.c.l.bf16 %v310
      %v832 = vunpack.c.h.bf16 %v310
      %v833 = vunpack.c.l.bf16 %v311
      %v834 = vunpack.c.h.bf16 %v311
      %v835 = vunpack.c.l.bf16 %v312
      %v836 = vunpack.c.h.bf16 %v312
      %v837 = vunpack.c.l.bf16 %v313
      %v838 = vunpack.c.h.bf16 %v313
      %v839 = vunpack.c.l.bf16 %v314
      %v840 = vunpack.c.h.bf16 %v314
      %v841 = vunpack.c.l.bf16 %v315
      %v842 = vunpack.c.h.bf16 %v315
      %v843 = vunpack.c.l.bf16 %v316
      %v844 = vunpack.c.h.bf16 %v316
      %v845 = vunpack.c.l.bf16 %v317
      %v846 = vunpack.c.h.bf16 %v317
      %v847 = vunpack.c.l.bf16 %v318
      %v848 = vunpack.c.h.bf16 %v318
      %v849 = vunpack.c.l.bf16 %v319
      %v850 = vunpack.c.h.bf16 %v319
      %v851 = vunpack.c.l.bf16 %v320
      %v852 = vunpack.c.h.bf16 %v320
      %v853 = vunpack.c.l.bf16 %v321
      %v854 = vunpack.c.h.bf16 %v321
      %v855 = vunpack.c.l.bf16 %v322
      %v856 = vunpack.c.h.bf16 %v322
      %v857 = vunpack.c.l.bf16 %v323
      %v858 = vunpack.c.h.bf16 %v323
      %v859 = vunpack.c.l.bf16 %v324
      %v860 = vunpack.c.h.bf16 %v324
      %v861 = vunpack.c.l.bf16 %v325
      %v862 = vunpack.c.h.bf16 %v325
      %v863 = vunpack.c.l.bf16 %v326
      %v864 = vunpack.c.h.bf16 %v326
      %v865 = vunpack.c.l.bf16 %v327
      %v866 = vunpack.c.h.bf16 %v327
      %v867 = vunpack.c.l.bf16 %v328
      %v868 = vunpack.c.h.bf16 %v328
      %v869 = vunpack.c.l.bf16 %v329
      %v870 = vunpack.c.h.bf16 %v329
      %v871 = vunpack.c.l.bf16 %v330
      %v872 = vunpack.c.h.bf16 %v330
      %v873 = vunpack.c.l.bf16 %v331
      %v874 = vunpack.c.h.bf16 %v331
      %v875 = vunpack.c.l.bf16 %v332
      %v876 = vunpack.c.h.bf16 %v332
      %v877 = vunpack.c.l.bf16 %v333
      %v878 = vunpack.c.h.bf16 %v333
      %v879 = vunpack.c.l.bf16 %v334
      %v880 = vunpack.c.h.bf16 %v334
      %v881 = vunpack.c.l.bf16 %v335
      %v882 = vunpack.c.h.bf16 %v335
      %v883 = vunpack.c.l.bf16 %v336
      %v884 = vunpack.c.h.bf16 %v336
      %v885 = vunpack.c.l.bf16 %v337
      %v886 = vunpack.c.h.bf16 %v337
      %v887 = vunpack.c.l.bf16 %v338
      %v888 = vunpack.c.h.bf16 %v338
      %v889 = vunpack.c.l.bf16 %v339
      %v890 = vunpack.c.h.bf16 %v339
      %v891 = vunpack.c.l.bf16 %v340
      %v892 = vunpack.c.h.bf16 %v340
      %v893 = vunpack.c.l.bf16 %v341
      %v894 = vunpack.c.h.bf16 %v341
      %v895 = vunpack.c.l.bf16 %v342
      %v896 = vunpack.c.h.bf16 %v342
      %v897 = vunpack.c.l.bf16 %v343
      %v898 = vunpack.c.h.bf16 %v343
      %v899 = vunpack.c.l.bf16 %v344
      %v900 = vunpack.c.h.bf16 %v344
      %v901 = vunpack.c.l.bf16 %v345
      %v902 = vunpack.c.h.bf16 %v345
      %v903 = vunpack.c.l.bf16 %v346
      %v904 = vunpack.c.h.bf16 %v346
      %v905 = vunpack.c.l.bf16 %v347
      %v906 = vunpack.c.h.bf16 %v347
      %v907 = vunpack.c.l.bf16 %v348
      %v908 = vunpack.c.h.bf16 %v348
      %v909 = vunpack.c.l.bf16 %v349
      %v910 = vunpack.c.h.bf16 %v349
      %v911 = vunpack.c.l.bf16 %v350
      %v912 = vunpack.c.h.bf16 %v350
      %v913 = vunpack.c.l.bf16 %v351
      %v914 = vunpack.c.h.bf16 %v351
      %v915 = vunpack.c.l.bf16 %v352
      %v916 = vunpack.c.h.bf16 %v352
      %v917 = vunpack.c.l.bf16 %v353
      %v918 = vunpack.c.h.bf16 %v353
      %v919 = vunpack.c.l.bf16 %v354
      %v920 = vunpack.c.h.bf16 %v354
      %v921 = vunpack.c.l.bf16 %v355
      %v922 = vunpack.c.h.bf16 %v355
      %v923 = vunpack.c.l.bf16 %v356
      %v924 = vunpack.c.h.bf16 %v356
      %v925 = vunpack.c.l.bf16 %v357
      %v926 = vunpack.c.h.bf16 %v357
      %v927 = vunpack.c.l.bf16 %v358
      %v928 = vunpack.c.h.bf16 %v358
      %v929 = vunpack.c.l.bf16 %v359
      %v930 = vunpack.c.h.bf16 %v359
      %v931 = vunpack.c.l.bf16 %v360
      %v932 = vunpack.c.h.bf16 %v360
      %v933 = vunpack.c.l.bf16 %v361
      %v934 = vunpack.c.h.bf16 %v361
      %v935 = vunpack.c.l.bf16 %v362
      %v936 = vunpack.c.h.bf16 %v362
      %v937 = vunpack.c.l.bf16 %v363
      %v938 = vunpack.c.h.bf16 %v363
      %v939 = vunpack.c.l.bf16 %v364
      %v940 = vunpack.c.h.bf16 %v364
      %v941 = vunpack.c.l.bf16 %v365
      %v942 = vunpack.c.h.bf16 %v365
      %v943 = vunpack.c.l.bf16 %v366
      %v944 = vunpack.c.h.bf16 %v366
      %v945 = vunpack.c.l.bf16 %v367
      %v946 = vunpack.c.h.bf16 %v367
      %v947 = vunpack.c.l.bf16 %v368
      %v948 = vunpack.c.h.bf16 %v368
      %v949 = vunpack.c.l.bf16 %v369
      %v950 = vunpack.c.h.bf16 %v369
      %v951 = vunpack.c.l.bf16 %v370
      %v952 = vunpack.c.h.bf16 %v370
      %v953 = vunpack.c.l.bf16 %v371
      %v954 = vunpack.c.h.bf16 %v371
      %v955 = vunpack.c.l.bf16 %v372
      %v956 = vunpack.c.h.bf16 %v372
      %v957 = vunpack.c.l.bf16 %v373
      %v958 = vunpack.c.h.bf16 %v373
      %v959 = vunpack.c.l.bf16 %v374
      %v960 = vunpack.c.h.bf16 %v374
      %v961 = vunpack.c.l.bf16 %v375
      %v962 = vunpack.c.h.bf16 %v375
      %v963 = vunpack.c.l.bf16 %v376
      %v964 = vunpack.c.h.bf16 %v376
      %v965 = vunpack.c.l.bf16 %v377
      %v966 = vunpack.c.h.bf16 %v377
      %v967 = vunpack.c.l.bf16 %v378
      %v968 = vunpack.c.h.bf16 %v378
      %v969 = vunpack.c.l.bf16 %v379
      %v970 = vunpack.c.h.bf16 %v379
      %v971 = vunpack.c.l.bf16 %v380
      %v972 = vunpack.c.h.bf16 %v380
      %v973 = vunpack.c.l.bf16 %v381
      %v974 = vunpack.c.h.bf16 %v381
      %v975 = vunpack.c.l.bf16 %v382
      %v976 = vunpack.c.h.bf16 %v382
      %v977 = vunpack.c.l.bf16 %v383
      %v978 = vunpack.c.h.bf16 %v383
      %v979 = vunpack.c.l.bf16 %v384
      %v980 = vunpack.c.h.bf16 %v384
      %v981 = vunpack.c.l.bf16 %v385
      %v982 = vunpack.c.h.bf16 %v385
      %v983 = vunpack.c.l.bf16 %v386
      %v984 = vunpack.c.h.bf16 %v386
      %v985 = vunpack.c.l.bf16 %v387
      %v986 = vunpack.c.h.bf16 %v387
      %v987 = vunpack.c.l.bf16 %v388
      %v988 = vunpack.c.h.bf16 %v388
      %v989 = vunpack.c.l.bf16 %v389
      %v990 = vunpack.c.h.bf16 %v389
      %v991 = vunpack.c.l.bf16 %v390
      %v992 = vunpack.c.h.bf16 %v390
      %v993 = vunpack.c.l.bf16 %v391
      %v994 = vunpack.c.h.bf16 %v391
      %v995 = vunpack.c.l.bf16 %v392
      %v996 = vunpack.c.h.bf16 %v392
      %v997 = vunpack.c.l.bf16 %v393
      %v998 = vunpack.c.h.bf16 %v393
      %v999 = vunpack.c.l.bf16 %v394
      %v1000 = vunpack.c.h.bf16 %v394
      %v1001 = vunpack.c.l.bf16 %v395
      %v1002 = vunpack.c.h.bf16 %v395
      %v1003 = vunpack.c.l.bf16 %v396
      %v1004 = vunpack.c.h.bf16 %v396
      %v1005 = vunpack.c.l.bf16 %v397
      %v1006 = vunpack.c.h.bf16 %v397
      %v1007 = vunpack.c.l.bf16 %v398
      %v1008 = vunpack.c.h.bf16 %v398
      %v1009 = vunpack.c.l.bf16 %v399
      %v1010 = vunpack.c.h.bf16 %v399
      %v1011 = vunpack.c.l.bf16 %v400
      %v1012 = vunpack.c.h.bf16 %v400
      %v1013 = vunpack.c.l.bf16 %v401
      %v1014 = vunpack.c.h.bf16 %v401
      %v1015 = vunpack.c.l.bf16 %v402
      %v1016 = vunpack.c.h.bf16 %v402
      %v1017 = vunpack.c.l.bf16 %v403
      %v1018 = vunpack.c.h.bf16 %v403
      %v1019 = vunpack.c.l.bf16 %v404
      %v1020 = vunpack.c.h.bf16 %v404
      %v1021 = vunpack.c.l.bf16 %v405
      %v1022 = vunpack.c.h.bf16 %v405
      %v1023 = vunpack.c.l.bf16 %v406
      %v1024 = vunpack.c.h.bf16 %v406
      %v1025 = vunpack.c.l.bf16 %v407
      %v1026 = vunpack.c.h.bf16 %v407
      %v1027 = vunpack.c.l.bf16 %v408
      %v1028 = vunpack.c.h.bf16 %v408
      %v1029 = vunpack.c.l.bf16 %v409
      %v1030 = vunpack.c.h.bf16 %v409
      %v1031 = vunpack.c.l.bf16 %v410
      %v1032 = vunpack.c.h.bf16 %v410
      %v1033 = vunpack.c.l.bf16 %v411
      %v1034 = vunpack.c.h.bf16 %v411
      %v1035 = vunpack.c.l.bf16 %v412
      %v1036 = vunpack.c.h.bf16 %v412
      %v1037 = vunpack.c.l.bf16 %v413
      %v1038 = vunpack.c.h.bf16 %v413
      %v1039 = vunpack.c.l.bf16 %v414
      %v1040 = vunpack.c.h.bf16 %v414
      %v1041 = vunpack.c.l.bf16 %v415
      %v1042 = vunpack.c.h.bf16 %v415
      %v1043 = vunpack.c.l.bf16 %v416
      %v1044 = vunpack.c.h.bf16 %v416
      %v1045 = vunpack.c.l.bf16 %v417
      %v1046 = vunpack.c.h.bf16 %v417
      %v1047 = vunpack.c.l.bf16 %v418
      %v1048 = vunpack.c.h.bf16 %v418
      %v1049 = vunpack.c.l.bf16 %v419
      %v1050 = vunpack.c.h.bf16 %v419
      %v1051 = vunpack.c.l.bf16 %v420
      %v1052 = vunpack.c.h.bf16 %v420
      %v1053 = vunpack.c.l.bf16 %v421
      %v1054 = vunpack.c.h.bf16 %v421
      %v1055 = vunpack.c.l.bf16 %v422
      %v1056 = vunpack.c.h.bf16 %v422
      %v1057 = vunpack.c.l.bf16 %v423
      %v1058 = vunpack.c.h.bf16 %v423
      %v1059 = vunpack.c.l.bf16 %v424
      %v1060 = vunpack.c.h.bf16 %v424
      %v1061 = vunpack.c.l.bf16 %v425
      %v1062 = vunpack.c.h.bf16 %v425
      %v1063 = vunpack.c.l.bf16 %v426
      %v1064 = vunpack.c.h.bf16 %v426
      %v1065 = vunpack.c.l.bf16 %v427
      %v1066 = vunpack.c.h.bf16 %v427
      %v1067 = vunpack.c.l.bf16 %v428
      %v1068 = vunpack.c.h.bf16 %v428
      %v1069 = vunpack.c.l.bf16 %v429
      %v1070 = vunpack.c.h.bf16 %v429
      %v1071 = vunpack.c.l.bf16 %v430
      %v1072 = vunpack.c.h.bf16 %v430
      %v1073 = vunpack.c.l.bf16 %v431
      %v1074 = vunpack.c.h.bf16 %v431
      %v1075 = vunpack.c.l.bf16 %v432
      %v1076 = vunpack.c.h.bf16 %v432
      %v1077 = vunpack.c.l.bf16 %v433
      %v1078 = vunpack.c.h.bf16 %v433
      %v1079 = vunpack.c.l.bf16 %v434
      %v1080 = vunpack.c.h.bf16 %v434
      %v1081 = vunpack.c.l.bf16 %v435
      %v1082 = vunpack.c.h.bf16 %v435
      %v1083 = vunpack.c.l.bf16 %v436
      %v1084 = vunpack.c.h.bf16 %v436
      %v1085 = vunpack.c.l.bf16 %v437
      %v1086 = vunpack.c.h.bf16 %v437
      %v1087 = vunpack.c.l.bf16 %v438
      %v1088 = vunpack.c.h.bf16 %v438
      %v1089 = vunpack.c.l.bf16 %v439
      %v1090 = vunpack.c.h.bf16 %v439
      %v1091 = vunpack.c.l.bf16 %v440
      %v1092 = vunpack.c.h.bf16 %v440
      %v1093 = vunpack.c.l.bf16 %v441
      %v1094 = vunpack.c.h.bf16 %v441
      %v1095 = vunpack.c.l.bf16 %v442
      %v1096 = vunpack.c.h.bf16 %v442
      %v1097 = vunpack.c.l.bf16 %v443
      %v1098 = vunpack.c.h.bf16 %v443
      %v1099 = vunpack.c.l.bf16 %v444
      %v1100 = vunpack.c.h.bf16 %v444
      %v1101 = vunpack.c.l.bf16 %v445
      %v1102 = vunpack.c.h.bf16 %v445
      %v1103 = vunpack.c.l.bf16 %v446
      %v1104 = vunpack.c.h.bf16 %v446
      %v1105 = vunpack.c.l.bf16 %v447
      %v1106 = vunpack.c.h.bf16 %v447
      %v1107 = vunpack.c.l.bf16 %v448
      %v1108 = vunpack.c.h.bf16 %v448
      %v1109 = vunpack.c.l.bf16 %v449
      %v1110 = vunpack.c.h.bf16 %v449
      %v1111 = vunpack.c.l.bf16 %v450
      %v1112 = vunpack.c.h.bf16 %v450
      %v1113 = vunpack.c.l.bf16 %v451
      %v1114 = vunpack.c.h.bf16 %v451
      %v1115 = vunpack.c.l.bf16 %v452
      %v1116 = vunpack.c.h.bf16 %v452
      %v1117 = vunpack.c.l.bf16 %v453
      %v1118 = vunpack.c.h.bf16 %v453
      %v1119 = vunpack.c.l.bf16 %v454
      %v1120 = vunpack.c.h.bf16 %v454
      %v1121 = vunpack.c.l.bf16 %v455
      %v1122 = vunpack.c.h.bf16 %v455
      %v1123 = vunpack.c.l.bf16 %v456
      %v1124 = vunpack.c.h.bf16 %v456
      %v1125 = vunpack.c.l.bf16 %v457
      %v1126 = vunpack.c.h.bf16 %v457
      %v1127 = vunpack.c.l.bf16 %v458
      %v1128 = vunpack.c.h.bf16 %v458
      %v1129 = vunpack.c.l.bf16 %v459
      %v1130 = vunpack.c.h.bf16 %v459
      %v1131 = vunpack.c.l.bf16 %v460
      %v1132 = vunpack.c.h.bf16 %v460
      %v1133 = vunpack.c.l.bf16 %v461
      %v1134 = vunpack.c.h.bf16 %v461
      %v1135 = vunpack.c.l.bf16 %v462
      %v1136 = vunpack.c.h.bf16 %v462
      %v1137 = vunpack.c.l.bf16 %v463
      %v1138 = vunpack.c.h.bf16 %v463
      %v1139 = vunpack.c.l.bf16 %v464
      %v1140 = vunpack.c.h.bf16 %v464
      %v1141 = vunpack.c.l.bf16 %v465
      %v1142 = vunpack.c.h.bf16 %v465
      %v1143 = vunpack.c.l.bf16 %v466
      %v1144 = vunpack.c.h.bf16 %v466
      %v1145 = vunpack.c.l.bf16 %v467
      %v1146 = vunpack.c.h.bf16 %v467
      %v1147 = vunpack.c.l.bf16 %v468
      %v1148 = vunpack.c.h.bf16 %v468
      %v1149 = vunpack.c.l.bf16 %v469
      %v1150 = vunpack.c.h.bf16 %v469
      %v1151 = vunpack.c.l.bf16 %v470
      %v1152 = vunpack.c.h.bf16 %v470
      %v1153 = vunpack.c.l.bf16 %v471
      %v1154 = vunpack.c.h.bf16 %v471
      %v1155 = vunpack.c.l.bf16 %v472
      %v1156 = vunpack.c.h.bf16 %v472
      %v1157 = vunpack.c.l.bf16 %v473
      %v1158 = vunpack.c.h.bf16 %v473
      %v1159 = vunpack.c.l.bf16 %v474
      %v1160 = vunpack.c.h.bf16 %v474
      %v1161 = vunpack.c.l.bf16 %v475
      %v1162 = vunpack.c.h.bf16 %v475
      %v1163 = vunpack.c.l.bf16 %v476
      %v1164 = vunpack.c.h.bf16 %v476
      %v1165 = vunpack.c.l.bf16 %v477
      %v1166 = vunpack.c.h.bf16 %v477
      %v1167 = vunpack.c.l.bf16 %v478
      %v1168 = vunpack.c.h.bf16 %v478
      %v1169 = vunpack.c.l.bf16 %v479
      %v1170 = vunpack.c.h.bf16 %v479
      %v1171 = vunpack.c.l.bf16 %v480
      %v1172 = vunpack.c.h.bf16 %v480
      %v1173 = vunpack.c.l.bf16 %v481
      %v1174 = vunpack.c.h.bf16 %v481
      %v1175 = vunpack.c.l.bf16 %v482
      %v1176 = vunpack.c.h.bf16 %v482
      %v1177 = vunpack.c.l.bf16 %v483
      %v1178 = vunpack.c.h.bf16 %v483
      %v1179 = vunpack.c.l.bf16 %v484
      %v1180 = vunpack.c.h.bf16 %v484
      %v1181 = vunpack.c.l.bf16 %v485
      %v1182 = vunpack.c.h.bf16 %v485
      %v1183 = vunpack.c.l.bf16 %v486
      %v1184 = vunpack.c.h.bf16 %v486
      %v1185 = vunpack.c.l.bf16 %v487
      %v1186 = vunpack.c.h.bf16 %v487
      %v1187 = vunpack.c.l.bf16 %v488
      %v1188 = vunpack.c.h.bf16 %v488
      %v1189 = vunpack.c.l.bf16 %v489
      %v1190 = vunpack.c.h.bf16 %v489
      %v1191 = vunpack.c.l.bf16 %v490
      %v1192 = vunpack.c.h.bf16 %v490
      %v1193 = vunpack.c.l.bf16 %v491
      %v1194 = vunpack.c.h.bf16 %v491
      %v1195 = vunpack.c.l.bf16 %v492
      %v1196 = vunpack.c.h.bf16 %v492
      %v1197 = vunpack.c.l.bf16 %v493
      %v1198 = vunpack.c.h.bf16 %v493
      %v1199 = vunpack.c.l.bf16 %v494
      %v1200 = vunpack.c.h.bf16 %v494
      %v1201 = vunpack.c.l.bf16 %v495
      %v1202 = vunpack.c.h.bf16 %v495
      %v1203 = vunpack.c.l.bf16 %v496
      %v1204 = vunpack.c.h.bf16 %v496
      %v1205 = vunpack.c.l.bf16 %v497
      %v1206 = vunpack.c.h.bf16 %v497
      %v1207 = vunpack.c.l.bf16 %v498
      %v1208 = vunpack.c.h.bf16 %v498
      %v1209 = vunpack.c.l.bf16 %v499
      %v1210 = vunpack.c.h.bf16 %v499
      %v1211 = vunpack.c.l.bf16 %v500
      %v1212 = vunpack.c.h.bf16 %v500
      %v1213 = vunpack.c.l.bf16 %v501
      %v1214 = vunpack.c.h.bf16 %v501
      %v1215 = vunpack.c.l.bf16 %v502
      %v1216 = vunpack.c.h.bf16 %v502
      %v1217 = vunpack.c.l.bf16 %v503
      %v1218 = vunpack.c.h.bf16 %v503
      %v1219 = vunpack.c.l.bf16 %v504
      %v1220 = vunpack.c.h.bf16 %v504
      %v1221 = vunpack.c.l.bf16 %v505
      %v1222 = vunpack.c.h.bf16 %v505
      %v1223 = vunpack.c.l.bf16 %v506
      %v1224 = vunpack.c.h.bf16 %v506
      %v1225 = vunpack.c.l.bf16 %v507
      %v1226 = vunpack.c.h.bf16 %v507
      %v1227 = vunpack.c.l.bf16 %v508
      %v1228 = vunpack.c.h.bf16 %v508
      %v1229 = vunpack.c.l.bf16 %v509
      %v1230 = vunpack.c.h.bf16 %v509
      %v1231 = vunpack.c.l.bf16 %v510
      %v1232 = vunpack.c.h.bf16 %v510
      %v1233 = vunpack.c.l.bf16 %v511
      %v1234 = vunpack.c.h.bf16 %v511
      %v1235 = vunpack.c.l.bf16 %v512
      %v1236 = vunpack.c.h.bf16 %v512
      %v1237 = vunpack.c.l.bf16 %v513
      %v1238 = vunpack.c.h.bf16 %v513
      %v1239 = vunpack.c.l.bf16 %v514
      %v1240 = vunpack.c.h.bf16 %v514
      %v1241 = vunpack.c.l.bf16 %v515
      %v1242 = vunpack.c.h.bf16 %v515
      %v1243 = vunpack.c.l.bf16 %v516
      %v1244 = vunpack.c.h.bf16 %v516
      %v1245 = vunpack.c.l.bf16 %v517
      %v1246 = vunpack.c.h.bf16 %v517
      %v1247 = vunpack.c.l.bf16 %v518
      %v1248 = vunpack.c.h.bf16 %v518
      %v1249 = vunpack.c.l.bf16 %v519
      %v1250 = vunpack.c.h.bf16 %v519
      %v1251 = vunpack.c.l.bf16 %v520
      %v1252 = vunpack.c.h.bf16 %v520
      %v1253 = vunpack.c.l.bf16 %v521
      %v1254 = vunpack.c.h.bf16 %v521
      %v1255 = vunpack.c.l.bf16 %v522
      %v1256 = vunpack.c.h.bf16 %v522
      %v1257 = vunpack.c.l.bf16 %v523
      %v1258 = vunpack.c.h.bf16 %v523
      %v1259 = vunpack.c.l.bf16 %v524
      %v1260 = vunpack.c.h.bf16 %v524
      %v1261 = vunpack.c.l.bf16 %v525
      %v1262 = vunpack.c.h.bf16 %v525
      %v1263 = vunpack.c.l.bf16 %v526
      %v1264 = vunpack.c.h.bf16 %v526
      %v1265 = vunpack.c.l.bf16 %v527
      %v1266 = vunpack.c.h.bf16 %v527
      %v1267 = vunpack.c.l.bf16 %v528
      %v1268 = vunpack.c.h.bf16 %v528
      %v1269 = vunpack.c.l.bf16 %v529
      %v1270 = vunpack.c.h.bf16 %v529
      %v1271 = vunpack.c.l.bf16 %v530
      %v1272 = vunpack.c.h.bf16 %v530
      %v1273 = vunpack.c.l.bf16 %v531
      %v1274 = vunpack.c.h.bf16 %v531
      %v1275 = vunpack.c.l.bf16 %v532
      %v1276 = vunpack.c.h.bf16 %v532
      %v1277 = vunpack.c.l.bf16 %v533
      %v1278 = vunpack.c.h.bf16 %v533
      %v1279 = vunpack.c.l.bf16 %v534
      %v1280 = vunpack.c.h.bf16 %v534
      %v1281 = vunpack.c.l.bf16 %v535
      %v1282 = vunpack.c.h.bf16 %v535
      %v1283 = vunpack.c.l.bf16 %v536
      %v1284 = vunpack.c.h.bf16 %v536
      %v1285 = vunpack.c.l.bf16 %v537
      %v1286 = vunpack.c.h.bf16 %v537
      %v1287 = vunpack.c.l.bf16 %v538
      %v1288 = vunpack.c.h.bf16 %v538
      %v1289 = vunpack.c.l.bf16 %v539
      %v1290 = vunpack.c.h.bf16 %v539
      %v1291 = vunpack.c.l.bf16 %v540
      %v1292 = vunpack.c.h.bf16 %v540
      %v1293 = vunpack.c.l.bf16 %v541
      %v1294 = vunpack.c.h.bf16 %v541
      %v1295 = vunpack.c.l.bf16 %v542
      %v1296 = vunpack.c.h.bf16 %v542
      %v1297 = vunpack.c.l.bf16 %v543
      %v1298 = vunpack.c.h.bf16 %v543
      %v1299 = vunpack.c.l.bf16 %v544
      %v1300 = vunpack.c.h.bf16 %v544
      %v1301 = vunpack.c.l.bf16 %v545
      %v1302 = vunpack.c.h.bf16 %v545
      %v1303 = vunpack.c.l.bf16 %v546
      %v1304 = vunpack.c.h.bf16 %v546
      %v1305 = vunpack.c.l.bf16 %v547
      %v1306 = vunpack.c.h.bf16 %v547
      %v1307 = vunpack.c.l.bf16 %v548
      %v1308 = vunpack.c.h.bf16 %v548
      %v1309 = vunpack.c.l.bf16 %v549
      %v1310 = vunpack.c.h.bf16 %v549
      %v1311 = vunpack.c.l.bf16 %v550
      %v1312 = vunpack.c.h.bf16 %v550
      %v1313 = vunpack.c.l.bf16 %v551
      %v1314 = vunpack.c.h.bf16 %v551
      %v1315 = vunpack.c.l.bf16 %v552
      %v1316 = vunpack.c.h.bf16 %v552
      %v1317 = vunpack.c.l.bf16 %v553
      %v1318 = vunpack.c.h.bf16 %v553
      %v1319 = vunpack.c.l.bf16 %v554
      %v1320 = vunpack.c.h.bf16 %v554
      %v1321 = vunpack.c.l.bf16 %v555
      %v1322 = vunpack.c.h.bf16 %v555
      %v1323 = vunpack.c.l.bf16 %v556
      %v1324 = vunpack.c.h.bf16 %v556
      %v1325 = vunpack.c.l.bf16 %v557
      %v1326 = vunpack.c.h.bf16 %v557
      %v1327 = vunpack.c.l.bf16 %v558
      %v1328 = vunpack.c.h.bf16 %v558
      %v1329 = vunpack.c.l.bf16 %v559
      %v1330 = vunpack.c.h.bf16 %v559
      %v1331 = vunpack.c.l.bf16 %v560
      %v1332 = vunpack.c.h.bf16 %v560
      %v1333 = vunpack.c.l.bf16 %v561
      %v1334 = vunpack.c.h.bf16 %v561
      %v1335 = vunpack.c.l.bf16 %v562
      %v1336 = vunpack.c.h.bf16 %v562
      %v1337 = vunpack.c.l.bf16 %v563
      %v1338 = vunpack.c.h.bf16 %v563
      %v1339 = vunpack.c.l.bf16 %v564
      %v1340 = vunpack.c.h.bf16 %v564
      %v1341 = vunpack.c.l.bf16 %v565
      %v1342 = vunpack.c.h.bf16 %v565
      %v1343 = vunpack.c.l.bf16 %v566
      %v1344 = vunpack.c.h.bf16 %v566
      %v1345 = vunpack.c.l.bf16 %v567
      %v1346 = vunpack.c.h.bf16 %v567
      %v1347 = vunpack.c.l.bf16 %v568
      %v1348 = vunpack.c.h.bf16 %v568
      %v1349 = vunpack.c.l.bf16 %v569
      %v1350 = vunpack.c.h.bf16 %v569
      %v1351 = vunpack.c.l.bf16 %v570
      %v1352 = vunpack.c.h.bf16 %v570
      %v1353 = vunpack.c.l.bf16 %v571
      %v1354 = vunpack.c.h.bf16 %v571
      %v1355 = vunpack.c.l.bf16 %v572
      %v1356 = vunpack.c.h.bf16 %v572
      %v1357 = vunpack.c.l.bf16 %v573
      %v1358 = vunpack.c.h.bf16 %v573
      %v1359 = vunpack.c.l.bf16 %v574
      %v1360 = vunpack.c.h.bf16 %v574
      %v1361 = vunpack.c.l.bf16 %v575
      %v1362 = vunpack.c.h.bf16 %v575
      %v1363 = vunpack.c.l.bf16 %v576
      %v1364 = vunpack.c.h.bf16 %v576
      %v1365 = vunpack.c.l.bf16 %v577
      %v1366 = vunpack.c.h.bf16 %v577
      %v1367 = vunpack.c.l.bf16 %v578
      %v1368 = vunpack.c.h.bf16 %v578
      %v1369 = vunpack.c.l.bf16 %v579
      %v1370 = vunpack.c.h.bf16 %v579
      %v1371 = vunpack.c.l.bf16 %v580
      %v1372 = vunpack.c.h.bf16 %v580
      %v1373 = vunpack.c.l.bf16 %v581
      %v1374 = vunpack.c.h.bf16 %v581
      %v1375 = vunpack.c.l.bf16 %v582
      %v1376 = vunpack.c.h.bf16 %v582
      %v1377 = vunpack.c.l.bf16 %v583
      %v1378 = vunpack.c.h.bf16 %v583
      %v1379 = vunpack.c.l.bf16 %v584
      %v1380 = vunpack.c.h.bf16 %v584
      %v1381 = vunpack.c.l.bf16 %v585
      %v1382 = vunpack.c.h.bf16 %v585
      %v1383 = vunpack.c.l.bf16 %v586
      %v1384 = vunpack.c.h.bf16 %v586
      %v1385 = vunpack.c.l.bf16 %v587
      %v1386 = vunpack.c.h.bf16 %v587
      %v1387 = vunpack.c.l.bf16 %v588
      %v1388 = vunpack.c.h.bf16 %v588
      %v1389 = vunpack.c.l.bf16 %v589
      %v1390 = vunpack.c.h.bf16 %v589
      %v1391 = vunpack.c.l.bf16 %v590
      %v1392 = vunpack.c.h.bf16 %v590
      %v1393 = vunpack.c.l.bf16 %v591
      %v1394 = vunpack.c.h.bf16 %v591
      %v1395 = vunpack.c.l.bf16 %v592
      %v1396 = vunpack.c.h.bf16 %v592
      %v1397 = vunpack.c.l.bf16 %v593
      %v1398 = vunpack.c.h.bf16 %v593
      %v1399 = vunpack.c.l.bf16 %v594
      %v1400 = vunpack.c.h.bf16 %v594
      %v1401 = vunpack.c.l.bf16 %v595
      %v1402 = vunpack.c.h.bf16 %v595
      %v1403 = vunpack.c.l.bf16 %v596
      %v1404 = vunpack.c.h.bf16 %v596
      %v1405 = vunpack.c.l.bf16 %v597
      %v1406 = vunpack.c.h.bf16 %v597
      %v1407 = vunpack.c.l.bf16 %v598
      %v1408 = vunpack.c.h.bf16 %v598
      %v1409 = vunpack.c.l.bf16 %v599
      %v1410 = vunpack.c.h.bf16 %v599
      %v1411 = vunpack.c.l.bf16 %v600
      %v1412 = vunpack.c.h.bf16 %v600
      %v1413 = vunpack.c.l.bf16 %v601
      %v1414 = vunpack.c.h.bf16 %v601
      %v1415 = vunpack.c.l.bf16 %v602
      %v1416 = vunpack.c.h.bf16 %v602
      %v1417 = vunpack.c.l.bf16 %v603
      %v1418 = vunpack.c.h.bf16 %v603
      %v1419 = vunpack.c.l.bf16 %v604
      %v1420 = vunpack.c.h.bf16 %v604
      %v1421 = vunpack.c.l.bf16 %v605
      %v1422 = vunpack.c.h.bf16 %v605
      %v1423 = vunpack.c.l.bf16 %v606
      %v1424 = vunpack.c.h.bf16 %v606
      %v1425 = vunpack.c.l.bf16 %v607
      %v1426 = vunpack.c.h.bf16 %v607
      %v1427 = vunpack.c.l.bf16 %v608
      %v1428 = vunpack.c.h.bf16 %v608
      %v1429 = vunpack.c.l.bf16 %v609
      %v1430 = vunpack.c.h.bf16 %v609
      %v1431 = vunpack.c.l.bf16 %v610
      %v1432 = vunpack.c.h.bf16 %v610
      %v1433 = vunpack.c.l.bf16 %v611
      %v1434 = vunpack.c.h.bf16 %v611
      %v1435 = vunpack.c.l.bf16 %v612
      %v1436 = vunpack.c.h.bf16 %v612
      %v1437 = vunpack.c.l.bf16 %v613
      %v1438 = vunpack.c.h.bf16 %v613
      %v1439 = vunpack.c.l.bf16 %v614
      %v1440 = vunpack.c.h.bf16 %v614
      %v1441 = vunpack.c.l.bf16 %v615
      %v1442 = vunpack.c.h.bf16 %v615
      %v1443 = vunpack.c.l.bf16 %v616
      %v1444 = vunpack.c.h.bf16 %v616
      %v1445 = vunpack.c.l.bf16 %v617
      %v1446 = vunpack.c.h.bf16 %v617
      %v1447 = vunpack.c.l.bf16 %v618
      %v1448 = vunpack.c.h.bf16 %v618
      %v1449 = vunpack.c.l.bf16 %v619
      %v1450 = vunpack.c.h.bf16 %v619
      %v1451 = vunpack.c.l.bf16 %v620
      %v1452 = vunpack.c.h.bf16 %v620
      %v1453 = vunpack.c.l.bf16 %v621
      %v1454 = vunpack.c.h.bf16 %v621
      %v1455 = vunpack.c.l.bf16 %v622
      %v1456 = vunpack.c.h.bf16 %v622
      %v1457 = vunpack.c.l.bf16 %v623
      %v1458 = vunpack.c.h.bf16 %v623
      %v1459 = vunpack.c.l.bf16 %v624
      %v1460 = vunpack.c.h.bf16 %v624
      %v1461 = vunpack.c.l.bf16 %v625
      %v1462 = vunpack.c.h.bf16 %v625
      %v1463 = vunpack.c.l.bf16 %v626
      %v1464 = vunpack.c.h.bf16 %v626
      %v1465 = vunpack.c.l.bf16 %v627
      %v1466 = vunpack.c.h.bf16 %v627
      %v1467 = vunpack.c.l.bf16 %v628
      %v1468 = vunpack.c.h.bf16 %v628
      %v1469 = vunpack.c.l.bf16 %v629
      %v1470 = vunpack.c.h.bf16 %v629
      %v1471 = vunpack.c.l.bf16 %v630
      %v1472 = vunpack.c.h.bf16 %v630
      %v1473 = vunpack.c.l.bf16 %v631
      %v1474 = vunpack.c.h.bf16 %v631
      %v1475 = vunpack.c.l.bf16 %v632
      %v1476 = vunpack.c.h.bf16 %v632
      %v1477 = vunpack.c.l.bf16 %v633
      %v1478 = vunpack.c.h.bf16 %v633
      %v1479 = vunpack.c.l.bf16 %v634
      %v1480 = vunpack.c.h.bf16 %v634
      %v1481 = vunpack.c.l.bf16 %v635
      %v1482 = vunpack.c.h.bf16 %v635
      %v1483 = vunpack.c.l.bf16 %v636
      %v1484 = vunpack.c.h.bf16 %v636
      %v1485 = vunpack.c.l.bf16 %v637
      %v1486 = vunpack.c.h.bf16 %v637
      %v1487 = vunpack.c.l.bf16 %v638
      %v1488 = vunpack.c.h.bf16 %v638
      %v1489 = vunpack.c.l.bf16 %v639
      %v1490 = vunpack.c.h.bf16 %v639
      %v1491 = vunpack.c.l.bf16 %v640
      %v1492 = vunpack.c.h.bf16 %v640
      %v1493 = vunpack.c.l.bf16 %v641
      %v1494 = vunpack.c.h.bf16 %v641
      %v1495 = vunpack.c.l.bf16 %v642
      %v1496 = vunpack.c.h.bf16 %v642
      %v1497 = vunpack.c.l.bf16 %v643
      %v1498 = vunpack.c.h.bf16 %v643
      %v1499 = vunpack.c.l.bf16 %v644
      %v1500 = vunpack.c.h.bf16 %v644
      %v1501 = vunpack.c.l.bf16 %v645
      %v1502 = vunpack.c.h.bf16 %v645
      %v1503 = vunpack.c.l.bf16 %v646
      %v1504 = vunpack.c.h.bf16 %v646
      %v1505 = vunpack.c.l.bf16 %v647
      %v1506 = vunpack.c.h.bf16 %v647
      %v1507 = vunpack.c.l.bf16 %v648
      %v1508 = vunpack.c.h.bf16 %v648
      %v1509 = vunpack.c.l.bf16 %v649
      %v1510 = vunpack.c.h.bf16 %v649
      %v1511 = vunpack.c.l.bf16 %v650
      %v1512 = vunpack.c.h.bf16 %v650
      %v1513 = vunpack.c.l.bf16 %v651
      %v1514 = vunpack.c.h.bf16 %v651
      %v1515 = vunpack.c.l.bf16 %v652
      %v1516 = vunpack.c.h.bf16 %v652
      %v1517 = vunpack.c.l.bf16 %v653
      %v1518 = vunpack.c.h.bf16 %v653
      %v1519 = vunpack.c.l.bf16 %v654
      %v1520 = vunpack.c.h.bf16 %v654
      %v1521 = vunpack.c.l.bf16 %v655
      %v1522 = vunpack.c.h.bf16 %v655
      %v1523 = vunpack.c.l.bf16 %v656
      %v1524 = vunpack.c.h.bf16 %v656
      %v1525 = vunpack.c.l.bf16 %v657
      %v1526 = vunpack.c.h.bf16 %v657
      %v1527 = vunpack.c.l.bf16 %v658
      %v1528 = vunpack.c.h.bf16 %v658
      %v1529 = vunpack.c.l.bf16 %v659
      %v1530 = vunpack.c.h.bf16 %v659
      %v1531 = vunpack.c.l.bf16 %v660
      %v1532 = vunpack.c.h.bf16 %v660
      %v1533 = vunpack.c.l.bf16 %v661
      %v1534 = vunpack.c.h.bf16 %v661
      %v1535 = vunpack.c.l.bf16 %v662
      %v1536 = vunpack.c.h.bf16 %v662
      %v1537 = vunpack.c.l.bf16 %v663
      %v1538 = vunpack.c.h.bf16 %v663
      %v1539 = vunpack.c.l.bf16 %v664
      %v1540 = vunpack.c.h.bf16 %v664
      %v1541 = vunpack.c.l.bf16 %v665
      %v1542 = vunpack.c.h.bf16 %v665
      %v1543 = vunpack.c.l.bf16 %v666
      %v1544 = vunpack.c.h.bf16 %v666
      %v1545 = vunpack.c.l.bf16 %v667
      %v1546 = vunpack.c.h.bf16 %v667
      %v1547 = vunpack.c.l.bf16 %v668
      %v1548 = vunpack.c.h.bf16 %v668
      %v1549 = vunpack.c.l.bf16 %v669
      %v1550 = vunpack.c.h.bf16 %v669
      %v1551 = vunpack.c.l.bf16 %v670
      %v1552 = vunpack.c.h.bf16 %v670
      %v1553 = vunpack.c.l.bf16 %v671
      %v1554 = vunpack.c.h.bf16 %v671
      %v1555 = vunpack.c.l.bf16 %v672
      %v1556 = vunpack.c.h.bf16 %v672
      %v1557 = vunpack.c.l.bf16 %v673
      %v1558 = vunpack.c.h.bf16 %v673
      %v1559 = vunpack.c.l.bf16 %v674
      %v1560 = vunpack.c.h.bf16 %v674
      %v1561 = vunpack.c.l.bf16 %v675
      %v1562 = vunpack.c.h.bf16 %v675
      %v1563 = vunpack.c.l.bf16 %v676
      %v1564 = vunpack.c.h.bf16 %v676
      %v1565 = vunpack.c.l.bf16 %v677
      %v1566 = vunpack.c.h.bf16 %v677
      %v1567 = vunpack.c.l.bf16 %v678
      %v1568 = vunpack.c.h.bf16 %v678
      %v1569 = vunpack.c.l.bf16 %v679
      %v1570 = vunpack.c.h.bf16 %v679
      %v1571 = vunpack.c.l.bf16 %v680
      %v1572 = vunpack.c.h.bf16 %v680
      %v1573 = vunpack.c.l.bf16 %v681
      %v1574 = vunpack.c.h.bf16 %v681
      %v1575 = vunpack.c.l.bf16 %v682
      %v1576 = vunpack.c.h.bf16 %v682
      %v1577 = vunpack.c.l.bf16 %v683
      %v1578 = vunpack.c.h.bf16 %v683
      %v1579 = vunpack.c.l.bf16 %v684
      %v1580 = vunpack.c.h.bf16 %v684
      %1581 = vmatprep.subr.mxu0 %v686
      %1582 = vmatpush1.msra.mxu0 %v685
      %1583 = vmatprep.subr.mxu0 %v694
      %1584 = vmatpush1.msra.mxu0 %v693
      %1585 = vmatprep.subr.mxu0 %v702
      %1586 = vmatpush1.msra.mxu0 %v701
      %1587 = vmatprep.subr.mxu0 %v710
      %1588 = vmatpush1.msra.mxu0 %v709
      %1589 = vmatprep.subr.mxu0 %v718
      %1590 = vmatpush1.msra.mxu0 %v717
      %1591 = vmatprep.subr.mxu0 %v726
      %1592 = vmatpush1.msra.mxu0 %v725
      %1593 = vmatprep.subr.mxu0 %v734
      %1594 = vmatpush1.msra.mxu0 %v733
      %1595 = vmatprep.subr.mxu0 %v742
      %1596 = vmatpush1.msra.mxu0 %v741
      %1597 = vmatprep.subr.mxu0 %v750
      %1598 = vmatpush1.msra.mxu0 %v749
      %1599 = vmatprep.subr.mxu0 %v758
      %1600 = vmatpush1.msra.mxu0 %v757
      %1601 = vmatprep.subr.mxu0 %v766
      %1602 = vmatpush1.msra.mxu0 %v765
      %1603 = vmatprep.subr.mxu0 %v774
      %1604 = vmatpush1.msra.mxu0 %v773
      %1605 = vmatprep.subr.mxu0 %v782
      %1606 = vmatpush1.msra.mxu0 %v781
      %1607 = vmatprep.subr.mxu0 %v790
      %1608 = vmatpush1.msra.mxu0 %v789
      %1609 = vmatprep.subr.mxu0 %v798
      %1610 = vmatpush1.msra.mxu0 %v797
      %1611 = vmatprep.subr.mxu0 %v806
      %1612 = vmatpush1.msra.mxu0 %v805
      %1613 = vmatprep.subr.mxu0 %v814
      %1614 = vmatpush1.msra.mxu0 %v813
      %1615 = vmatprep.subr.mxu0 %v822
      %1616 = vmatpush1.msra.mxu0 %v821
      %1617 = vmatprep.subr.mxu0 %v830
      %1618 = vmatpush1.msra.mxu0 %v829
      %1619 = vmatprep.subr.mxu0 %v838
      %1620 = vmatpush1.msra.mxu0 %v837
      %1621 = vmatprep.subr.mxu0 %v846
      %1622 = vmatpush1.msra.mxu0 %v845
      %1623 = vmatprep.subr.mxu0 %v854
      %1624 = vmatpush1.msra.mxu0 %v853
      %1625 = vmatprep.subr.mxu0 %v862
      %1626 = vmatpush1.msra.mxu0 %v861
      %1627 = vmatprep.subr.mxu0 %v870
      %1628 = vmatpush1.msra.mxu0 %v869
      %1629 = vmatprep.subr.mxu0 %v878
      %1630 = vmatpush1.msra.mxu0 %v877
      %1631 = vmatprep.subr.mxu0 %v886
      %1632 = vmatpush1.msra.mxu0 %v885
      %1633 = vmatprep.subr.mxu0 %v894
      %1634 = vmatpush1.msra.mxu0 %v893
      %1635 = vmatprep.subr.mxu0 %v902
      %1636 = vmatpush1.msra.mxu0 %v901
      %1637 = vmatprep.subr.mxu0 %v910
      %1638 = vmatpush1.msra.mxu0 %v909
      %1639 = vmatprep.subr.mxu0 %v918
      %1640 = vmatpush1.msra.mxu0 %v917
      %1641 = vmatprep.subr.mxu0 %v926
      %1642 = vmatpush1.msra.mxu0 %v925
      %1643 = vmatprep.subr.mxu0 %v934
      %1644 = vmatpush1.msra.mxu0 %v933
      %1645 = vmatprep.mubr.f32.mxu0 %v231
      %1646 = vmatmul.mubr.f32.gmra.mrb[0].mxu0 %v230
      %v1647 = vpop.f32.mrb[0].mxu0
      %v1648 = vadd.f32 0.0, %v1647
      %v1649 = vpop.f32.mrb[0].mxu0
      %v1650 = vadd.f32 0.0, %v1649
      %1651 = vdwg.mxu0
      %1652 = vmatprep.subr.mxu0 %v942
      %1653 = vmatpush1.msra.mxu0 %v941
      %1654 = vmatprep.subr.mxu0 %v950
      %1655 = vmatpush1.msra.mxu0 %v949
      %1656 = vmatprep.subr.mxu0 %v958
      %1657 = vmatpush1.msra.mxu0 %v957
      %1658 = vmatprep.subr.mxu0 %v966
      %1659 = vmatpush1.msra.mxu0 %v965
      %1660 = vmatprep.subr.mxu0 %v974
      %1661 = vmatpush1.msra.mxu0 %v973
      %1662 = vmatprep.subr.mxu0 %v982
      %1663 = vmatpush1.msra.mxu0 %v981
      %1664 = vmatprep.subr.mxu0 %v990
      %1665 = vmatpush1.msra.mxu0 %v989
      %1666 = vmatprep.subr.mxu0 %v998
      %1667 = vmatpush1.msra.mxu0 %v997
      %1668 = vmatprep.subr.mxu0 %v1006
      %1669 = vmatpush1.msra.mxu0 %v1005
      %1670 = vmatprep.subr.mxu0 %v1014
      %1671 = vmatpush1.msra.mxu0 %v1013
      %1672 = vmatprep.subr.mxu0 %v1022
      %1673 = vmatpush1.msra.mxu0 %v1021
      %1674 = vmatprep.subr.mxu0 %v1030
      %1675 = vmatpush1.msra.mxu0 %v1029
      %1676 = vmatprep.subr.mxu0 %v1038
      %1677 = vmatpush1.msra.mxu0 %v1037
      %1678 = vmatprep.subr.mxu0 %v1046
      %1679 = vmatpush1.msra.mxu0 %v1045
      %1680 = vmatprep.subr.mxu0 %v1054
      %1681 = vmatpush1.msra.mxu0 %v1053
      %1682 = vmatprep.subr.mxu0 %v1062
      %1683 = vmatpush1.msra.mxu0 %v1061
      %1684 = vmatprep.subr.mxu0 %v1070
      %1685 = vmatpush1.msra.mxu0 %v1069
      %1686 = vmatprep.subr.mxu0 %v1078
      %1687 = vmatpush1.msra.mxu0 %v1077
      %1688 = vmatprep.subr.mxu0 %v1086
      %1689 = vmatpush1.msra.mxu0 %v1085
      %1690 = vmatprep.subr.mxu0 %v1094
      %1691 = vmatpush1.msra.mxu0 %v1093
      %1692 = vmatprep.subr.mxu0 %v1102
      %1693 = vmatpush1.msra.mxu0 %v1101
      %1694 = vmatprep.subr.mxu0 %v1110
      %1695 = vmatpush1.msra.mxu0 %v1109
      %1696 = vmatprep.subr.mxu0 %v1118
      %1697 = vmatpush1.msra.mxu0 %v1117
      %1698 = vmatprep.subr.mxu0 %v1126
      %1699 = vmatpush1.msra.mxu0 %v1125
      %1700 = vmatprep.subr.mxu0 %v1134
      %1701 = vmatpush1.msra.mxu0 %v1133
      %1702 = vmatprep.subr.mxu0 %v1142
      %1703 = vmatpush1.msra.mxu0 %v1141
      %1704 = vmatprep.subr.mxu0 %v1150
      %1705 = vmatpush1.msra.mxu0 %v1149
      %1706 = vmatprep.subr.mxu0 %v1158
      %1707 = vmatpush1.msra.mxu0 %v1157
      %1708 = vmatprep.subr.mxu0 %v1166
      %1709 = vmatpush1.msra.mxu0 %v1165
      %1710 = vmatprep.subr.mxu0 %v1174
      %1711 = vmatpush1.msra.mxu0 %v1173
      %1712 = vmatprep.subr.mxu0 %v1182
      %1713 = vmatpush1.msra.mxu0 %v1181
      %1714 = vmatprep.subr.mxu0 %v1190
      %1715 = vmatpush1.msra.mxu0 %v1189
      %1716 = vmatprep.mubr.f32.mxu0 %v233
      %1717 = vmatmul.mubr.f32.gmra.mrb[0].mxu0 %v232
      %v1718 = vpop.f32.mrb[0].mxu0
      %v1719 = vadd.f32 %v1648, %v1718
      %v1720 = vpop.f32.mrb[0].mxu0
      %v1721 = vadd.f32 %v1650, %v1720
      %1722 = vdwg.mxu0
      %1723 = vmatprep.subr.mxu0 %v1198
      %1724 = vmatpush1.msra.mxu0 %v1197
      %1725 = vmatprep.subr.mxu0 %v1206
      %1726 = vmatpush1.msra.mxu0 %v1205
      %1727 = vmatprep.subr.mxu0 %v1214
      %1728 = vmatpush1.msra.mxu0 %v1213
      %1729 = vmatprep.subr.mxu0 %v1222
      %1730 = vmatpush1.msra.mxu0 %v1221
      %1731 = vmatprep.subr.mxu0 %v1230
      %1732 = vmatpush1.msra.mxu0 %v1229
      %1733 = vmatprep.subr.mxu0 %v1238
      %1734 = vmatpush1.msra.mxu0 %v1237
      %1735 = vmatprep.subr.mxu0 %v1246
      %1736 = vmatpush1.msra.mxu0 %v1245
      %1737 = vmatprep.subr.mxu0 %v1254
      %1738 = vmatpush1.msra.mxu0 %v1253
      %1739 = vmatprep.subr.mxu0 %v1262
      %1740 = vmatpush1.msra.mxu0 %v1261
      %1741 = vmatprep.subr.mxu0 %v1270
      %1742 = vmatpush1.msra.mxu0 %v1269
      %1743 = vmatprep.subr.mxu0 %v1278
      %1744 = vmatpush1.msra.mxu0 %v1277
      %1745 = vmatprep.subr.mxu0 %v1286
      %1746 = vmatpush1.msra.mxu0 %v1285
      %1747 = vmatprep.subr.mxu0 %v1294
      %1748 = vmatpush1.msra.mxu0 %v1293
      %1749 = vmatprep.subr.mxu0 %v1302
      %1750 = vmatpush1.msra.mxu0 %v1301
      %1751 = vmatprep.subr.mxu0 %v1310
      %1752 = vmatpush1.msra.mxu0 %v1309
      %1753 = vmatprep.subr.mxu0 %v1318
      %1754 = vmatpush1.msra.mxu0 %v1317
      %1755 = vmatprep.subr.mxu0 %v1326
      %1756 = vmatpush1.msra.mxu0 %v1325
      %1757 = vmatprep.subr.mxu0 %v1334
      %1758 = vmatpush1.msra.mxu0 %v1333
      %1759 = vmatprep.subr.mxu0 %v1342
      %1760 = vmatpush1.msra.mxu0 %v1341
      %1761 = vmatprep.subr.mxu0 %v1350
      %1762 = vmatpush1.msra.mxu0 %v1349
      %1763 = vmatprep.subr.mxu0 %v1358
      %1764 = vmatpush1.msra.mxu0 %v1357
      %1765 = vmatprep.subr.mxu0 %v1366
      %1766 = vmatpush1.msra.mxu0 %v1365
      %1767 = vmatprep.subr.mxu0 %v1374
      %1768 = vmatpush1.msra.mxu0 %v1373
      %1769 = vmatprep.subr.mxu0 %v1382
      %1770 = vmatpush1.msra.mxu0 %v1381
      %1771 = vmatprep.subr.mxu0 %v1390
      %1772 = vmatpush1.msra.mxu0 %v1389
      %1773 = vmatprep.subr.mxu0 %v1398
      %1774 = vmatpush1.msra.mxu0 %v1397
      %1775 = vmatprep.subr.mxu0 %v1406
      %1776 = vmatpush1.msra.mxu0 %v1405
      %1777 = vmatprep.subr.mxu0 %v1414
      %1778 = vmatpush1.msra.mxu0 %v1413
      %1779 = vmatprep.subr.mxu0 %v1422
      %1780 = vmatpush1.msra.mxu0 %v1421
      %1781 = vmatprep.subr.mxu0 %v1430
      %1782 = vmatpush1.msra.mxu0 %v1429
      %1783 = vmatprep.subr.mxu0 %v1438
      %1784 = vmatpush1.msra.mxu0 %v1437
      %1785 = vmatprep.subr.mxu0 %v1446
      %1786 = vmatpush1.msra.mxu0 %v1445
      %1787 = vmatprep.mubr.f32.mxu0 %v235
      %1788 = vmatmul.mubr.f32.gmra.mrb[0].mxu0 %v234
      %v1789 = vpop.f32.mrb[0].mxu0
      %v1790 = vadd.f32 %v1719, %v1789
      %v1791 = vpop.f32.mrb[0].mxu0
      %v1792 = vadd.f32 %v1721, %v1791
      %1793 = vdwg.mxu0
      %1794 = vmatprep.subr.mxu0 %v1454
      %1795 = vmatpush1.msra.mxu0 %v1453
      %1796 = vmatprep.subr.mxu0 %v1462
      %1797 = vmatpush1.msra.mxu0 %v1461
      %1798 = vmatprep.subr.mxu0 %v1470
      %1799 = vmatpush1.msra.mxu0 %v1469
      %1800 = vmatprep.subr.mxu0 %v1478
      %1801 = vmatpush1.msra.mxu0 %v1477
      %1802 = vmatprep.subr.mxu0 %v1486
      %1803 = vmatpush1.msra.mxu0 %v1485
      %1804 = vmatprep.subr.mxu0 %v1494
      %1805 = vmatpush1.msra.mxu0 %v1493
      %1806 = vmatprep.subr.mxu0 %v1502
      %1807 = vmatpush1.msra.mxu0 %v1501
      %1808 = vmatprep.subr.mxu0 %v1510
      %1809 = vmatpush1.msra.mxu0 %v1509
      %1810 = vmatprep.subr.mxu0 %v1518
      %1811 = vmatpush1.msra.mxu0 %v1517
      %1812 = vmatprep.subr.mxu0 %v1526
      %1813 = vmatpush1.msra.mxu0 %v1525
      %1814 = vmatprep.subr.mxu0 %v1534
      %1815 = vmatpush1.msra.mxu0 %v1533
      %1816 = vmatprep.subr.mxu0 %v1542
      %1817 = vmatpush1.msra.mxu0 %v1541
      %1818 = vmatprep.subr.mxu0 %v1550
      %1819 = vmatpush1.msra.mxu0 %v1549
      %1820 = vmatprep.subr.mxu0 %v1558
      %1821 = vmatpush1.msra.mxu0 %v1557
      %1822 = vmatprep.subr.mxu0 %v1566
      %1823 = vmatpush1.msra.mxu0 %v1565
      %1824 = vmatprep.subr.mxu0 %v1574
      %1825 = vmatpush1.msra.mxu0 %v1573
      %1826 = vmatprep.subr.mxu0 0.0
      %1827 = vmatpush1.msra.mxu0 0.0
      %1828 = vmatprep.subr.mxu0 0.0
      %1829 = vmatpush1.msra.mxu0 0.0
      %1830 = vmatprep.subr.mxu0 0.0
      %1831 = vmatpush1.msra.mxu0 0.0
      %1832 = vmatprep.subr.mxu0 0.0
      %1833 = vmatpush1.msra.mxu0 0.0
      %1834 = vmatprep.subr.mxu0 0.0
      %1835 = vmatpush1.msra.mxu0 0.0
      %1836 = vmatprep.subr.mxu0 0.0
      %1837 = vmatpush1.msra.mxu0 0.0
      %1838 = vmatprep.subr.mxu0 0.0
      %1839 = vmatpush1.msra.mxu0 0.0
      %1840 = vmatprep.subr.mxu0 0.0
      %1841 = vmatpush1.msra.mxu0 0.0
      %1842 = vmatprep.subr.mxu0 0.0
      %1843 = vmatpush1.msra.mxu0 0.0
      %1844 = vmatprep.subr.mxu0 0.0
      %1845 = vmatpush1.msra.mxu0 0.0
      %1846 = vmatprep.subr.mxu0 0.0
      %1847 = vmatpush1.msra.mxu0 0.0
      %1848 = vmatprep.subr.mxu0 0.0
      %1849 = vmatpush1.msra.mxu0 0.0
      %1850 = vmatprep.subr.mxu0 0.0
      %1851 = vmatpush1.msra.mxu0 0.0
      %1852 = vmatprep.subr.mxu0 0.0
      %1853 = vmatpush1.msra.mxu0 0.0
      %1854 = vmatprep.subr.mxu0 0.0
      %1855 = vmatpush1.msra.mxu0 0.0
      %1856 = vmatprep.subr.mxu0 0.0
      %1857 = vmatpush1.msra.mxu0 0.0
      %1858 = vmatprep.mubr.f32.mxu0 0.0
      %1859 = vmatmul.mubr.f32.gmra.mrb[0].mxu0 %v236
      %v1860 = vpop.f32.mrb[0].mxu0
      %v1861 = vadd.f32 %v1790, %v1860
      %v1862 = vpop.f32.mrb[0].mxu0
      %v1863 = vadd.f32 %v1792, %v1862
      %1864 = vdwg.mxu0
      %1865 = vmatprep.subr.mxu0 %v688
      %1866 = vmatpush1.msra.mxu0 %v687
      %1867 = vmatprep.subr.mxu0 %v696
      %1868 = vmatpush1.msra.mxu0 %v695
      %1869 = vmatprep.subr.mxu0 %v704
      %1870 = vmatpush1.msra.mxu0 %v703
      %1871 = vmatprep.subr.mxu0 %v712
      %1872 = vmatpush1.msra.mxu0 %v711
      %1873 = vmatprep.subr.mxu0 %v720
      %1874 = vmatpush1.msra.mxu0 %v719
      %1875 = vmatprep.subr.mxu0 %v728
      %1876 = vmatpush1.msra.mxu0 %v727
      %1877 = vmatprep.subr.mxu0 %v736
      %1878 = vmatpush1.msra.mxu0 %v735
      %1879 = vmatprep.subr.mxu0 %v744
      %1880 = vmatpush1.msra.mxu0 %v743
      %1881 = vmatprep.subr.mxu0 %v752
      %1882 = vmatpush1.msra.mxu0 %v751
      %1883 = vmatprep.subr.mxu0 %v760
      %1884 = vmatpush1.msra.mxu0 %v759
      %1885 = vmatprep.subr.mxu0 %v768
      %1886 = vmatpush1.msra.mxu0 %v767
      %1887 = vmatprep.subr.mxu0 %v776
      %1888 = vmatpush1.msra.mxu0 %v775
      %1889 = vmatprep.subr.mxu0 %v784
      %1890 = vmatpush1.msra.mxu0 %v783
      %1891 = vmatprep.subr.mxu0 %v792
      %1892 = vmatpush1.msra.mxu0 %v791
      %1893 = vmatprep.subr.mxu0 %v800
      %1894 = vmatpush1.msra.mxu0 %v799
      %1895 = vmatprep.subr.mxu0 %v808
      %1896 = vmatpush1.msra.mxu0 %v807
      %1897 = vmatprep.subr.mxu0 %v816
      %1898 = vmatpush1.msra.mxu0 %v815
      %1899 = vmatprep.subr.mxu0 %v824
      %1900 = vmatpush1.msra.mxu0 %v823
      %1901 = vmatprep.subr.mxu0 %v832
      %1902 = vmatpush1.msra.mxu0 %v831
      %1903 = vmatprep.subr.mxu0 %v840
      %1904 = vmatpush1.msra.mxu0 %v839
      %1905 = vmatprep.subr.mxu0 %v848
      %1906 = vmatpush1.msra.mxu0 %v847
      %1907 = vmatprep.subr.mxu0 %v856
      %1908 = vmatpush1.msra.mxu0 %v855
      %1909 = vmatprep.subr.mxu0 %v864
      %1910 = vmatpush1.msra.mxu0 %v863
      %1911 = vmatprep.subr.mxu0 %v872
      %1912 = vmatpush1.msra.mxu0 %v871
      %1913 = vmatprep.subr.mxu0 %v880
      %1914 = vmatpush1.msra.mxu0 %v879
      %1915 = vmatprep.subr.mxu0 %v888
      %1916 = vmatpush1.msra.mxu0 %v887
      %1917 = vmatprep.subr.mxu0 %v896
      %1918 = vmatpush1.msra.mxu0 %v895
      %1919 = vmatprep.subr.mxu0 %v904
      %1920 = vmatpush1.msra.mxu0 %v903
      %1921 = vmatprep.subr.mxu0 %v912
      %1922 = vmatpush1.msra.mxu0 %v911
      %1923 = vmatprep.subr.mxu0 %v920
      %1924 = vmatpush1.msra.mxu0 %v919
      %1925 = vmatprep.subr.mxu0 %v928
      %1926 = vmatpush1.msra.mxu0 %v927
      %1927 = vmatprep.subr.mxu0 %v936
      %1928 = vmatpush1.msra.mxu0 %v935
      %1929 = vmatprep.mubr.f32.mxu0 %v231
      %1930 = vmatmul.mubr.f32.gmra.mrb[0].mxu0 %v230
      %v1931 = vpop.f32.mrb[0].mxu0
      %v1932 = vadd.f32 0.0, %v1931
      %v1933 = vpop.f32.mrb[0].mxu0
      %v1934 = vadd.f32 0.0, %v1933
      %1935 = vdwg.mxu0
      %1936 = vmatprep.subr.mxu0 %v944
      %1937 = vmatpush1.msra.mxu0 %v943
      %1938 = vmatprep.subr.mxu0 %v952
      %1939 = vmatpush1.msra.mxu0 %v951
      %1940 = vmatprep.subr.mxu0 %v960
      %1941 = vmatpush1.msra.mxu0 %v959
      %1942 = vmatprep.subr.mxu0 %v968
      %1943 = vmatpush1.msra.mxu0 %v967
      %1944 = vmatprep.subr.mxu0 %v976
      %1945 = vmatpush1.msra.mxu0 %v975
      %1946 = vmatprep.subr.mxu0 %v984
      %1947 = vmatpush1.msra.mxu0 %v983
      %1948 = vmatprep.subr.mxu0 %v992
      %1949 = vmatpush1.msra.mxu0 %v991
      %1950 = vmatprep.subr.mxu0 %v1000
      %1951 = vmatpush1.msra.mxu0 %v999
      %1952 = vmatprep.subr.mxu0 %v1008
      %1953 = vmatpush1.msra.mxu0 %v1007
      %1954 = vmatprep.subr.mxu0 %v1016
      %1955 = vmatpush1.msra.mxu0 %v1015
      %1956 = vmatprep.subr.mxu0 %v1024
      %1957 = vmatpush1.msra.mxu0 %v1023
      %1958 = vmatprep.subr.mxu0 %v1032
      %1959 = vmatpush1.msra.mxu0 %v1031
      %1960 = vmatprep.subr.mxu0 %v1040
      %1961 = vmatpush1.msra.mxu0 %v1039
      %1962 = vmatprep.subr.mxu0 %v1048
      %1963 = vmatpush1.msra.mxu0 %v1047
      %1964 = vmatprep.subr.mxu0 %v1056
      %1965 = vmatpush1.msra.mxu0 %v1055
      %1966 = vmatprep.subr.mxu0 %v1064
      %1967 = vmatpush1.msra.mxu0 %v1063
      %1968 = vmatprep.subr.mxu0 %v1072
      %1969 = vmatpush1.msra.mxu0 %v1071
      %1970 = vmatprep.subr.mxu0 %v1080
      %1971 = vmatpush1.msra.mxu0 %v1079
      %1972 = vmatprep.subr.mxu0 %v1088
      %1973 = vmatpush1.msra.mxu0 %v1087
      %1974 = vmatprep.subr.mxu0 %v1096
      %1975 = vmatpush1.msra.mxu0 %v1095
      %1976 = vmatprep.subr.mxu0 %v1104
      %1977 = vmatpush1.msra.mxu0 %v1103
      %1978 = vmatprep.subr.mxu0 %v1112
      %1979 = vmatpush1.msra.mxu0 %v1111
      %1980 = vmatprep.subr.mxu0 %v1120
      %1981 = vmatpush1.msra.mxu0 %v1119
      %1982 = vmatprep.subr.mxu0 %v1128
      %1983 = vmatpush1.msra.mxu0 %v1127
      %1984 = vmatprep.subr.mxu0 %v1136
      %1985 = vmatpush1.msra.mxu0 %v1135
      %1986 = vmatprep.subr.mxu0 %v1144
      %1987 = vmatpush1.msra.mxu0 %v1143
      %1988 = vmatprep.subr.mxu0 %v1152
      %1989 = vmatpush1.msra.mxu0 %v1151
      %1990 = vmatprep.subr.mxu0 %v1160
      %1991 = vmatpush1.msra.mxu0 %v1159
      %1992 = vmatprep.subr.mxu0 %v1168
      %1993 = vmatpush1.msra.mxu0 %v1167
      %1994 = vmatprep.subr.mxu0 %v1176
      %1995 = vmatpush1.msra.mxu0 %v1175
      %1996 = vmatprep.subr.mxu0 %v1184
      %1997 = vmatpush1.msra.mxu0 %v1183
      %1998 = vmatprep.subr.mxu0 %v1192
      %1999 = vmatpush1.msra.mxu0 %v1191
      %2000 = vmatprep.mubr.f32.mxu0 %v233
      %2001 = vmatmul.mubr.f32.gmra.mrb[0].mxu0 %v232
      %v2002 = vpop.f32.mrb[0].mxu0
      %v2003 = vadd.f32 %v1932, %v2002
      %v2004 = vpop.f32.mrb[0].mxu0
      %v2005 = vadd.f32 %v1934, %v2004
      %2006 = vdwg.mxu0
      %2007 = vmatprep.subr.mxu0 %v1200
      %2008 = vmatpush1.msra.mxu0 %v1199
      %2009 = vmatprep.subr.mxu0 %v1208
      %2010 = vmatpush1.msra.mxu0 %v1207
      %2011 = vmatprep.subr.mxu0 %v1216
      %2012 = vmatpush1.msra.mxu0 %v1215
      %2013 = vmatprep.subr.mxu0 %v1224
      %2014 = vmatpush1.msra.mxu0 %v1223
      %2015 = vmatprep.subr.mxu0 %v1232
      %2016 = vmatpush1.msra.mxu0 %v1231
      %2017 = vmatprep.subr.mxu0 %v1240
      %2018 = vmatpush1.msra.mxu0 %v1239
      %2019 = vmatprep.subr.mxu0 %v1248
      %2020 = vmatpush1.msra.mxu0 %v1247
      %2021 = vmatprep.subr.mxu0 %v1256
      %2022 = vmatpush1.msra.mxu0 %v1255
      %2023 = vmatprep.subr.mxu0 %v1264
      %2024 = vmatpush1.msra.mxu0 %v1263
      %2025 = vmatprep.subr.mxu0 %v1272
      %2026 = vmatpush1.msra.mxu0 %v1271
      %2027 = vmatprep.subr.mxu0 %v1280
      %2028 = vmatpush1.msra.mxu0 %v1279
      %2029 = vmatprep.subr.mxu0 %v1288
      %2030 = vmatpush1.msra.mxu0 %v1287
      %2031 = vmatprep.subr.mxu0 %v1296
      %2032 = vmatpush1.msra.mxu0 %v1295
      %2033 = vmatprep.subr.mxu0 %v1304
      %2034 = vmatpush1.msra.mxu0 %v1303
      %2035 = vmatprep.subr.mxu0 %v1312
      %2036 = vmatpush1.msra.mxu0 %v1311
      %2037 = vmatprep.subr.mxu0 %v1320
      %2038 = vmatpush1.msra.mxu0 %v1319
      %2039 = vmatprep.subr.mxu0 %v1328
      %2040 = vmatpush1.msra.mxu0 %v1327
      %2041 = vmatprep.subr.mxu0 %v1336
      %2042 = vmatpush1.msra.mxu0 %v1335
      %2043 = vmatprep.subr.mxu0 %v1344
      %2044 = vmatpush1.msra.mxu0 %v1343
      %2045 = vmatprep.subr.mxu0 %v1352
      %2046 = vmatpush1.msra.mxu0 %v1351
      %2047 = vmatprep.subr.mxu0 %v1360
      %2048 = vmatpush1.msra.mxu0 %v1359
      %2049 = vmatprep.subr.mxu0 %v1368
      %2050 = vmatpush1.msra.mxu0 %v1367
      %2051 = vmatprep.subr.mxu0 %v1376
      %2052 = vmatpush1.msra.mxu0 %v1375
      %2053 = vmatprep.subr.mxu0 %v1384
      %2054 = vmatpush1.msra.mxu0 %v1383
      %2055 = vmatprep.subr.mxu0 %v1392
      %2056 = vmatpush1.msra.mxu0 %v1391
      %2057 = vmatprep.subr.mxu0 %v1400
      %2058 = vmatpush1.msra.mxu0 %v1399
      %2059 = vmatprep.subr.mxu0 %v1408
      %2060 = vmatpush1.msra.mxu0 %v1407
      %2061 = vmatprep.subr.mxu0 %v1416
      %2062 = vmatpush1.msra.mxu0 %v1415
      %2063 = vmatprep.subr.mxu0 %v1424
      %2064 = vmatpush1.msra.mxu0 %v1423
      %2065 = vmatprep.subr.mxu0 %v1432
      %2066 = vmatpush1.msra.mxu0 %v1431
      %2067 = vmatprep.subr.mxu0 %v1440
      %2068 = vmatpush1.msra.mxu0 %v1439
      %2069 = vmatprep.subr.mxu0 %v1448
      %2070 = vmatpush1.msra.mxu0 %v1447
      %2071 = vmatprep.mubr.f32.mxu0 %v235
      %2072 = vmatmul.mubr.f32.gmra.mrb[0].mxu0 %v234
      %v2073 = vpop.f32.mrb[0].mxu0
      %v2074 = vadd.f32 %v2003, %v2073
      %v2075 = vpop.f32.mrb[0].mxu0
      %v2076 = vadd.f32 %v2005, %v2075
      %2077 = vdwg.mxu0
      %2078 = vmatprep.subr.mxu0 %v1456
      %2079 = vmatpush1.msra.mxu0 %v1455
      %2080 = vmatprep.subr.mxu0 %v1464
      %2081 = vmatpush1.msra.mxu0 %v1463
      %2082 = vmatprep.subr.mxu0 %v1472
      %2083 = vmatpush1.msra.mxu0 %v1471
      %2084 = vmatprep.subr.mxu0 %v1480
      %2085 = vmatpush1.msra.mxu0 %v1479
      %2086 = vmatprep.subr.mxu0 %v1488
      %2087 = vmatpush1.msra.mxu0 %v1487
      %2088 = vmatprep.subr.mxu0 %v1496
      %2089 = vmatpush1.msra.mxu0 %v1495
      %2090 = vmatprep.subr.mxu0 %v1504
      %2091 = vmatpush1.msra.mxu0 %v1503
      %2092 = vmatprep.subr.mxu0 %v1512
      %2093 = vmatpush1.msra.mxu0 %v1511
      %2094 = vmatprep.subr.mxu0 %v1520
      %2095 = vmatpush1.msra.mxu0 %v1519
      %2096 = vmatprep.subr.mxu0 %v1528
      %2097 = vmatpush1.msra.mxu0 %v1527
      %2098 = vmatprep.subr.mxu0 %v1536
      %2099 = vmatpush1.msra.mxu0 %v1535
      %2100 = vmatprep.subr.mxu0 %v1544
      %2101 = vmatpush1.msra.mxu0 %v1543
      %2102 = vmatprep.subr.mxu0 %v1552
      %2103 = vmatpush1.msra.mxu0 %v1551
      %2104 = vmatprep.subr.mxu0 %v1560
      %2105 = vmatpush1.msra.mxu0 %v1559
      %2106 = vmatprep.subr.mxu0 %v1568
      %2107 = vmatpush1.msra.mxu0 %v1567
      %2108 = vmatprep.subr.mxu0 %v1576
      %2109 = vmatpush1.msra.mxu0 %v1575
      %2110 = vmatprep.subr.mxu0 0.0
      %2111 = vmatpush1.msra.mxu0 0.0
      %2112 = vmatprep.subr.mxu0 0.0
      %2113 = vmatpush1.msra.mxu0 0.0
      %2114 = vmatprep.subr.mxu0 0.0
      %2115 = vmatpush1.msra.mxu0 0.0
      %2116 = vmatprep.subr.mxu0 0.0
      %2117 = vmatpush1.msra.mxu0 0.0
      %2118 = vmatprep.subr.mxu0 0.0
      %2119 = vmatpush1.msra.mxu0 0.0
      %2120 = vmatprep.subr.mxu0 0.0
      %2121 = vmatpush1.msra.mxu0 0.0
      %2122 = vmatprep.subr.mxu0 0.0
      %2123 = vmatpush1.msra.mxu0 0.0
      %2124 = vmatprep.subr.mxu0 0.0
      %2125 = vmatpush1.msra.mxu0 0.0
      %2126 = vmatprep.subr.mxu0 0.0
      %2127 = vmatpush1.msra.mxu0 0.0
      %2128 = vmatprep.subr.mxu0 0.0
      %2129 = vmatpush1.msra.mxu0 0.0
      %2130 = vmatprep.subr.mxu0 0.0
      %2131 = vmatpush1.msra.mxu0 0.0
      %2132 = vmatprep.subr.mxu0 0.0
      %2133 = vmatpush1.msra.mxu0 0.0
      %2134 = vmatprep.subr.mxu0 0.0
      %2135 = vmatpush1.msra.mxu0 0.0
      %2136 = vmatprep.subr.mxu0 0.0
      %2137 = vmatpush1.msra.mxu0 0.0
      %2138 = vmatprep.subr.mxu0 0.0
      %2139 = vmatpush1.msra.mxu0 0.0
      %2140 = vmatprep.subr.mxu0 0.0
      %2141 = vmatpush1.msra.mxu0 0.0
      %2142 = vmatprep.mubr.f32.mxu0 0.0
      %2143 = vmatmul.mubr.f32.gmra.mrb[0].mxu0 %v236
      %v2144 = vpop.f32.mrb[0].mxu0
      %v2145 = vadd.f32 %v2074, %v2144
      %v2146 = vpop.f32.mrb[0].mxu0
      %v2147 = vadd.f32 %v2076, %v2146
      %2148 = vdwg.mxu0
      %2149 = vmatprep.subr.mxu0 %v690
      %2150 = vmatpush1.msra.mxu0 %v689
      %2151 = vmatprep.subr.mxu0 %v698
      %2152 = vmatpush1.msra.mxu0 %v697
      %2153 = vmatprep.subr.mxu0 %v706
      %2154 = vmatpush1.msra.mxu0 %v705
      %2155 = vmatprep.subr.mxu0 %v714
      %2156 = vmatpush1.msra.mxu0 %v713
      %2157 = vmatprep.subr.mxu0 %v722
      %2158 = vmatpush1.msra.mxu0 %v721
      %2159 = vmatprep.subr.mxu0 %v730
      %2160 = vmatpush1.msra.mxu0 %v729
      %2161 = vmatprep.subr.mxu0 %v738
      %2162 = vmatpush1.msra.mxu0 %v737
      %2163 = vmatprep.subr.mxu0 %v746
      %2164 = vmatpush1.msra.mxu0 %v745
      %2165 = vmatprep.subr.mxu0 %v754
      %2166 = vmatpush1.msra.mxu0 %v753
      %2167 = vmatprep.subr.mxu0 %v762
      %2168 = vmatpush1.msra.mxu0 %v761
      %2169 = vmatprep.subr.mxu0 %v770
      %2170 = vmatpush1.msra.mxu0 %v769
      %2171 = vmatprep.subr.mxu0 %v778
      %2172 = vmatpush1.msra.mxu0 %v777
      %2173 = vmatprep.subr.mxu0 %v786
      %2174 = vmatpush1.msra.mxu0 %v785
      %2175 = vmatprep.subr.mxu0 %v794
      %2176 = vmatpush1.msra.mxu0 %v793
      %2177 = vmatprep.subr.mxu0 %v802
      %2178 = vmatpush1.msra.mxu0 %v801
      %2179 = vmatprep.subr.mxu0 %v810
      %2180 = vmatpush1.msra.mxu0 %v809
      %2181 = vmatprep.subr.mxu0 %v818
      %2182 = vmatpush1.msra.mxu0 %v817
      %2183 = vmatprep.subr.mxu0 %v826
      %2184 = vmatpush1.msra.mxu0 %v825
      %2185 = vmatprep.subr.mxu0 %v834
      %2186 = vmatpush1.msra.mxu0 %v833
      %2187 = vmatprep.subr.mxu0 %v842
      %2188 = vmatpush1.msra.mxu0 %v841
      %2189 = vmatprep.subr.mxu0 %v850
      %2190 = vmatpush1.msra.mxu0 %v849
      %2191 = vmatprep.subr.mxu0 %v858
      %2192 = vmatpush1.msra.mxu0 %v857
      %2193 = vmatprep.subr.mxu0 %v866
      %2194 = vmatpush1.msra.mxu0 %v865
      %2195 = vmatprep.subr.mxu0 %v874
      %2196 = vmatpush1.msra.mxu0 %v873
      %2197 = vmatprep.subr.mxu0 %v882
      %2198 = vmatpush1.msra.mxu0 %v881
      %2199 = vmatprep.subr.mxu0 %v890
      %2200 = vmatpush1.msra.mxu0 %v889
      %2201 = vmatprep.subr.mxu0 %v898
      %2202 = vmatpush1.msra.mxu0 %v897
      %2203 = vmatprep.subr.mxu0 %v906
      %2204 = vmatpush1.msra.mxu0 %v905
      %2205 = vmatprep.subr.mxu0 %v914
      %2206 = vmatpush1.msra.mxu0 %v913
      %2207 = vmatprep.subr.mxu0 %v922
      %2208 = vmatpush1.msra.mxu0 %v921
      %2209 = vmatprep.subr.mxu0 %v930
      %2210 = vmatpush1.msra.mxu0 %v929
      %2211 = vmatprep.subr.mxu0 %v938
      %2212 = vmatpush1.msra.mxu0 %v937
      %2213 = vmatprep.mubr.f32.mxu0 %v231
      %2214 = vmatmul.mubr.f32.gmra.mrb[0].mxu0 %v230
      %v2215 = vpop.f32.mrb[0].mxu0
      %v2216 = vadd.f32 0.0, %v2215
      %v2217 = vpop.f32.mrb[0].mxu0
      %v2218 = vadd.f32 0.0, %v2217
      %2219 = vdwg.mxu0
      %2220 = vmatprep.subr.mxu0 %v946
      %2221 = vmatpush1.msra.mxu0 %v945
      %2222 = vmatprep.subr.mxu0 %v954
      %2223 = vmatpush1.msra.mxu0 %v953
      %2224 = vmatprep.subr.mxu0 %v962
      %2225 = vmatpush1.msra.mxu0 %v961
      %2226 = vmatprep.subr.mxu0 %v970
      %2227 = vmatpush1.msra.mxu0 %v969
      %2228 = vmatprep.subr.mxu0 %v978
      %2229 = vmatpush1.msra.mxu0 %v977
      %2230 = vmatprep.subr.mxu0 %v986
      %2231 = vmatpush1.msra.mxu0 %v985
      %2232 = vmatprep.subr.mxu0 %v994
      %2233 = vmatpush1.msra.mxu0 %v993
      %2234 = vmatprep.subr.mxu0 %v1002
      %2235 = vmatpush1.msra.mxu0 %v1001
      %2236 = vmatprep.subr.mxu0 %v1010
      %2237 = vmatpush1.msra.mxu0 %v1009
      %2238 = vmatprep.subr.mxu0 %v1018
      %2239 = vmatpush1.msra.mxu0 %v1017
      %2240 = vmatprep.subr.mxu0 %v1026
      %2241 = vmatpush1.msra.mxu0 %v1025
      %2242 = vmatprep.subr.mxu0 %v1034
      %2243 = vmatpush1.msra.mxu0 %v1033
      %2244 = vmatprep.subr.mxu0 %v1042
      %2245 = vmatpush1.msra.mxu0 %v1041
      %2246 = vmatprep.subr.mxu0 %v1050
      %2247 = vmatpush1.msra.mxu0 %v1049
      %2248 = vmatprep.subr.mxu0 %v1058
      %2249 = vmatpush1.msra.mxu0 %v1057
      %2250 = vmatprep.subr.mxu0 %v1066
      %2251 = vmatpush1.msra.mxu0 %v1065
      %2252 = vmatprep.subr.mxu0 %v1074
      %2253 = vmatpush1.msra.mxu0 %v1073
      %2254 = vmatprep.subr.mxu0 %v1082
      %2255 = vmatpush1.msra.mxu0 %v1081
      %2256 = vmatprep.subr.mxu0 %v1090
      %2257 = vmatpush1.msra.mxu0 %v1089
      %2258 = vmatprep.subr.mxu0 %v1098
      %2259 = vmatpush1.msra.mxu0 %v1097
      %2260 = vmatprep.subr.mxu0 %v1106
      %2261 = vmatpush1.msra.mxu0 %v1105
      %2262 = vmatprep.subr.mxu0 %v1114
      %2263 = vmatpush1.msra.mxu0 %v1113
      %2264 = vmatprep.subr.mxu0 %v1122
      %2265 = vmatpush1.msra.mxu0 %v1121
      %2266 = vmatprep.subr.mxu0 %v1130
      %2267 = vmatpush1.msra.mxu0 %v1129
      %2268 = vmatprep.subr.mxu0 %v1138
      %2269 = vmatpush1.msra.mxu0 %v1137
      %2270 = vmatprep.subr.mxu0 %v1146
      %2271 = vmatpush1.msra.mxu0 %v1145
      %2272 = vmatprep.subr.mxu0 %v1154
      %2273 = vmatpush1.msra.mxu0 %v1153
      %2274 = vmatprep.subr.mxu0 %v1162
      %2275 = vmatpush1.msra.mxu0 %v1161
      %2276 = vmatprep.subr.mxu0 %v1170
      %2277 = vmatpush1.msra.mxu0 %v1169
      %2278 = vmatprep.subr.mxu0 %v1178
      %2279 = vmatpush1.msra.mxu0 %v1177
      %2280 = vmatprep.subr.mxu0 %v1186
      %2281 = vmatpush1.msra.mxu0 %v1185
      %2282 = vmatprep.subr.mxu0 %v1194
      %2283 = vmatpush1.msra.mxu0 %v1193
      %2284 = vmatprep.mubr.f32.mxu0 %v233
      %2285 = vmatmul.mubr.f32.gmra.mrb[0].mxu0 %v232
      %v2286 = vpop.f32.mrb[0].mxu0
      %v2287 = vadd.f32 %v2216, %v2286
      %v2288 = vpop.f32.mrb[0].mxu0
      %v2289 = vadd.f32 %v2218, %v2288
      %2290 = vdwg.mxu0
      %2291 = vmatprep.subr.mxu0 %v1202
      %2292 = vmatpush1.msra.mxu0 %v1201
      %2293 = vmatprep.subr.mxu0 %v1210
      %2294 = vmatpush1.msra.mxu0 %v1209
      %2295 = vmatprep.subr.mxu0 %v1218
      %2296 = vmatpush1.msra.mxu0 %v1217
      %2297 = vmatprep.subr.mxu0 %v1226
      %2298 = vmatpush1.msra.mxu0 %v1225
      %2299 = vmatprep.subr.mxu0 %v1234
      %2300 = vmatpush1.msra.mxu0 %v1233
      %2301 = vmatprep.subr.mxu0 %v1242
      %2302 = vmatpush1.msra.mxu0 %v1241
      %2303 = vmatprep.subr.mxu0 %v1250
      %2304 = vmatpush1.msra.mxu0 %v1249
      %2305 = vmatprep.subr.mxu0 %v1258
      %2306 = vmatpush1.msra.mxu0 %v1257
      %2307 = vmatprep.subr.mxu0 %v1266
      %2308 = vmatpush1.msra.mxu0 %v1265
      %2309 = vmatprep.subr.mxu0 %v1274
      %2310 = vmatpush1.msra.mxu0 %v1273
      %2311 = vmatprep.subr.mxu0 %v1282
      %2312 = vmatpush1.msra.mxu0 %v1281
      %2313 = vmatprep.subr.mxu0 %v1290
      %2314 = vmatpush1.msra.mxu0 %v1289
      %2315 = vmatprep.subr.mxu0 %v1298
      %2316 = vmatpush1.msra.mxu0 %v1297
      %2317 = vmatprep.subr.mxu0 %v1306
      %2318 = vmatpush1.msra.mxu0 %v1305
      %2319 = vmatprep.subr.mxu0 %v1314
      %2320 = vmatpush1.msra.mxu0 %v1313
      %2321 = vmatprep.subr.mxu0 %v1322
      %2322 = vmatpush1.msra.mxu0 %v1321
      %2323 = vmatprep.subr.mxu0 %v1330
      %2324 = vmatpush1.msra.mxu0 %v1329
      %2325 = vmatprep.subr.mxu0 %v1338
      %2326 = vmatpush1.msra.mxu0 %v1337
      %2327 = vmatprep.subr.mxu0 %v1346
      %2328 = vmatpush1.msra.mxu0 %v1345
      %2329 = vmatprep.subr.mxu0 %v1354
      %2330 = vmatpush1.msra.mxu0 %v1353
      %2331 = vmatprep.subr.mxu0 %v1362
      %2332 = vmatpush1.msra.mxu0 %v1361
      %2333 = vmatprep.subr.mxu0 %v1370
      %2334 = vmatpush1.msra.mxu0 %v1369
      %2335 = vmatprep.subr.mxu0 %v1378
      %2336 = vmatpush1.msra.mxu0 %v1377
      %2337 = vmatprep.subr.mxu0 %v1386
      %2338 = vmatpush1.msra.mxu0 %v1385
      %2339 = vmatprep.subr.mxu0 %v1394
      %2340 = vmatpush1.msra.mxu0 %v1393
      %2341 = vmatprep.subr.mxu0 %v1402
      %2342 = vmatpush1.msra.mxu0 %v1401
      %2343 = vmatprep.subr.mxu0 %v1410
      %2344 = vmatpush1.msra.mxu0 %v1409
      %2345 = vmatprep.subr.mxu0 %v1418
      %2346 = vmatpush1.msra.mxu0 %v1417
      %2347 = vmatprep.subr.mxu0 %v1426
      %2348 = vmatpush1.msra.mxu0 %v1425
      %2349 = vmatprep.subr.mxu0 %v1434
      %2350 = vmatpush1.msra.mxu0 %v1433
      %2351 = vmatprep.subr.mxu0 %v1442
      %2352 = vmatpush1.msra.mxu0 %v1441
      %2353 = vmatprep.subr.mxu0 %v1450
      %2354 = vmatpush1.msra.mxu0 %v1449
      %2355 = vmatprep.mubr.f32.mxu0 %v235
      %2356 = vmatmul.mubr.f32.gmra.mrb[0].mxu0 %v234
      %v2357 = vpop.f32.mrb[0].mxu0
      %v2358 = vadd.f32 %v2287, %v2357
      %v2359 = vpop.f32.mrb[0].mxu0
      %v2360 = vadd.f32 %v2289, %v2359
      %2361 = vdwg.mxu0
      %2362 = vmatprep.subr.mxu0 %v1458
      %2363 = vmatpush1.msra.mxu0 %v1457
      %2364 = vmatprep.subr.mxu0 %v1466
      %2365 = vmatpush1.msra.mxu0 %v1465
      %2366 = vmatprep.subr.mxu0 %v1474
      %2367 = vmatpush1.msra.mxu0 %v1473
      %2368 = vmatprep.subr.mxu0 %v1482
      %2369 = vmatpush1.msra.mxu0 %v1481
      %2370 = vmatprep.subr.mxu0 %v1490
      %2371 = vmatpush1.msra.mxu0 %v1489
      %2372 = vmatprep.subr.mxu0 %v1498
      %2373 = vmatpush1.msra.mxu0 %v1497
      %2374 = vmatprep.subr.mxu0 %v1506
      %2375 = vmatpush1.msra.mxu0 %v1505
      %2376 = vmatprep.subr.mxu0 %v1514
      %2377 = vmatpush1.msra.mxu0 %v1513
      %2378 = vmatprep.subr.mxu0 %v1522
      %2379 = vmatpush1.msra.mxu0 %v1521
      %2380 = vmatprep.subr.mxu0 %v1530
      %2381 = vmatpush1.msra.mxu0 %v1529
      %2382 = vmatprep.subr.mxu0 %v1538
      %2383 = vmatpush1.msra.mxu0 %v1537
      %2384 = vmatprep.subr.mxu0 %v1546
      %2385 = vmatpush1.msra.mxu0 %v1545
      %2386 = vmatprep.subr.mxu0 %v1554
      %2387 = vmatpush1.msra.mxu0 %v1553
      %2388 = vmatprep.subr.mxu0 %v1562
      %2389 = vmatpush1.msra.mxu0 %v1561
      %2390 = vmatprep.subr.mxu0 %v1570
      %2391 = vmatpush1.msra.mxu0 %v1569
      %2392 = vmatprep.subr.mxu0 %v1578
      %2393 = vmatpush1.msra.mxu0 %v1577
      %2394 = vmatprep.subr.mxu0 0.0
      %2395 = vmatpush1.msra.mxu0 0.0
      %2396 = vmatprep.subr.mxu0 0.0
      %2397 = vmatpush1.msra.mxu0 0.0
      %2398 = vmatprep.subr.mxu0 0.0
      %2399 = vmatpush1.msra.mxu0 0.0
      %2400 = vmatprep.subr.mxu0 0.0
      %2401 = vmatpush1.msra.mxu0 0.0
      %2402 = vmatprep.subr.mxu0 0.0
      %2403 = vmatpush1.msra.mxu0 0.0
      %2404 = vmatprep.subr.mxu0 0.0
      %2405 = vmatpush1.msra.mxu0 0.0
      %2406 = vmatprep.subr.mxu0 0.0
      %2407 = vmatpush1.msra.mxu0 0.0
      %2408 = vmatprep.subr.mxu0 0.0
      %2409 = vmatpush1.msra.mxu0 0.0
      %2410 = vmatprep.subr.mxu0 0.0
      %2411 = vmatpush1.msra.mxu0 0.0
      %2412 = vmatprep.subr.mxu0 0.0
      %2413 = vmatpush1.msra.mxu0 0.0
      %2414 = vmatprep.subr.mxu0 0.0
      %2415 = vmatpush1.msra.mxu0 0.0
      %2416 = vmatprep.subr.mxu0 0.0
      %2417 = vmatpush1.msra.mxu0 0.0
      %2418 = vmatprep.subr.mxu0 0.0
      %2419 = vmatpush1.msra.mxu0 0.0
      %2420 = vmatprep.subr.mxu0 0.0
      %2421 = vmatpush1.msra.mxu0 0.0
      %2422 = vmatprep.subr.mxu0 0.0
      %2423 = vmatpush1.msra.mxu0 0.0
      %2424 = vmatprep.subr.mxu0 0.0
      %2425 = vmatpush1.msra.mxu0 0.0
      %2426 = vmatprep.mubr.f32.mxu0 0.0
      %2427 = vmatmul.mubr.f32.gmra.mrb[0].mxu0 %v236
      %v2428 = vpop.f32.mrb[0].mxu0
      %v2429 = vadd.f32 %v2358, %v2428
      %v2430 = vpop.f32.mrb[0].mxu0
      %v2431 = vadd.f32 %v2360, %v2430
      %2432 = vdwg.mxu0
      %2433 = vmatprep.subr.mxu0 %v692
      %2434 = vmatpush1.msra.mxu0 %v691
      %2435 = vmatprep.subr.mxu0 %v700
      %2436 = vmatpush1.msra.mxu0 %v699
      %2437 = vmatprep.subr.mxu0 %v708
      %2438 = vmatpush1.msra.mxu0 %v707
      %2439 = vmatprep.subr.mxu0 %v716
      %2440 = vmatpush1.msra.mxu0 %v715
      %2441 = vmatprep.subr.mxu0 %v724
      %2442 = vmatpush1.msra.mxu0 %v723
      %2443 = vmatprep.subr.mxu0 %v732
      %2444 = vmatpush1.msra.mxu0 %v731
      %2445 = vmatprep.subr.mxu0 %v740
      %2446 = vmatpush1.msra.mxu0 %v739
      %2447 = vmatprep.subr.mxu0 %v748
      %2448 = vmatpush1.msra.mxu0 %v747
      %2449 = vmatprep.subr.mxu0 %v756
      %2450 = vmatpush1.msra.mxu0 %v755
      %2451 = vmatprep.subr.mxu0 %v764
      %2452 = vmatpush1.msra.mxu0 %v763
      %2453 = vmatprep.subr.mxu0 %v772
      %2454 = vmatpush1.msra.mxu0 %v771
      %2455 = vmatprep.subr.mxu0 %v780
      %2456 = vmatpush1.msra.mxu0 %v779
      %2457 = vmatprep.subr.mxu0 %v788
      %2458 = vmatpush1.msra.mxu0 %v787
      %2459 = vmatprep.subr.mxu0 %v796
      %2460 = vmatpush1.msra.mxu0 %v795
      %2461 = vmatprep.subr.mxu0 %v804
      %2462 = vmatpush1.msra.mxu0 %v803
      %2463 = vmatprep.subr.mxu0 %v812
      %2464 = vmatpush1.msra.mxu0 %v811
      %2465 = vmatprep.subr.mxu0 %v820
      %2466 = vmatpush1.msra.mxu0 %v819
      %2467 = vmatprep.subr.mxu0 %v828
      %2468 = vmatpush1.msra.mxu0 %v827
      %2469 = vmatprep.subr.mxu0 %v836
      %2470 = vmatpush1.msra.mxu0 %v835
      %2471 = vmatprep.subr.mxu0 %v844
      %2472 = vmatpush1.msra.mxu0 %v843
      %2473 = vmatprep.subr.mxu0 %v852
      %2474 = vmatpush1.msra.mxu0 %v851
      %2475 = vmatprep.subr.mxu0 %v860
      %2476 = vmatpush1.msra.mxu0 %v859
      %2477 = vmatprep.subr.mxu0 %v868
      %2478 = vmatpush1.msra.mxu0 %v867
      %2479 = vmatprep.subr.mxu0 %v876
      %2480 = vmatpush1.msra.mxu0 %v875
      %2481 = vmatprep.subr.mxu0 %v884
      %2482 = vmatpush1.msra.mxu0 %v883
      %2483 = vmatprep.subr.mxu0 %v892
      %2484 = vmatpush1.msra.mxu0 %v891
      %2485 = vmatprep.subr.mxu0 %v900
      %2486 = vmatpush1.msra.mxu0 %v899
      %2487 = vmatprep.subr.mxu0 %v908
      %2488 = vmatpush1.msra.mxu0 %v907
      %2489 = vmatprep.subr.mxu0 %v916
      %2490 = vmatpush1.msra.mxu0 %v915
      %2491 = vmatprep.subr.mxu0 %v924
      %2492 = vmatpush1.msra.mxu0 %v923
      %2493 = vmatprep.subr.mxu0 %v932
      %2494 = vmatpush1.msra.mxu0 %v931
      %2495 = vmatprep.subr.mxu0 %v940
      %2496 = vmatpush1.msra.mxu0 %v939
      %2497 = vmatprep.mubr.f32.mxu0 %v231
      %2498 = vmatmul.mubr.f32.gmra.mrb[0].mxu0 %v230
      %v2499 = vpop.f32.mrb[0].mxu0
      %v2500 = vadd.f32 0.0, %v2499
      %v2501 = vpop.f32.mrb[0].mxu0
      %v2502 = vadd.f32 0.0, %v2501
      %2503 = vdwg.mxu0
      %2504 = vmatprep.subr.mxu0 %v948
      %2505 = vmatpush1.msra.mxu0 %v947
      %2506 = vmatprep.subr.mxu0 %v956
      %2507 = vmatpush1.msra.mxu0 %v955
      %2508 = vmatprep.subr.mxu0 %v964
      %2509 = vmatpush1.msra.mxu0 %v963
      %2510 = vmatprep.subr.mxu0 %v972
      %2511 = vmatpush1.msra.mxu0 %v971
      %2512 = vmatprep.subr.mxu0 %v980
      %2513 = vmatpush1.msra.mxu0 %v979
      %2514 = vmatprep.subr.mxu0 %v988
      %2515 = vmatpush1.msra.mxu0 %v987
      %2516 = vmatprep.subr.mxu0 %v996
      %2517 = vmatpush1.msra.mxu0 %v995
      %2518 = vmatprep.subr.mxu0 %v1004
      %2519 = vmatpush1.msra.mxu0 %v1003
      %2520 = vmatprep.subr.mxu0 %v1012
      %2521 = vmatpush1.msra.mxu0 %v1011
      %2522 = vmatprep.subr.mxu0 %v1020
      %2523 = vmatpush1.msra.mxu0 %v1019
      %2524 = vmatprep.subr.mxu0 %v1028
      %2525 = vmatpush1.msra.mxu0 %v1027
      %2526 = vmatprep.subr.mxu0 %v1036
      %2527 = vmatpush1.msra.mxu0 %v1035
      %2528 = vmatprep.subr.mxu0 %v1044
      %2529 = vmatpush1.msra.mxu0 %v1043
      %2530 = vmatprep.subr.mxu0 %v1052
      %2531 = vmatpush1.msra.mxu0 %v1051
      %2532 = vmatprep.subr.mxu0 %v1060
      %2533 = vmatpush1.msra.mxu0 %v1059
      %2534 = vmatprep.subr.mxu0 %v1068
      %2535 = vmatpush1.msra.mxu0 %v1067
      %2536 = vmatprep.subr.mxu0 %v1076
      %2537 = vmatpush1.msra.mxu0 %v1075
      %2538 = vmatprep.subr.mxu0 %v1084
      %2539 = vmatpush1.msra.mxu0 %v1083
      %2540 = vmatprep.subr.mxu0 %v1092
      %2541 = vmatpush1.msra.mxu0 %v1091
      %2542 = vmatprep.subr.mxu0 %v1100
      %2543 = vmatpush1.msra.mxu0 %v1099
      %2544 = vmatprep.subr.mxu0 %v1108
      %2545 = vmatpush1.msra.mxu0 %v1107
      %2546 = vmatprep.subr.mxu0 %v1116
      %2547 = vmatpush1.msra.mxu0 %v1115
      %2548 = vmatprep.subr.mxu0 %v1124
      %2549 = vmatpush1.msra.mxu0 %v1123
      %2550 = vmatprep.subr.mxu0 %v1132
      %2551 = vmatpush1.msra.mxu0 %v1131
      %2552 = vmatprep.subr.mxu0 %v1140
      %2553 = vmatpush1.msra.mxu0 %v1139
      %2554 = vmatprep.subr.mxu0 %v1148
      %2555 = vmatpush1.msra.mxu0 %v1147
      %2556 = vmatprep.subr.mxu0 %v1156
      %2557 = vmatpush1.msra.mxu0 %v1155
      %2558 = vmatprep.subr.mxu0 %v1164
      %2559 = vmatpush1.msra.mxu0 %v1163
      %2560 = vmatprep.subr.mxu0 %v1172
      %2561 = vmatpush1.msra.mxu0 %v1171
      %2562 = vmatprep.subr.mxu0 %v1180
      %2563 = vmatpush1.msra.mxu0 %v1179
      %2564 = vmatprep.subr.mxu0 %v1188
      %2565 = vmatpush1.msra.mxu0 %v1187
      %2566 = vmatprep.subr.mxu0 %v1196
      %2567 = vmatpush1.msra.mxu0 %v1195
      %2568 = vmatprep.mubr.f32.mxu0 %v233
      %2569 = vmatmul.mubr.f32.gmra.mrb[0].mxu0 %v232
      %v2570 = vpop.f32.mrb[0].mxu0
      %v2571 = vadd.f32 %v2500, %v2570
      %v2572 = vpop.f32.mrb[0].mxu0
      %v2573 = vadd.f32 %v2502, %v2572
      %2574 = vdwg.mxu0
      %2575 = vmatprep.subr.mxu0 %v1204
      %2576 = vmatpush1.msra.mxu0 %v1203
      %2577 = vmatprep.subr.mxu0 %v1212
      %2578 = vmatpush1.msra.mxu0 %v1211
      %2579 = vmatprep.subr.mxu0 %v1220
      %2580 = vmatpush1.msra.mxu0 %v1219
      %2581 = vmatprep.subr.mxu0 %v1228
      %2582 = vmatpush1.msra.mxu0 %v1227
      %2583 = vmatprep.subr.mxu0 %v1236
      %2584 = vmatpush1.msra.mxu0 %v1235
      %2585 = vmatprep.subr.mxu0 %v1244
      %2586 = vmatpush1.msra.mxu0 %v1243
      %2587 = vmatprep.subr.mxu0 %v1252
      %2588 = vmatpush1.msra.mxu0 %v1251
      %2589 = vmatprep.subr.mxu0 %v1260
      %2590 = vmatpush1.msra.mxu0 %v1259
      %2591 = vmatprep.subr.mxu0 %v1268
      %2592 = vmatpush1.msra.mxu0 %v1267
      %2593 = vmatprep.subr.mxu0 %v1276
      %2594 = vmatpush1.msra.mxu0 %v1275
      %2595 = vmatprep.subr.mxu0 %v1284
      %2596 = vmatpush1.msra.mxu0 %v1283
      %2597 = vmatprep.subr.mxu0 %v1292
      %2598 = vmatpush1.msra.mxu0 %v1291
      %2599 = vmatprep.subr.mxu0 %v1300
      %2600 = vmatpush1.msra.mxu0 %v1299
      %2601 = vmatprep.subr.mxu0 %v1308
      %2602 = vmatpush1.msra.mxu0 %v1307
      %2603 = vmatprep.subr.mxu0 %v1316
      %2604 = vmatpush1.msra.mxu0 %v1315
      %2605 = vmatprep.subr.mxu0 %v1324
      %2606 = vmatpush1.msra.mxu0 %v1323
      %2607 = vmatprep.subr.mxu0 %v1332
      %2608 = vmatpush1.msra.mxu0 %v1331
      %2609 = vmatprep.subr.mxu0 %v1340
      %2610 = vmatpush1.msra.mxu0 %v1339
      %2611 = vmatprep.subr.mxu0 %v1348
      %2612 = vmatpush1.msra.mxu0 %v1347
      %2613 = vmatprep.subr.mxu0 %v1356
      %2614 = vmatpush1.msra.mxu0 %v1355
      %2615 = vmatprep.subr.mxu0 %v1364
      %2616 = vmatpush1.msra.mxu0 %v1363
      %2617 = vmatprep.subr.mxu0 %v1372
      %2618 = vmatpush1.msra.mxu0 %v1371
      %2619 = vmatprep.subr.mxu0 %v1380
      %2620 = vmatpush1.msra.mxu0 %v1379
      %2621 = vmatprep.subr.mxu0 %v1388
      %2622 = vmatpush1.msra.mxu0 %v1387
      %2623 = vmatprep.subr.mxu0 %v1396
      %2624 = vmatpush1.msra.mxu0 %v1395
      %2625 = vmatprep.subr.mxu0 %v1404
      %2626 = vmatpush1.msra.mxu0 %v1403
      %2627 = vmatprep.subr.mxu0 %v1412
      %2628 = vmatpush1.msra.mxu0 %v1411
      %2629 = vmatprep.subr.mxu0 %v1420
      %2630 = vmatpush1.msra.mxu0 %v1419
      %2631 = vmatprep.subr.mxu0 %v1428
      %2632 = vmatpush1.msra.mxu0 %v1427
      %2633 = vmatprep.subr.mxu0 %v1436
      %2634 = vmatpush1.msra.mxu0 %v1435
      %2635 = vmatprep.subr.mxu0 %v1444
      %2636 = vmatpush1.msra.mxu0 %v1443
      %2637 = vmatprep.subr.mxu0 %v1452
      %2638 = vmatpush1.msra.mxu0 %v1451
      %2639 = vmatprep.mubr.f32.mxu0 %v235
      %2640 = vmatmul.mubr.f32.gmra.mrb[0].mxu0 %v234
      %v2641 = vpop.f32.mrb[0].mxu0
      %v2642 = vadd.f32 %v2571, %v2641
      %v2643 = vpop.f32.mrb[0].mxu0
      %v2644 = vadd.f32 %v2573, %v2643
      %2645 = vdwg.mxu0
      %2646 = vmatprep.subr.mxu0 %v1460
      %2647 = vmatpush1.msra.mxu0 %v1459
      %2648 = vmatprep.subr.mxu0 %v1468
      %2649 = vmatpush1.msra.mxu0 %v1467
      %2650 = vmatprep.subr.mxu0 %v1476
      %2651 = vmatpush1.msra.mxu0 %v1475
      %2652 = vmatprep.subr.mxu0 %v1484
      %2653 = vmatpush1.msra.mxu0 %v1483
      %2654 = vmatprep.subr.mxu0 %v1492
      %2655 = vmatpush1.msra.mxu0 %v1491
      %2656 = vmatprep.subr.mxu0 %v1500
      %2657 = vmatpush1.msra.mxu0 %v1499
      %2658 = vmatprep.subr.mxu0 %v1508
      %2659 = vmatpush1.msra.mxu0 %v1507
      %2660 = vmatprep.subr.mxu0 %v1516
      %2661 = vmatpush1.msra.mxu0 %v1515
      %2662 = vmatprep.subr.mxu0 %v1524
      %2663 = vmatpush1.msra.mxu0 %v1523
      %2664 = vmatprep.subr.mxu0 %v1532
      %2665 = vmatpush1.msra.mxu0 %v1531
      %2666 = vmatprep.subr.mxu0 %v1540
      %2667 = vmatpush1.msra.mxu0 %v1539
      %2668 = vmatprep.subr.mxu0 %v1548
      %2669 = vmatpush1.msra.mxu0 %v1547
      %2670 = vmatprep.subr.mxu0 %v1556
      %2671 = vmatpush1.msra.mxu0 %v1555
      %2672 = vmatprep.subr.mxu0 %v1564
      %2673 = vmatpush1.msra.mxu0 %v1563
      %2674 = vmatprep.subr.mxu0 %v1572
      %2675 = vmatpush1.msra.mxu0 %v1571
      %2676 = vmatprep.subr.mxu0 %v1580
      %2677 = vmatpush1.msra.mxu0 %v1579
      %2678 = vmatprep.subr.mxu0 0.0
      %2679 = vmatpush1.msra.mxu0 0.0
      %2680 = vmatprep.subr.mxu0 0.0
      %2681 = vmatpush1.msra.mxu0 0.0
      %2682 = vmatprep.subr.mxu0 0.0
      %2683 = vmatpush1.msra.mxu0 0.0
      %2684 = vmatprep.subr.mxu0 0.0
      %2685 = vmatpush1.msra.mxu0 0.0
      %2686 = vmatprep.subr.mxu0 0.0
      %2687 = vmatpush1.msra.mxu0 0.0
      %2688 = vmatprep.subr.mxu0 0.0
      %2689 = vmatpush1.msra.mxu0 0.0
      %2690 = vmatprep.subr.mxu0 0.0
      %2691 = vmatpush1.msra.mxu0 0.0
      %2692 = vmatprep.subr.mxu0 0.0
      %2693 = vmatpush1.msra.mxu0 0.0
      %2694 = vmatprep.subr.mxu0 0.0
      %2695 = vmatpush1.msra.mxu0 0.0
      %2696 = vmatprep.subr.mxu0 0.0
      %2697 = vmatpush1.msra.mxu0 0.0
      %2698 = vmatprep.subr.mxu0 0.0
      %2699 = vmatpush1.msra.mxu0 0.0
      %2700 = vmatprep.subr.mxu0 0.0
      %2701 = vmatpush1.msra.mxu0 0.0
      %2702 = vmatprep.subr.mxu0 0.0
      %2703 = vmatpush1.msra.mxu0 0.0
      %2704 = vmatprep.subr.mxu0 0.0
      %2705 = vmatpush1.msra.mxu0 0.0
      %2706 = vmatprep.subr.mxu0 0.0
      %2707 = vmatpush1.msra.mxu0 0.0
      %2708 = vmatprep.subr.mxu0 0.0
      %2709 = vmatpush1.msra.mxu0 0.0
      %2710 = vmatprep.mubr.f32.mxu0 0.0
      %2711 = vmatmul.mubr.f32.gmra.mrb[0].mxu0 %v236
      %v2712 = vpop.f32.mrb[0].mxu0
      %v2713 = vadd.f32 %v2642, %v2712
      %v2714 = vpop.f32.mrb[0].mxu0
      %v2715 = vadd.f32 %v2644, %v2714
      %2716 = vdwg.mxu0
      %v2717 = vadd.f32 %v222, %v1861
      %v2718 = vadd.f32 %v223, %v1863
      %v2719 = vadd.f32 %v224, %v2145
      %v2720 = vadd.f32 %v225, %v2147
      %v2721 = vadd.f32 %v226, %v2429
      %v2722 = vadd.f32 %v227, %v2431
      %v2723 = vadd.f32 %v228, %v2713
      %v2724 = vadd.f32 %v229, %v2715
      %2725 = vst [vmem:[%s4] sm:$0xff] %v2717
      %2726 = vst [vmem:[%s4 + $0x8] sm:$0xff] %v2718
      %2727 = vst [vmem:[%s4 + $0x10] sm:$0xff] %v2719
      %2728 = vst [vmem:[%s4 + $0x18] sm:$0xff] %v2720
      %2729 = vst [vmem:[%s4 + $0x20] sm:$0xff] %v2721
      %2730 = vst [vmem:[%s4 + $0x28] sm:$0xff] %v2722
      %2731 = vst [vmem:[%s4 + $0x30] sm:$0xff] %v2723
      %2732 = vst [vmem:[%s4 + $0x38] sm:$0xff] %v2724
      %p2733 = scmp.eq.s32.totalorder %s15, 6
      // Predicated region
      $region41: #{discriminator_forward.5} parent=35 // pred_check
        %p2734 = pneg %p2733
      $region42: #{discriminator_forward.5} parent=35 // pred_check_branch
        %2736 = sbr.rel (%p2734) target = $region44
      $region43: #{discriminator_forward.5} parent=35 // pred_region
        %v2737 = vld [vmem:[%s4] sm:$0xff]
        %v2738 = vld [vmem:[%s4 + $0x8] sm:$0xff]
        %v2739 = vld [vmem:[%s4 + $0x10] sm:$0xff]
        %v2740 = vld [vmem:[%s4 + $0x18] sm:$0xff]
        %v2741 = vld [vmem:[%s4 + $0x20] sm:$0xff]
        %v2742 = vld [vmem:[%s4 + $0x28] sm:$0xff]
        %v2743 = vld [vmem:[%s4 + $0x30] sm:$0xff]
        %v2744 = vld [vmem:[%s4 + $0x38] sm:$0xff]
        %v2745 = vrot.slane %v2737, 4
        %v2746 = vadd.f32 %v2737, %v2745
        %v2747 = vrot.slane %v2746, 2
        %v2748 = vadd.f32 %v2746, %v2747
        %v2749 = vrot.slane %v2748, 1
        %v2750 = vadd.f32 %v2748, %v2749
        %v2751 = vrot.slane %v2738, 4
        %v2752 = vadd.f32 %v2738, %v2751
        %v2753 = vrot.slane %v2752, 2
        %v2754 = vadd.f32 %v2752, %v2753
        %v2755 = vrot.slane %v2754, 1
        %v2756 = vadd.f32 %v2754, %v2755
        %v2757 = vrot.slane %v2739, 4
        %v2758 = vadd.f32 %v2739, %v2757
        %v2759 = vrot.slane %v2758, 2
        %v2760 = vadd.f32 %v2758, %v2759
        %v2761 = vrot.slane %v2760, 1
        %v2762 = vadd.f32 %v2760, %v2761
        %v2763 = vrot.slane %v2740, 4
        %v2764 = vadd.f32 %v2740, %v2763
        %v2765 = vrot.slane %v2764, 2
        %v2766 = vadd.f32 %v2764, %v2765
        %v2767 = vrot.slane %v2766, 1
        %v2768 = vadd.f32 %v2766, %v2767
        %v2769 = vrot.slane %v2741, 4
        %v2770 = vadd.f32 %v2741, %v2769
        %v2771 = vrot.slane %v2770, 2
        %v2772 = vadd.f32 %v2770, %v2771
        %v2773 = vrot.slane %v2772, 1
        %v2774 = vadd.f32 %v2772, %v2773
        %v2775 = vrot.slane %v2742, 4
        %v2776 = vadd.f32 %v2742, %v2775
        %v2777 = vrot.slane %v2776, 2
        %v2778 = vadd.f32 %v2776, %v2777
        %v2779 = vrot.slane %v2778, 1
        %v2780 = vadd.f32 %v2778, %v2779
        %v2781 = vrot.slane %v2743, 4
        %v2782 = vadd.f32 %v2743, %v2781
        %v2783 = vrot.slane %v2782, 2
        %v2784 = vadd.f32 %v2782, %v2783
        %v2785 = vrot.slane %v2784, 1
        %v2786 = vadd.f32 %v2784, %v2785
        %v2787 = vrot.slane %v2744, 4
        %v2788 = vadd.f32 %v2744, %v2787
        %v2789 = vrot.slane %v2788, 2
        %v2790 = vadd.f32 %v2788, %v2789
        %v2791 = vrot.slane %v2790, 1
        %v2792 = vadd.f32 %v2790, %v2791
        %v2793 = vmul.f32 %v2750, 0.5
        %v2794 = vmul.f32 %v2756, 0.5
        %v2795 = vmul.f32 %v2762, 0.5
        %v2796 = vmul.f32 %v2768, 0.5
        %v2797 = vmul.f32 %v2774, 0.5
        %v2798 = vmul.f32 %v2780, 0.5
        %v2799 = vmul.f32 %v2786, 0.5
        %v2800 = vmul.f32 %v2792, 0.5
        %v2801 = vmul.f32 %v2737, %v2737
        %v2802 = vmul.f32 %v2738, %v2738
        %v2803 = vmul.f32 %v2739, %v2739
        %v2804 = vmul.f32 %v2740, %v2740
        %v2805 = vmul.f32 %v2741, %v2741
        %v2806 = vmul.f32 %v2742, %v2742
        %v2807 = vmul.f32 %v2743, %v2743
        %v2808 = vmul.f32 %v2744, %v2744
        %v2809 = vrot.slane %v2801, 4
        %v2810 = vadd.f32 %v2801, %v2809
        %v2811 = vrot.slane %v2810, 2
        %v2812 = vadd.f32 %v2810, %v2811
        %v2813 = vrot.slane %v2812, 1
        %v2814 = vadd.f32 %v2812, %v2813
        %v2815 = vrot.slane %v2802, 4
        %v2816 = vadd.f32 %v2802, %v2815
        %v2817 = vrot.slane %v2816, 2
        %v2818 = vadd.f32 %v2816, %v2817
        %v2819 = vrot.slane %v2818, 1
        %v2820 = vadd.f32 %v2818, %v2819
        %v2821 = vrot.slane %v2803, 4
        %v2822 = vadd.f32 %v2803, %v2821
        %v2823 = vrot.slane %v2822, 2
        %v2824 = vadd.f32 %v2822, %v2823
        %v2825 = vrot.slane %v2824, 1
        %v2826 = vadd.f32 %v2824, %v2825
        %v2827 = vrot.slane %v2804, 4
        %v2828 = vadd.f32 %v2804, %v2827
        %v2829 = vrot.slane %v2828, 2
        %v2830 = vadd.f32 %v2828, %v2829
        %v2831 = vrot.slane %v2830, 1
        %v2832 = vadd.f32 %v2830, %v2831
        %v2833 = vrot.slane %v2805, 4
        %v2834 = vadd.f32 %v2805, %v2833
        %v2835 = vrot.slane %v2834, 2
        %v2836 = vadd.f32 %v2834, %v2835
        %v2837 = vrot.slane %v2836, 1
        %v2838 = vadd.f32 %v2836, %v2837
        %v2839 = vrot.slane %v2806, 4
        %v2840 = vadd.f32 %v2806, %v2839
        %v2841 = vrot.slane %v2840, 2
        %v2842 = vadd.f32 %v2840, %v2841
        %v2843 = vrot.slane %v2842, 1
        %v2844 = vadd.f32 %v2842, %v2843
        %v2845 = vrot.slane %v2807, 4
        %v2846 = vadd.f32 %v2807, %v2845
        %v2847 = vrot.slane %v2846, 2
        %v2848 = vadd.f32 %v2846, %v2847
        %v2849 = vrot.slane %v2848, 1
        %v2850 = vadd.f32 %v2848, %v2849
        %v2851 = vrot.slane %v2808, 4
        %v2852 = vadd.f32 %v2808, %v2851
        %v2853 = vrot.slane %v2852, 2
        %v2854 = vadd.f32 %v2852, %v2853
        %v2855 = vrot.slane %v2854, 1
        %v2856 = vadd.f32 %v2854, %v2855
        %v2857 = vmul.f32 %v2814, 0.5
        %v2858 = vmul.f32 %v2820, 0.5
        %v2859 = vmul.f32 %v2826, 0.5
        %v2860 = vmul.f32 %v2832, 0.5
        %v2861 = vmul.f32 %v2838, 0.5
        %v2862 = vmul.f32 %v2844, 0.5
        %v2863 = vmul.f32 %v2850, 0.5
        %v2864 = vmul.f32 %v2856, 0.5
        %v2865 = vmul.f32 %v2793, %v2793
        %v2866 = vmul.f32 %v2794, %v2794
        %v2867 = vmul.f32 %v2795, %v2795
        %v2868 = vmul.f32 %v2796, %v2796
        %v2869 = vmul.f32 %v2797, %v2797
        %v2870 = vmul.f32 %v2798, %v2798
        %v2871 = vmul.f32 %v2799, %v2799
        %v2872 = vmul.f32 %v2800, %v2800
        %v2873 = vsub.f32 %v2857, %v2865
        %v2874 = vsub.f32 %v2858, %v2866
        %v2875 = vsub.f32 %v2859, %v2867
        %v2876 = vsub.f32 %v2860, %v2868
        %v2877 = vsub.f32 %v2861, %v2869
        %v2878 = vsub.f32 %v2862, %v2870
        %v2879 = vsub.f32 %v2863, %v2871
        %v2880 = vsub.f32 %v2864, %v2872
        %v2881 = vmax.f32 %v2873, 0.0
        %v2882 = vmax.f32 %v2874, 0.0
        %v2883 = vmax.f32 %v2875, 0.0
        %v2884 = vmax.f32 %v2876, 0.0
        %v2885 = vmax.f32 %v2877, 0.0
        %v2886 = vmax.f32 %v2878, 0.0
        %v2887 = vmax.f32 %v2879, 0.0
        %v2888 = vmax.f32 %v2880, 0.0
        %v2889 = vadd.f32 %v2881, 1e-05
        %v2890 = vadd.f32 %v2882, 1e-05
        %v2891 = vadd.f32 %v2883, 1e-05
        %v2892 = vadd.f32 %v2884, 1e-05
        %v2893 = vadd.f32 %v2885, 1e-05
        %v2894 = vadd.f32 %v2886, 1e-05
        %v2895 = vadd.f32 %v2887, 1e-05
        %v2896 = vadd.f32 %v2888, 1e-05
        %v2897 = vrsqrt.pop %v2889
        %v2898 = vrsqrt.pop %v2890
        %v2899 = vrsqrt.pop %v2891
        %v2900 = vrsqrt.pop %v2892
        %v2901 = vrsqrt.pop %v2893
        %v2902 = vrsqrt.pop %v2894
        %v2903 = vrsqrt.pop %v2895
        %v2904 = vrsqrt.pop %v2896
        %v2905 = vld [vmem:[%s2] sm:$0xff]
        %v2914 = vcombine.low %v2897, %v2898
        %v2915 = vcombine.low %v2899, %v2900
        %v2916 = vcombine.low %v2901, %v2902
        %v2917 = vcombine.low %v2903, %v2904
        %v2919 = vunpack.c.l.s4 1966171168
        %v2920 = vunpack.c.0.s8 %v2919
        %v2921 = vlaneseq
        %v2922 = vshrl.u32 %v2921, 7
        %v2923 = vsub.s32 %v2920, %v2922
        %v2924 = vrot.slane %v2914, %v2923
        %v2926 = vunpack.c.l.s4 1966171168
        %v2927 = vunpack.c.0.s8 %v2926
        %v2928 = vlaneseq
        %v2929 = vshrl.u32 %v2928, 7
        %v2930 = vsub.s32 %v2927, %v2929
        %v2931 = vrot.slane %v2915, %v2930
        %v2933 = vunpack.c.l.s4 1966171168
        %v2934 = vunpack.c.0.s8 %v2933
        %v2935 = vlaneseq
        %v2936 = vshrl.u32 %v2935, 7
        %v2937 = vsub.s32 %v2934, %v2936
        %v2938 = vrot.slane %v2916, %v2937
        %v2940 = vunpack.c.l.s4 1966171168
        %v2941 = vunpack.c.0.s8 %v2940
        %v2942 = vlaneseq
        %v2943 = vshrl.u32 %v2942, 7
        %v2944 = vsub.s32 %v2941, %v2943
        %v2945 = vrot.slane %v2917, %v2944
        %v2946 = vcombine.low %v2924, %v2931
        %v2947 = vcombine.low %v2938, %v2945
        %v2949 = vunpack.c.l.s4 1966171168
        %v2950 = vunpack.c.0.s8 %v2949
        %v2951 = vlaneseq
        %v2952 = vshrl.u32 %v2951, 7
        %v2953 = vsub.s32 %v2950, %v2952
        %v2954 = vrot.slane %v2946, %v2953
        %v2956 = vunpack.c.l.s4 1966171168
        %v2957 = vunpack.c.0.s8 %v2956
        %v2958 = vlaneseq
        %v2959 = vshrl.u32 %v2958, 7
        %v2960 = vsub.s32 %v2957, %v2959
        %v2961 = vrot.slane %v2947, %v2960
        %v2962 = vcombine.low %v2954, %v2961
        %v2964 = vmul.f32 %v2905, %v2962
        %v2965 = vld [vmem:[%s3] sm:$0xff]
        %v2967 = vlaneseq
        %v2968 = vshrl.u32 %v2967, 7
        %v2969 = vsub.s32 0, %v2968
        %v2970 = vrot.slane %v2964, %v2969
        %v2971 = vlaneseq
        %v2972 = vshrl.u32 %v2971, 7
        %v2973 = vsub.s32 1, %v2972
        %v2974 = vrot.slane %v2964, %v2973
        %v2975 = vlaneseq
        %v2976 = vshrl.u32 %v2975, 7
        %v2977 = vsub.s32 2, %v2976
        %v2978 = vrot.slane %v2964, %v2977
        %v2979 = vlaneseq
        %v2980 = vshrl.u32 %v2979, 7
        %v2981 = vsub.s32 3, %v2980
        %v2982 = vrot.slane %v2964, %v2981
        %v2983 = vlaneseq
        %v2984 = vshrl.u32 %v2983, 7
        %v2985 = vsub.s32 4, %v2984
        %v2986 = vrot.slane %v2964, %v2985
        %v2987 = vlaneseq
        %v2988 = vshrl.u32 %v2987, 7
        %v2989 = vsub.s32 5, %v2988
        %v2990 = vrot.slane %v2964, %v2989
        %v2991 = vlaneseq
        %v2992 = vshrl.u32 %v2991, 7
        %v2993 = vsub.s32 6, %v2992
        %v2994 = vrot.slane %v2964, %v2993
        %v2995 = vlaneseq
        %v2996 = vshrl.u32 %v2995, 7
        %v2997 = vsub.s32 7, %v2996
        %v2998 = vrot.slane %v2964, %v2997
        %v3007 = vmul.f32 %v2793, %v2970
        %v3008 = vmul.f32 %v2794, %v2974
        %v3009 = vmul.f32 %v2795, %v2978
        %v3010 = vmul.f32 %v2796, %v2982
        %v3011 = vmul.f32 %v2797, %v2986
        %v3012 = vmul.f32 %v2798, %v2990
        %v3013 = vmul.f32 %v2799, %v2994
        %v3014 = vmul.f32 %v2800, %v2998
        %v3023 = vcombine.low %v3007, %v3008
        %v3024 = vcombine.low %v3009, %v3010
        %v3025 = vcombine.low %v3011, %v3012
        %v3026 = vcombine.low %v3013, %v3014
        %v3028 = vunpack.c.l.s4 1966171168
        %v3029 = vunpack.c.0.s8 %v3028
        %v3030 = vlaneseq
        %v3031 = vshrl.u32 %v3030, 7
        %v3032 = vsub.s32 %v3029, %v3031
        %v3033 = vrot.slane %v3023, %v3032
        %v3035 = vunpack.c.l.s4 1966171168
        %v3036 = vunpack.c.0.s8 %v3035
        %v3037 = vlaneseq
        %v3038 = vshrl.u32 %v3037, 7
        %v3039 = vsub.s32 %v3036, %v3038
        %v3040 = vrot.slane %v3024, %v3039
        %v3042 = vunpack.c.l.s4 1966171168
        %v3043 = vunpack.c.0.s8 %v3042
        %v3044 = vlaneseq
        %v3045 = vshrl.u32 %v3044, 7
        %v3046 = vsub.s32 %v3043, %v3045
        %v3047 = vrot.slane %v3025, %v3046
        %v3049 = vunpack.c.l.s4 1966171168
        %v3050 = vunpack.c.0.s8 %v3049
        %v3051 = vlaneseq
        %v3052 = vshrl.u32 %v3051, 7
        %v3053 = vsub.s32 %v3050, %v3052
        %v3054 = vrot.slane %v3026, %v3053
        %v3055 = vcombine.low %v3033, %v3040
        %v3056 = vcombine.low %v3047, %v3054
        %v3058 = vunpack.c.l.s4 1966171168
        %v3059 = vunpack.c.0.s8 %v3058
        %v3060 = vlaneseq
        %v3061 = vshrl.u32 %v3060, 7
        %v3062 = vsub.s32 %v3059, %v3061
        %v3063 = vrot.slane %v3055, %v3062
        %v3065 = vunpack.c.l.s4 1966171168
        %v3066 = vunpack.c.0.s8 %v3065
        %v3067 = vlaneseq
        %v3068 = vshrl.u32 %v3067, 7
        %v3069 = vsub.s32 %v3066, %v3068
        %v3070 = vrot.slane %v3056, %v3069
        %v3071 = vcombine.low %v3063, %v3070
        %v3073 = vsub.f32 %v2965, %v3071
        %v3074 = vmul.f32 %v2737, %v2970
        %v3075 = vmul.f32 %v2738, %v2974
        %v3076 = vmul.f32 %v2739, %v2978
        %v3077 = vmul.f32 %v2740, %v2982
        %v3078 = vmul.f32 %v2741, %v2986
        %v3079 = vmul.f32 %v2742, %v2990
        %v3080 = vmul.f32 %v2743, %v2994
        %v3081 = vmul.f32 %v2744, %v2998
        %v3083 = vlaneseq
        %v3084 = vshrl.u32 %v3083, 7
        %v3085 = vsub.s32 0, %v3084
        %v3086 = vrot.slane %v3073, %v3085
        %v3087 = vlaneseq
        %v3088 = vshrl.u32 %v3087, 7
        %v3089 = vsub.s32 1, %v3088
        %v3090 = vrot.slane %v3073, %v3089
        %v3091 = vlaneseq
        %v3092 = vshrl.u32 %v3091, 7
        %v3093 = vsub.s32 2, %v3092
        %v3094 = vrot.slane %v3073, %v3093
        %v3095 = vlaneseq
        %v3096 = vshrl.u32 %v3095, 7
        %v3097 = vsub.s32 3, %v3096
        %v3098 = vrot.slane %v3073, %v3097
        %v3099 = vlaneseq
        %v3100 = vshrl.u32 %v3099, 7
        %v3101 = vsub.s32 4, %v3100
        %v3102 = vrot.slane %v3073, %v3101
        %v3103 = vlaneseq
        %v3104 = vshrl.u32 %v3103, 7
        %v3105 = vsub.s32 5, %v3104
        %v3106 = vrot.slane %v3073, %v3105
        %v3107 = vlaneseq
        %v3108 = vshrl.u32 %v3107, 7
        %v3109 = vsub.s32 6, %v3108
        %v3110 = vrot.slane %v3073, %v3109
        %v3111 = vlaneseq
        %v3112 = vshrl.u32 %v3111, 7
        %v3113 = vsub.s32 7, %v3112
        %v3114 = vrot.slane %v3073, %v3113
        %v3123 = vadd.f32 %v3074, %v3086
        %v3124 = vadd.f32 %v3075, %v3090
        %v3125 = vadd.f32 %v3076, %v3094
        %v3126 = vadd.f32 %v3077, %v3098
        %v3127 = vadd.f32 %v3078, %v3102
        %v3128 = vadd.f32 %v3079, %v3106
        %v3129 = vadd.f32 %v3080, %v3110
        %v3130 = vadd.f32 %v3081, %v3114
        %v3131 = vmul.f32 %v3123, 0.1
        %v3132 = vmul.f32 %v3124, 0.1
        %v3133 = vmul.f32 %v3125, 0.1
        %v3134 = vmul.f32 %v3126, 0.1
        %v3135 = vmul.f32 %v3127, 0.1
        %v3136 = vmul.f32 %v3128, 0.1
        %v3137 = vmul.f32 %v3129, 0.1
        %v3138 = vmul.f32 %v3130, 0.1
        %v3139 = vmax.f32 %v3123, %v3131
        %v3140 = vmax.f32 %v3124, %v3132
        %v3141 = vmax.f32 %v3125, %v3133
        %v3142 = vmax.f32 %v3126, %v3134
        %v3143 = vmax.f32 %v3127, %v3135
        %v3144 = vmax.f32 %v3128, %v3136
        %v3145 = vmax.f32 %v3129, %v3137
        %v3146 = vmax.f32 %v3130, %v3138
        %3147 = vst [vmem:[%s4] sm:$0xff] %v3139
        %3148 = vst [vmem:[%s4 + $0x8] sm:$0xff] %v3140
        %3149 = vst [vmem:[%s4 + $0x10] sm:$0xff] %v3141
        %3150 = vst [vmem:[%s4 + $0x18] sm:$0xff] %v3142
        %3151 = vst [vmem:[%s4 + $0x20] sm:$0xff] %v3143
        %3152 = vst [vmem:[%s4 + $0x28] sm:$0xff] %v3144
        %3153 = vst [vmem:[%s4 + $0x30] sm:$0xff] %v3145
        %3154 = vst [vmem:[%s4 + $0x38] sm:$0xff] %v3146
      $region44: #{discriminator_forward.5} parent=35 // pred_fallthru
        _
      // Predicated region
      $region45: #{discriminator_forward.5} parent=35 // pred_check
        %p3155 = pneg %p122
      $region46: #{discriminator_forward.5} parent=35 // pred_check_branch
        %3157 = sbr.rel (%p3155) target = $region48
      $region47: #{discriminator_forward.5} parent=35 // pred_region
        _
      $region48: #{discriminator_forward.5} parent=35 // pred_fallthru
        _
      // Predicated region
      $region49: #{discriminator_forward.5} parent=35 // pred_check
        %p3158 = pneg %p122
      $region50: #{discriminator_forward.5} parent=35 // pred_check_branch
        %3160 = sbr.rel (%p3158) target = $region52
      $region51: #{discriminator_forward.5} parent=35 // pred_region
        _
      $region52: #{discriminator_forward.5} parent=35 // pred_fallthru
        _
    $region36: #{discriminator_forward.5} parent=5 // pred_fallthru
      _
    %p3161 = scmp.le.s32.totalorder 2, %s10
    // Predicated region
    $region53: #{discriminator_forward.5} parent=5 // pred_check
      %p3162 = pneg %p3161
    $region54: #{discriminator_forward.5} parent=5 // pred_check_branch
      %3164 = sbr.rel (%p3162) target = $region56
    $region55: #{discriminator_forward.5} parent=5 // pred_region
      %s3165 = ssub.s32 %s10, 2
    $region56: #{discriminator_forward.5} parent=5 // pred_fallthru
      _
  $region6: #{discriminator_forward.5} parent=0 // loop_footer
    %s14 = sadd.s32 1, %s10
  $region7: #{discriminator_forward.5} parent=0 // loop_footer_branch
    %9 = sbr.rel target = $region3
  $region8: #{discriminator_forward.5} parent=0 // loop_exit
    _

</llo_original>
